<compile_context>
chip_gen: v7x
topology: tpu7x:2x2x1
jax: 0.10.0
libtpu: 0.0.40
codegen_flags: <defaults>
</compile_context>

<pallas_src>
import functools
import math

import jax
import jax.numpy as jnp
from jax import lax
from jax.experimental import pallas as pl
from jax.experimental.pallas import tpu as pltpu

LN_EPS = 1e-12


def _layernorm(y, gamma, beta):
    """One-pass LayerNorm (f32 statistics)."""
    n = y.shape[-1]
    s1 = jnp.sum(y, axis=-1, keepdims=True)
    s2 = jnp.sum(y * y, axis=-1, keepdims=True)
    mu = s1 * (1.0 / n)
    var = jnp.maximum(s2 * (1.0 / n) - mu * mu, 0.0)
    return (y - mu) * lax.rsqrt(var + LN_EPS) * gamma + beta


# --------------------------- fused BERT kernel ------------------------------
def bert_stack_kernel(emb_ref, mask_ref, eg_ref, eb_ref,
                      wq_ref, bq_ref, wk_ref, bk_ref, wv_ref, bv_ref,
                      wo_ref, bo_ref, l1g_ref, l1b_ref,
                      w1_ref, b1_ref, w2_ref, b2_ref, l2g_ref, l2b_ref,
                      cw1_ref, cb1_ref, cw2_ref, cb2_ref,
                      cw3_ref, cb3_ref, cw4_ref, cb4_ref,
                      out_ref,
                      x_sc, ctx_sc, cls_sc,
                      *, batch, seq, num_heads, head_dim):
    layer = pl.program_id(0)
    n_layers = pl.num_programs(0)
    hidden = num_heads * head_dim
    bs = batch * seq
    bf16 = jnp.bfloat16

    # ---- embedding LayerNorm (only on the first grid step) ----
    @pl.when(layer == 0)
    def _():
        x_sc[...] = _layernorm(emb_ref[...], eg_ref[...], eb_ref[...])

    x = x_sc[...]                       # (B*S, H) f32 residual stream
    xb = x.astype(bf16)

    scale = 1.0 / math.sqrt(head_dim)

    # ---- multi-head self-attention ----
    attn = jnp.zeros((bs, hidden), jnp.float32)
    for h in range(num_heads):          # static unroll; head split lives in the weights
        qh = jnp.dot(xb, wq_ref[h], preferred_element_type=jnp.float32) + bq_ref[h]
        kh = jnp.dot(xb, wk_ref[h], preferred_element_type=jnp.float32) + bk_ref[h]
        vh = jnp.dot(xb, wv_ref[h], preferred_element_type=jnp.float32) + bv_ref[h]
        qhb = qh.astype(bf16)
        khb = kh.astype(bf16)
        vhb = vh.astype(bf16)
        for b in range(batch):          # scores/softmax need per-batch masking
            r0 = b * seq
            qb = qhb[r0:r0 + seq, :]
            kb = khb[r0:r0 + seq, :]
            vb = vhb[r0:r0 + seq, :]
            s = lax.dot_general(qb, kb, (((1,), (1,)), ((), ())),
                                preferred_element_type=jnp.float32) * scale
            s = s + mask_ref[b]                        # (1, S) additive key mask
            m = jnp.max(s, axis=-1, keepdims=True)
            e = jnp.exp(s - m)
            p = e * pl.reciprocal(jnp.sum(e, axis=-1, keepdims=True), approx=True)
            ctx_sc[pl.ds(r0, seq), :] = jnp.dot(
                p.astype(bf16), vb, preferred_element_type=jnp.float32)
        # per-head output projection, accumulated over heads (replaces lane concat)
        attn = attn + jnp.dot(ctx_sc[...].astype(bf16), wo_ref[h],
                              preferred_element_type=jnp.float32)
    attn = attn + bo_ref[...]

    h1 = _layernorm(x + attn, l1g_ref[...], l1b_ref[...])

    # ---- feed-forward ----
    f = jnp.dot(h1.astype(bf16), w1_ref[...],
                preferred_element_type=jnp.float32) + b1_ref[...]
    # TODO(synk): reference BERT uses exact erf-GELU; tanh approximation kept (EUP-friendly).
    f = jax.nn.gelu(f, approximate=True)
    f = jnp.dot(f.astype(bf16), w2_ref[...],
                preferred_element_type=jnp.float32) + b2_ref[...]
    x_new = _layernorm(h1 + f, l2g_ref[...], l2b_ref[...])
    x_sc[...] = x_new                   # carry residual stream to next layer

    # ---- classifier head on the CLS token (only on the last grid step) ----
    @pl.when(layer == n_layers - 1)
    def _():
        for b in range(batch):
            cls_sc[pl.ds(b, 1), :] = x_sc[pl.ds(b * seq, 1), :]

        def clin(v, w_ref, b_ref):
            return jnp.dot(v.astype(bf16), w_ref[...],
                           preferred_element_type=jnp.float32) + b_ref[...]

        t = jnp.maximum(clin(cls_sc[...], cw1_ref, cb1_ref), 0.0)   # Linear(H,300)+ReLU
        t = jnp.maximum(clin(t, cw2_ref, cb2_ref), 0.0)             # Linear(300,100)+ReLU
        t = jnp.maximum(clin(t, cw3_ref, cb3_ref), 0.0)             # Linear(100,50)+ReLU
        out_ref[...] = clin(t, cw4_ref, cb4_ref)                    # Linear(50,labels), padded


# --------------------------- parameter handling -----------------------------
def init_params(key, *, vocab, max_pos, hidden, n_layers, n_heads,
                intermediate, n_labels):
    del n_heads  # heads only affect how hidden is split, not parameter shapes
    keys = iter(jax.random.split(key, 3 + 6 * n_layers + 4))

    def dense(din, dout):
        w = jax.random.normal(next(keys), (din, dout), jnp.float32) * 0.02
        b = jnp.zeros((1, dout), jnp.float32)
        return w, b

    params = {
        'word_emb': jax.random.normal(next(keys), (vocab, hidden), jnp.float32) * 0.02,
        'pos_emb': jax.random.normal(next(keys), (max_pos, hidden), jnp.float32) * 0.02,
        'type_emb': jax.random.normal(next(keys), (2, hidden), jnp.float32) * 0.02,
        'emb_ln_g': jnp.ones((1, hidden), jnp.float32),
        'emb_ln_b': jnp.zeros((1, hidden), jnp.float32),
        'layers': [],
    }
    for _ in range(n_layers):
        wq, bq = dense(hidden, hidden)
        wk, bk = dense(hidden, hidden)
        wv, bv = dense(hidden, hidden)
        wo, bo = dense(hidden, hidden)
        w1, b1 = dense(hidden, intermediate)
        w2, b2 = dense(intermediate, hidden)
        params['layers'].append(dict(
            wq=wq, bq=bq, wk=wk, bk=bk, wv=wv, bv=bv, wo=wo, bo=bo,
            ln1_g=jnp.ones((1, hidden), jnp.float32),
            ln1_b=jnp.zeros((1, hidden), jnp.float32),
            w1=w1, b1=b1, w2=w2, b2=b2,
            ln2_g=jnp.ones((1, hidden), jnp.float32),
            ln2_b=jnp.zeros((1, hidden), jnp.float32)))
    cw1, cb1 = dense(hidden, 300)
    cw2, cb2 = dense(300, 100)
    cw3, cb3 = dense(100, 50)
    cw4, cb4 = dense(50, n_labels)
    params['classifier'] = dict(w1=cw1, b1=cb1, w2=cw2, b2=cb2,
                                w3=cw3, b3=cb3, w4=cw4, b4=cb4)
    return params


def pack_params(params, *, n_heads):
    """Repack f32 'torch-layout' params into the kernel layout:
    per-head split on a leading axis, per-layer stacking, bf16 weights, padded classifier."""
    hidden = params['word_emb'].shape[1]
    hd = hidden // n_heads
    bf16 = jnp.bfloat16

    def split_in_w(w):      # (H, H) -> (nh, H, hd)
        return jnp.transpose(w.reshape(hidden, n_heads, hd), (1, 0, 2)).astype(bf16)

    def split_in_b(b):      # (1, H) -> (nh, 1, hd)
        return b.reshape(n_heads, hd)[:, None, :].astype(jnp.float32)

    def split_out_w(w):     # (H, H) -> (nh, hd, H)
        return w.reshape(n_heads, hd, hidden).astype(bf16)

    layers = params['layers']
    stk = lambda f, name: jnp.stack([f(lp[name]) for lp in layers], axis=0)
    ident = lambda a: a

    kp = dict(
        word_emb=params['word_emb'], pos_emb=params['pos_emb'],
        type_emb=params['type_emb'],
        emb_ln_g=params['emb_ln_g'], emb_ln_b=params['emb_ln_b'],
        wq=stk(split_in_w, 'wq'), bq=stk(split_in_b, 'bq'),
        wk=stk(split_in_w, 'wk'), bk=stk(split_in_b, 'bk'),
        wv=stk(split_in_w, 'wv'), bv=stk(split_in_b, 'bv'),
        wo=stk(split_out_w, 'wo'), bo=stk(ident, 'bo'),
        ln1_g=stk(ident, 'ln1_g'), ln1_b=stk(ident, 'ln1_b'),
        w1=stk(lambda a: a.astype(bf16), 'w1'), b1=stk(ident, 'b1'),
        w2=stk(lambda a: a.astype(bf16), 'w2'), b2=stk(ident, 'b2'),
        ln2_g=stk(ident, 'ln2_g'), ln2_b=stk(ident, 'ln2_b'),
    )

    cp = params['classifier']

    def rup(n, m=128):
        return ((n + m - 1) // m) * m

    def pad_w(w, rows, cols):
        z = jnp.zeros((rows, cols), jnp.float32)
        return z.at[:w.shape[0], :w.shape[1]].set(w).astype(bf16)

    def pad_b(b, cols):
        z = jnp.zeros((1, cols), jnp.float32)
        return z.at[:, :b.shape[1]].set(b)

    d1 = cp['w1'].shape[1]; d2 = cp['w2'].shape[1]
    d3 = cp['w3'].shape[1]; d4 = cp['w4'].shape[1]
    p1, p2, p3, p4 = rup(d1), rup(d2), rup(d3), rup(d4)
    kp.update(
        cw1=pad_w(cp['w1'], hidden, p1), cb1=pad_b(cp['b1'], p1),
        cw2=pad_w(cp['w2'], p1, p2),     cb2=pad_b(cp['b2'], p2),
        cw3=pad_w(cp['w3'], p2, p3),     cb3=pad_b(cp['b3'], p3),
        cw4=pad_w(cp['w4'], p3, p4),     cb4=pad_b(cp['b4'], p4),
    )
    return kp


# ------------------------------ forward glue ---------------------------------
def bert_classifier_forward(kp, input_ids, attention_mask, *, n_labels):
    B, S = input_ids.shape
    H = kp['word_emb'].shape[1]
    L, nh, _, hd = kp['wq'].shape

    # Embedding lookups are glue (gathers); everything else is one fused Pallas call.
    # TODO(synk): token_type_ids assumed all-zero (single segment), as in the original.
    emb = (kp['word_emb'][input_ids]
           + kp['pos_emb'][:S][None, :, :]
           + kp['type_emb'][0][None, None, :])
    emb2d = emb.reshape(B * S, H).astype(jnp.float32)
    mask_bias = ((1.0 - attention_mask.astype(jnp.float32)) * -1e9).reshape(B, 1, S)

    const_in = [emb2d, mask_bias, kp['emb_ln_g'], kp['emb_ln_b']]
    layer_in = [kp['wq'], kp['bq'], kp['wk'], kp['bk'], kp['wv'], kp['bv'],
                kp['wo'], kp['bo'], kp['ln1_g'], kp['ln1_b'],
                kp['w1'], kp['b1'], kp['w2'], kp['b2'], kp['ln2_g'], kp['ln2_b']]
    cls_in = [kp['cw1'], kp['cb1'], kp['cw2'], kp['cb2'],
              kp['cw3'], kp['cb3'], kp['cw4'], kp['cb4']]

    def const_spec(a):
        nd = a.ndim
        return pl.BlockSpec(tuple(a.shape), lambda l, _nd=nd: (0,) * _nd)

    def layer_spec(a):   # leading dim = layer axis, indexed by the grid
        rest = tuple(a.shape[1:])
        nd = len(rest)
        return pl.BlockSpec((None,) + rest, lambda l, _nd=nd: (l,) + (0,) * _nd)

    in_specs = ([const_spec(a) for a in const_in]
                + [layer_spec(a) for a in layer_in]
                + [const_spec(a) for a in cls_in])

    out_pad = kp['cb4'].shape[1]          # lane-dense padded logits width (>=128)
    kernel = functools.partial(bert_stack_kernel, batch=B, seq=S,
                               num_heads=nh, head_dim=hd)

    logits_pad = pl.pallas_call(
        kernel,
        out_shape=jax.ShapeDtypeStruct((B, out_pad), jnp.float32),
        grid=(L,),
        in_specs=in_specs,
        out_specs=pl.BlockSpec((B, out_pad), lambda l: (0, 0)),
        scratch_shapes=[pltpu.VMEM((B * S, H), jnp.float32),   # residual stream carry
                        pltpu.VMEM((B * S, hd), jnp.float32),  # per-head context slab
                        pltpu.VMEM((B, H), jnp.float32)],      # CLS rows
        compiler_params=pltpu.CompilerParams(
            dimension_semantics=("arbitrary",),
            vmem_limit_bytes=32 * 1024 * 1024),
    )(*const_in, *layer_in, *cls_in)
    return logits_pad[:, :n_labels]


if __name__ == "__main__":
    B, S = 2, 8
    HIDDEN, N_HEADS, N_LAYERS, INTER = 32, 4, 2, 64
    VOCAB, MAX_POS, N_LABELS = 100, 16, 3

    root = jax.random.PRNGKey(0)
    k_params, k_ids = jax.random.split(root)
    raw = init_params(k_params, vocab=VOCAB, max_pos=MAX_POS, hidden=HIDDEN,
                      n_layers=N_LAYERS, n_heads=N_HEADS,
                      intermediate=INTER, n_labels=N_LABELS)
    kp = pack_params(raw, n_heads=N_HEADS)

    input_ids = jax.random.randint(k_ids, (B, S), 0, VOCAB, dtype=jnp.int32)
    attention_mask = jnp.array([[1] * S, [1] * (S - 2) + [0] * 2], dtype=jnp.int32)

    fwd = jax.jit(functools.partial(bert_classifier_forward, n_labels=N_LABELS))
    logits = fwd(kp, input_ids, attention_mask)
    jax.block_until_ready(logits)
    assert logits.shape == (B, N_LABELS)
    assert bool(jnp.all(jnp.isfinite(logits)))
    print("KERNEL_OK")
</pallas_src>

<mosaic_0001>
module attributes {stable_mosaic.version = 11 : i64} {
  func.func @bert_stack_kernel(%arg0: i32, %arg1: memref<16x32xf32, #tpu.memory_space<vmem>>, %arg2: memref<2x1x8xf32, #tpu.memory_space<vmem>>, %arg3: memref<1x32xf32, #tpu.memory_space<vmem>>, %arg4: memref<1x32xf32, #tpu.memory_space<vmem>>, %arg5: memref<1x4x32x8xbf16, #tpu.memory_space<vmem>>, %arg6: memref<1x4x1x8xf32, #tpu.memory_space<vmem>>, %arg7: memref<1x4x32x8xbf16, #tpu.memory_space<vmem>>, %arg8: memref<1x4x1x8xf32, #tpu.memory_space<vmem>>, %arg9: memref<1x4x32x8xbf16, #tpu.memory_space<vmem>>, %arg10: memref<1x4x1x8xf32, #tpu.memory_space<vmem>>, %arg11: memref<1x4x8x32xbf16, #tpu.memory_space<vmem>>, %arg12: memref<1x1x32xf32, #tpu.memory_space<vmem>>, %arg13: memref<1x1x32xf32, #tpu.memory_space<vmem>>, %arg14: memref<1x1x32xf32, #tpu.memory_space<vmem>>, %arg15: memref<1x32x64xbf16, #tpu.memory_space<vmem>>, %arg16: memref<1x1x64xf32, #tpu.memory_space<vmem>>, %arg17: memref<1x64x32xbf16, #tpu.memory_space<vmem>>, %arg18: memref<1x1x32xf32, #tpu.memory_space<vmem>>, %arg19: memref<1x1x32xf32, #tpu.memory_space<vmem>>, %arg20: memref<1x1x32xf32, #tpu.memory_space<vmem>>, %arg21: memref<32x384xbf16, #tpu.memory_space<vmem>>, %arg22: memref<1x384xf32, #tpu.memory_space<vmem>>, %arg23: memref<384x128xbf16, #tpu.memory_space<vmem>>, %arg24: memref<1x128xf32, #tpu.memory_space<vmem>>, %arg25: memref<128x128xbf16, #tpu.memory_space<vmem>>, %arg26: memref<1x128xf32, #tpu.memory_space<vmem>>, %arg27: memref<128x128xbf16, #tpu.memory_space<vmem>>, %arg28: memref<1x128xf32, #tpu.memory_space<vmem>>, %arg29: memref<2x128xf32, #tpu.memory_space<vmem>>, %arg30: memref<16x32xf32, #tpu.memory_space<vmem>>, %arg31: memref<16x8xf32, #tpu.memory_space<vmem>>, %arg32: memref<2x32xf32, #tpu.memory_space<vmem>>) attributes {dimension_semantics = [#tpu.dimension_semantics<arbitrary>], iteration_bounds = array<i64: 2>, scalar_prefetch = 0 : i64, scratch_operands = 3 : i64, tpu.core_type = #tpu.core_type<tc>, window_params = [{pipeline_mode = #tpu.pipeline_mode<synchronous>, transform_indices = @transform_0, window_bounds = array<i64: 16, 32>}, {pipeline_mode = #tpu.pipeline_mode<synchronous>, transform_indices = @transform_1, window_bounds = array<i64: 2, 1, 8>}, {pipeline_mode = #tpu.pipeline_mode<synchronous>, transform_indices = @transform_2, window_bounds = array<i64: 1, 32>}, {pipeline_mode = #tpu.pipeline_mode<synchronous>, transform_indices = @transform_3, window_bounds = array<i64: 1, 32>}, {transform_indices = @transform_4, window_bounds = array<i64: 1, 4, 32, 8>}, {transform_indices = @transform_5, window_bounds = array<i64: 1, 4, 1, 8>}, {transform_indices = @transform_6, window_bounds = array<i64: 1, 4, 32, 8>}, {transform_indices = @transform_7, window_bounds = array<i64: 1, 4, 1, 8>}, {transform_indices = @transform_8, window_bounds = array<i64: 1, 4, 32, 8>}, {transform_indices = @transform_9, window_bounds = array<i64: 1, 4, 1, 8>}, {transform_indices = @transform_10, window_bounds = array<i64: 1, 4, 8, 32>}, {transform_indices = @transform_11, window_bounds = array<i64: 1, 1, 32>}, {transform_indices = @transform_12, window_bounds = array<i64: 1, 1, 32>}, {transform_indices = @transform_13, window_bounds = array<i64: 1, 1, 32>}, {transform_indices = @transform_14, window_bounds = array<i64: 1, 32, 64>}, {transform_indices = @transform_15, window_bounds = array<i64: 1, 1, 64>}, {transform_indices = @transform_16, window_bounds = array<i64: 1, 64, 32>}, {transform_indices = @transform_17, window_bounds = array<i64: 1, 1, 32>}, {transform_indices = @transform_18, window_bounds = array<i64: 1, 1, 32>}, {transform_indices = @transform_19, window_bounds = array<i64: 1, 1, 32>}, {pipeline_mode = #tpu.pipeline_mode<synchronous>, transform_indices = @transform_20, window_bounds = array<i64: 32, 384>}, {pipeline_mode = #tpu.pipeline_mode<synchronous>, transform_indices = @transform_21, window_bounds = array<i64: 1, 384>}, {pipeline_mode = #tpu.pipeline_mode<synchronous>, transform_indices = @transform_22, window_bounds = array<i64: 384, 128>}, {pipeline_mode = #tpu.pipeline_mode<synchronous>, transform_indices = @transform_23, window_bounds = array<i64: 1, 128>}, {pipeline_mode = #tpu.pipeline_mode<synchronous>, transform_indices = @transform_24, window_bounds = array<i64: 128, 128>}, {pipeline_mode = #tpu.pipeline_mode<synchronous>, transform_indices = @transform_25, window_bounds = array<i64: 1, 128>}, {pipeline_mode = #tpu.pipeline_mode<synchronous>, transform_indices = @transform_26, window_bounds = array<i64: 128, 128>}, {pipeline_mode = #tpu.pipeline_mode<synchronous>, transform_indices = @transform_27, window_bounds = array<i64: 1, 128>}, {pipeline_mode = #tpu.pipeline_mode<synchronous>, transform_indices = @transform_28, window_bounds = array<i64: 2, 128>}]} {
    %c0_i32 = arith.constant 0 : i32
    %0 = arith.cmpi eq, %arg0, %c0_i32 : i32
    %1 = arith.extui %0 : i1 to i32
    %c0_i32_0 = arith.constant 0 : i32
    %2 = arith.cmpi ne, %1, %c0_i32_0 : i32
    scf.if %2 {
      %c0_262 = arith.constant 0 : index
      %c0_263 = arith.constant 0 : index
      %405 = vector.load %arg1[%c0_262, %c0_263] : memref<16x32xf32, #tpu.memory_space<vmem>>, vector<16x32xf32>
      %c0_264 = arith.constant 0 : index
      %c0_265 = arith.constant 0 : index
      %406 = vector.load %arg3[%c0_264, %c0_265] : memref<1x32xf32, #tpu.memory_space<vmem>>, vector<1x32xf32>
      %c0_266 = arith.constant 0 : index
      %c0_267 = arith.constant 0 : index
      %407 = vector.load %arg4[%c0_266, %c0_267] : memref<1x32xf32, #tpu.memory_space<vmem>>, vector<1x32xf32>
      %cst_268 = arith.constant dense<0.000000e+00> : vector<16xf32>
      %408 = vector.multi_reduction <add>, %405, %cst_268 [1] : vector<16x32xf32> to vector<16xf32>
      %409 = vector.shape_cast %408 : vector<16xf32> to vector<16x1xf32>
      %410 = arith.mulf %405, %405 : vector<16x32xf32>
      %cst_269 = arith.constant dense<0.000000e+00> : vector<16xf32>
      %411 = vector.multi_reduction <add>, %410, %cst_269 [1] : vector<16x32xf32> to vector<16xf32>
      %412 = vector.shape_cast %411 : vector<16xf32> to vector<16x1xf32>
      %cst_270 = arith.constant 3.125000e-02 : f32
      %413 = vector.broadcast %cst_270 : f32 to vector<16x1xf32>
      %414 = arith.mulf %409, %413 : vector<16x1xf32>
      %cst_271 = arith.constant 3.125000e-02 : f32
      %415 = vector.broadcast %cst_271 : f32 to vector<16x1xf32>
      %416 = arith.mulf %412, %415 : vector<16x1xf32>
      %417 = arith.mulf %414, %414 : vector<16x1xf32>
      %418 = arith.subf %416, %417 : vector<16x1xf32>
      %cst_272 = arith.constant 0.000000e+00 : f32
      %419 = vector.broadcast %cst_272 : f32 to vector<16x1xf32>
      %420 = arith.maximumf %418, %419 : vector<16x1xf32>
      %421 = vector.broadcast %414 : vector<16x1xf32> to vector<16x32xf32>
      %422 = arith.subf %405, %421 : vector<16x32xf32>
      %cst_273 = arith.constant 9.99999996E-13 : f32
      %423 = vector.broadcast %cst_273 : f32 to vector<16x1xf32>
      %424 = arith.addf %420, %423 : vector<16x1xf32>
      %425 = math.rsqrt %424 : vector<16x1xf32>
      %426 = vector.broadcast %425 : vector<16x1xf32> to vector<16x32xf32>
      %427 = arith.mulf %422, %426 : vector<16x32xf32>
      %428 = vector.broadcast %406 : vector<1x32xf32> to vector<16x32xf32>
      %429 = arith.mulf %427, %428 : vector<16x32xf32>
      %430 = vector.broadcast %407 : vector<1x32xf32> to vector<16x32xf32>
      %431 = arith.addf %429, %430 : vector<16x32xf32>
      %c0_274 = arith.constant 0 : index
      %c0_275 = arith.constant 0 : index
      %432 = vector.load %arg30[%c0_274, %c0_275] : memref<16x32xf32, #tpu.memory_space<vmem>>, vector<16x32xf32>
      tpu.vector_store %arg30[%c0_274, %c0_275], %431 {strides = array<i32>} : memref<16x32xf32, #tpu.memory_space<vmem>>, vector<16x32xf32>,
    } else {
    }
    %c0 = arith.constant 0 : index
    %c0_1 = arith.constant 0 : index
    %3 = vector.load %arg30[%c0, %c0_1] : memref<16x32xf32, #tpu.memory_space<vmem>>, vector<16x32xf32>
    %4 = arith.truncf %3 : vector<16x32xf32> to vector<16x32xbf16>
    %cst = arith.constant 0.000000e+00 : f32
    %5 = vector.broadcast %cst : f32 to vector<16x32xf32>
    %c0_2 = arith.constant 0 : index
    %c0_3 = arith.constant 0 : index
    %c0_4 = arith.constant 0 : index
    %c0_5 = arith.constant 0 : index
    %6 = vector.load %arg5[%c0_2, %c0_3, %c0_4, %c0_5] : memref<1x4x32x8xbf16, #tpu.memory_space<vmem>>, vector<1x1x32x8xbf16>
    %7 = vector.shape_cast %6 : vector<1x1x32x8xbf16> to vector<32x8xbf16>
    %cst_6 = arith.constant dense<0.000000e+00> : vector<16x8xf32>
    %8 = tpu.matmul %4, %7, %cst_6 {dimension_numbers = #tpu.dot_dimension_numbers<[1], [0], [0], [1], [0, 0, 1, 1], [], []>} : vector<16x32xbf16>, vector<32x8xbf16>, vector<16x8xf32> -> vector<16x8xf32>
    %c0_7 = arith.constant 0 : index
    %c0_8 = arith.constant 0 : index
    %c0_9 = arith.constant 0 : index
    %c0_10 = arith.constant 0 : index
    %9 = vector.load %arg6[%c0_7, %c0_8, %c0_9, %c0_10] : memref<1x4x1x8xf32, #tpu.memory_space<vmem>>, vector<1x1x1x8xf32>
    %10 = vector.shape_cast %9 : vector<1x1x1x8xf32> to vector<1x8xf32>
    %11 = vector.broadcast %10 : vector<1x8xf32> to vector<16x8xf32>
    %12 = arith.addf %8, %11 : vector<16x8xf32>
    %c0_11 = arith.constant 0 : index
    %c0_12 = arith.constant 0 : index
    %c0_13 = arith.constant 0 : index
    %c0_14 = arith.constant 0 : index
    %13 = vector.load %arg7[%c0_11, %c0_12, %c0_13, %c0_14] : memref<1x4x32x8xbf16, #tpu.memory_space<vmem>>, vector<1x1x32x8xbf16>
    %14 = vector.shape_cast %13 : vector<1x1x32x8xbf16> to vector<32x8xbf16>
    %cst_15 = arith.constant dense<0.000000e+00> : vector<16x8xf32>
    %15 = tpu.matmul %4, %14, %cst_15 {dimension_numbers = #tpu.dot_dimension_numbers<[1], [0], [0], [1], [0, 0, 1, 1], [], []>} : vector<16x32xbf16>, vector<32x8xbf16>, vector<16x8xf32> -> vector<16x8xf32>
    %c0_16 = arith.constant 0 : index
    %c0_17 = arith.constant 0 : index
    %c0_18 = arith.constant 0 : index
    %c0_19 = arith.constant 0 : index
    %16 = vector.load %arg8[%c0_16, %c0_17, %c0_18, %c0_19] : memref<1x4x1x8xf32, #tpu.memory_space<vmem>>, vector<1x1x1x8xf32>
    %17 = vector.shape_cast %16 : vector<1x1x1x8xf32> to vector<1x8xf32>
    %18 = vector.broadcast %17 : vector<1x8xf32> to vector<16x8xf32>
    %19 = arith.addf %15, %18 : vector<16x8xf32>
    %c0_20 = arith.constant 0 : index
    %c0_21 = arith.constant 0 : index
    %c0_22 = arith.constant 0 : index
    %c0_23 = arith.constant 0 : index
    %20 = vector.load %arg9[%c0_20, %c0_21, %c0_22, %c0_23] : memref<1x4x32x8xbf16, #tpu.memory_space<vmem>>, vector<1x1x32x8xbf16>
    %21 = vector.shape_cast %20 : vector<1x1x32x8xbf16> to vector<32x8xbf16>
    %cst_24 = arith.constant dense<0.000000e+00> : vector<16x8xf32>
    %22 = tpu.matmul %4, %21, %cst_24 {dimension_numbers = #tpu.dot_dimension_numbers<[1], [0], [0], [1], [0, 0, 1, 1], [], []>} : vector<16x32xbf16>, vector<32x8xbf16>, vector<16x8xf32> -> vector<16x8xf32>
    %c0_25 = arith.constant 0 : index
    %c0_26 = arith.constant 0 : index
    %c0_27 = arith.constant 0 : index
    %c0_28 = arith.constant 0 : index
    %23 = vector.load %arg10[%c0_25, %c0_26, %c0_27, %c0_28] : memref<1x4x1x8xf32, #tpu.memory_space<vmem>>, vector<1x1x1x8xf32>
    %24 = vector.shape_cast %23 : vector<1x1x1x8xf32> to vector<1x8xf32>
    %25 = vector.broadcast %24 : vector<1x8xf32> to vector<16x8xf32>
    %26 = arith.addf %22, %25 : vector<16x8xf32>
    %27 = arith.truncf %12 : vector<16x8xf32> to vector<16x8xbf16>
    %28 = arith.truncf %19 : vector<16x8xf32> to vector<16x8xbf16>
    %29 = arith.truncf %26 : vector<16x8xf32> to vector<16x8xbf16>
    %30 = vector.extract_strided_slice %27 {offsets = [0, 0], sizes = [8, 8], strides = [1, 1]} : vector<16x8xbf16> to vector<8x8xbf16>
    %31 = vector.extract_strided_slice %28 {offsets = [0, 0], sizes = [8, 8], strides = [1, 1]} : vector<16x8xbf16> to vector<8x8xbf16>
    %32 = vector.extract_strided_slice %29 {offsets = [0, 0], sizes = [8, 8], strides = [1, 1]} : vector<16x8xbf16> to vector<8x8xbf16>
    %cst_29 = arith.constant dense<0.000000e+00> : vector<8x8xf32>
    %33 = tpu.matmul %30, %31, %cst_29 {dimension_numbers = #tpu.dot_dimension_numbers<[1], [1], [0], [0], [0, 0, 1, 0], [], []>} : vector<8x8xbf16>, vector<8x8xbf16>, vector<8x8xf32> -> vector<8x8xf32>
    %cst_30 = arith.constant 0.353553385 : f32
    %34 = vector.broadcast %cst_30 : f32 to vector<8x8xf32>
    %35 = arith.mulf %33, %34 : vector<8x8xf32>
    %c0_31 = arith.constant 0 : index
    %c0_32 = arith.constant 0 : index
    %c0_33 = arith.constant 0 : index
    %36 = vector.load %arg2[%c0_31, %c0_32, %c0_33] : memref<2x1x8xf32, #tpu.memory_space<vmem>>, vector<1x1x8xf32>
    %37 = vector.shape_cast %36 : vector<1x1x8xf32> to vector<1x8xf32>
    %38 = vector.broadcast %37 : vector<1x8xf32> to vector<8x8xf32>
    %39 = arith.addf %35, %38 : vector<8x8xf32>
    %cst_34 = arith.constant dense<0xFF800000> : vector<8xf32>
    %40 = vector.multi_reduction <maximumf>, %39, %cst_34 [1] : vector<8x8xf32> to vector<8xf32>
    %41 = vector.shape_cast %40 : vector<8xf32> to vector<8x1xf32>
    %42 = vector.broadcast %41 : vector<8x1xf32> to vector<8x8xf32>
    %43 = arith.subf %39, %42 : vector<8x8xf32>
    %44 = math.exp %43 : vector<8x8xf32>
    %cst_35 = arith.constant dense<0.000000e+00> : vector<8xf32>
    %45 = vector.multi_reduction <add>, %44, %cst_35 [1] : vector<8x8xf32> to vector<8xf32>
    %46 = vector.shape_cast %45 : vector<8xf32> to vector<8x1xf32>
    %47 = tpu.reciprocal %46 {approx = true} : vector<8x1xf32> -> vector<8x1xf32>
    %48 = vector.broadcast %47 : vector<8x1xf32> to vector<8x8xf32>
    %49 = arith.mulf %44, %48 : vector<8x8xf32>
    %50 = arith.truncf %49 : vector<8x8xf32> to vector<8x8xbf16>
    %cst_36 = arith.constant dense<0.000000e+00> : vector<8x8xf32>
    %51 = tpu.matmul %50, %32, %cst_36 {dimension_numbers = #tpu.dot_dimension_numbers<[1], [0], [0], [1], [0, 0, 1, 1], [], []>} : vector<8x8xbf16>, vector<8x8xbf16>, vector<8x8xf32> -> vector<8x8xf32>
    %c0_37 = arith.constant 0 : index
    %c0_38 = arith.constant 0 : index
    %52 = vector.load %arg31[%c0_37, %c0_38] : memref<16x8xf32, #tpu.memory_space<vmem>>, vector<8x8xf32>
    tpu.vector_store %arg31[%c0_37, %c0_38], %51 {strides = array<i32>} : memref<16x8xf32, #tpu.memory_space<vmem>>, vector<8x8xf32>,
    %53 = vector.extract_strided_slice %27 {offsets = [8, 0], sizes = [8, 8], strides = [1, 1]} : vector<16x8xbf16> to vector<8x8xbf16>
    %54 = vector.extract_strided_slice %28 {offsets = [8, 0], sizes = [8, 8], strides = [1, 1]} : vector<16x8xbf16> to vector<8x8xbf16>
    %55 = vector.extract_strided_slice %29 {offsets = [8, 0], sizes = [8, 8], strides = [1, 1]} : vector<16x8xbf16> to vector<8x8xbf16>
    %cst_39 = arith.constant dense<0.000000e+00> : vector<8x8xf32>
    %56 = tpu.matmul %53, %54, %cst_39 {dimension_numbers = #tpu.dot_dimension_numbers<[1], [1], [0], [0], [0, 0, 1, 0], [], []>} : vector<8x8xbf16>, vector<8x8xbf16>, vector<8x8xf32> -> vector<8x8xf32>
    %cst_40 = arith.constant 0.353553385 : f32
    %57 = vector.broadcast %cst_40 : f32 to vector<8x8xf32>
    %58 = arith.mulf %56, %57 : vector<8x8xf32>
    %c1 = arith.constant 1 : index
    %c0_41 = arith.constant 0 : index
    %c0_42 = arith.constant 0 : index
    %59 = vector.load %arg2[%c1, %c0_41, %c0_42] : memref<2x1x8xf32, #tpu.memory_space<vmem>>, vector<1x1x8xf32>
    %60 = vector.shape_cast %59 : vector<1x1x8xf32> to vector<1x8xf32>
    %61 = vector.broadcast %60 : vector<1x8xf32> to vector<8x8xf32>
    %62 = arith.addf %58, %61 : vector<8x8xf32>
    %cst_43 = arith.constant dense<0xFF800000> : vector<8xf32>
    %63 = vector.multi_reduction <maximumf>, %62, %cst_43 [1] : vector<8x8xf32> to vector<8xf32>
    %64 = vector.shape_cast %63 : vector<8xf32> to vector<8x1xf32>
    %65 = vector.broadcast %64 : vector<8x1xf32> to vector<8x8xf32>
    %66 = arith.subf %62, %65 : vector<8x8xf32>
    %67 = math.exp %66 : vector<8x8xf32>
    %cst_44 = arith.constant dense<0.000000e+00> : vector<8xf32>
    %68 = vector.multi_reduction <add>, %67, %cst_44 [1] : vector<8x8xf32> to vector<8xf32>
    %69 = vector.shape_cast %68 : vector<8xf32> to vector<8x1xf32>
    %70 = tpu.reciprocal %69 {approx = true} : vector<8x1xf32> -> vector<8x1xf32>
    %71 = vector.broadcast %70 : vector<8x1xf32> to vector<8x8xf32>
    %72 = arith.mulf %67, %71 : vector<8x8xf32>
    %73 = arith.truncf %72 : vector<8x8xf32> to vector<8x8xbf16>
    %cst_45 = arith.constant dense<0.000000e+00> : vector<8x8xf32>
    %74 = tpu.matmul %73, %55, %cst_45 {dimension_numbers = #tpu.dot_dimension_numbers<[1], [0], [0], [1], [0, 0, 1, 1], [], []>} : vector<8x8xbf16>, vector<8x8xbf16>, vector<8x8xf32> -> vector<8x8xf32>
    %c8 = arith.constant 8 : index
    %c0_46 = arith.constant 0 : index
    %75 = vector.load %arg31[%c8, %c0_46] : memref<16x8xf32, #tpu.memory_space<vmem>>, vector<8x8xf32>
    tpu.vector_store %arg31[%c8, %c0_46], %74 {strides = array<i32>} : memref<16x8xf32, #tpu.memory_space<vmem>>, vector<8x8xf32>,
    %c0_47 = arith.constant 0 : index
    %c0_48 = arith.constant 0 : index
    %76 = vector.load %arg31[%c0_47, %c0_48] : memref<16x8xf32, #tpu.memory_space<vmem>>, vector<16x8xf32>
    %77 = arith.truncf %76 : vector<16x8xf32> to vector<16x8xbf16>
    %c0_49 = arith.constant 0 : index
    %c0_50 = arith.constant 0 : index
    %c0_51 = arith.constant 0 : index
    %c0_52 = arith.constant 0 : index
    %78 = vector.load %arg11[%c0_49, %c0_50, %c0_51, %c0_52] : memref<1x4x8x32xbf16, #tpu.memory_space<vmem>>, vector<1x1x8x32xbf16>
    %79 = vector.shape_cast %78 : vector<1x1x8x32xbf16> to vector<8x32xbf16>
    %cst_53 = arith.constant dense<0.000000e+00> : vector<16x32xf32>
    %80 = tpu.matmul %77, %79, %cst_53 {dimension_numbers = #tpu.dot_dimension_numbers<[1], [0], [0], [1], [0, 0, 1, 1], [], []>} : vector<16x8xbf16>, vector<8x32xbf16>, vector<16x32xf32> -> vector<16x32xf32>
    %81 = arith.addf %5, %80 : vector<16x32xf32>
    %c0_54 = arith.constant 0 : index
    %c1_55 = arith.constant 1 : index
    %c0_56 = arith.constant 0 : index
    %c0_57 = arith.constant 0 : index
    %82 = vector.load %arg5[%c0_54, %c1_55, %c0_56, %c0_57] : memref<1x4x32x8xbf16, #tpu.memory_space<vmem>>, vector<1x1x32x8xbf16>
    %83 = vector.shape_cast %82 : vector<1x1x32x8xbf16> to vector<32x8xbf16>
    %cst_58 = arith.constant dense<0.000000e+00> : vector<16x8xf32>
    %84 = tpu.matmul %4, %83, %cst_58 {dimension_numbers = #tpu.dot_dimension_numbers<[1], [0], [0], [1], [0, 0, 1, 1], [], []>} : vector<16x32xbf16>, vector<32x8xbf16>, vector<16x8xf32> -> vector<16x8xf32>
    %c0_59 = arith.constant 0 : index
    %c1_60 = arith.constant 1 : index
    %c0_61 = arith.constant 0 : index
    %c0_62 = arith.constant 0 : index
    %85 = vector.load %arg6[%c0_59, %c1_60, %c0_61, %c0_62] : memref<1x4x1x8xf32, #tpu.memory_space<vmem>>, vector<1x1x1x8xf32>
    %86 = vector.shape_cast %85 : vector<1x1x1x8xf32> to vector<1x8xf32>
    %87 = vector.broadcast %86 : vector<1x8xf32> to vector<16x8xf32>
    %88 = arith.addf %84, %87 : vector<16x8xf32>
    %c0_63 = arith.constant 0 : index
    %c1_64 = arith.constant 1 : index
    %c0_65 = arith.constant 0 : index
    %c0_66 = arith.constant 0 : index
    %89 = vector.load %arg7[%c0_63, %c1_64, %c0_65, %c0_66] : memref<1x4x32x8xbf16, #tpu.memory_space<vmem>>, vector<1x1x32x8xbf16>
    %90 = vector.shape_cast %89 : vector<1x1x32x8xbf16> to vector<32x8xbf16>
    %cst_67 = arith.constant dense<0.000000e+00> : vector<16x8xf32>
    %91 = tpu.matmul %4, %90, %cst_67 {dimension_numbers = #tpu.dot_dimension_numbers<[1], [0], [0], [1], [0, 0, 1, 1], [], []>} : vector<16x32xbf16>, vector<32x8xbf16>, vector<16x8xf32> -> vector<16x8xf32>
    %c0_68 = arith.constant 0 : index
    %c1_69 = arith.constant 1 : index
    %c0_70 = arith.constant 0 : index
    %c0_71 = arith.constant 0 : index
    %92 = vector.load %arg8[%c0_68, %c1_69, %c0_70, %c0_71] : memref<1x4x1x8xf32, #tpu.memory_space<vmem>>, vector<1x1x1x8xf32>
    %93 = vector.shape_cast %92 : vector<1x1x1x8xf32> to vector<1x8xf32>
    %94 = vector.broadcast %93 : vector<1x8xf32> to vector<16x8xf32>
    %95 = arith.addf %91, %94 : vector<16x8xf32>
    %c0_72 = arith.constant 0 : index
    %c1_73 = arith.constant 1 : index
    %c0_74 = arith.constant 0 : index
    %c0_75 = arith.constant 0 : index
    %96 = vector.load %arg9[%c0_72, %c1_73, %c0_74, %c0_75] : memref<1x4x32x8xbf16, #tpu.memory_space<vmem>>, vector<1x1x32x8xbf16>
    %97 = vector.shape_cast %96 : vector<1x1x32x8xbf16> to vector<32x8xbf16>
    %cst_76 = arith.constant dense<0.000000e+00> : vector<16x8xf32>
    %98 = tpu.matmul %4, %97, %cst_76 {dimension_numbers = #tpu.dot_dimension_numbers<[1], [0], [0], [1], [0, 0, 1, 1], [], []>} : vector<16x32xbf16>, vector<32x8xbf16>, vector<16x8xf32> -> vector<16x8xf32>
    %c0_77 = arith.constant 0 : index
    %c1_78 = arith.constant 1 : index
    %c0_79 = arith.constant 0 : index
    %c0_80 = arith.constant 0 : index
    %99 = vector.load %arg10[%c0_77, %c1_78, %c0_79, %c0_80] : memref<1x4x1x8xf32, #tpu.memory_space<vmem>>, vector<1x1x1x8xf32>
    %100 = vector.shape_cast %99 : vector<1x1x1x8xf32> to vector<1x8xf32>
    %101 = vector.broadcast %100 : vector<1x8xf32> to vector<16x8xf32>
    %102 = arith.addf %98, %101 : vector<16x8xf32>
    %103 = arith.truncf %88 : vector<16x8xf32> to vector<16x8xbf16>
    %104 = arith.truncf %95 : vector<16x8xf32> to vector<16x8xbf16>
    %105 = arith.truncf %102 : vector<16x8xf32> to vector<16x8xbf16>
    %106 = vector.extract_strided_slice %103 {offsets = [0, 0], sizes = [8, 8], strides = [1, 1]} : vector<16x8xbf16> to vector<8x8xbf16>
    %107 = vector.extract_strided_slice %104 {offsets = [0, 0], sizes = [8, 8], strides = [1, 1]} : vector<16x8xbf16> to vector<8x8xbf16>
    %108 = vector.extract_strided_slice %105 {offsets = [0, 0], sizes = [8, 8], strides = [1, 1]} : vector<16x8xbf16> to vector<8x8xbf16>
    %cst_81 = arith.constant dense<0.000000e+00> : vector<8x8xf32>
    %109 = tpu.matmul %106, %107, %cst_81 {dimension_numbers = #tpu.dot_dimension_numbers<[1], [1], [0], [0], [0, 0, 1, 0], [], []>} : vector<8x8xbf16>, vector<8x8xbf16>, vector<8x8xf32> -> vector<8x8xf32>
    %cst_82 = arith.constant 0.353553385 : f32
    %110 = vector.broadcast %cst_82 : f32 to vector<8x8xf32>
    %111 = arith.mulf %109, %110 : vector<8x8xf32>
    %c0_83 = arith.constant 0 : index
    %c0_84 = arith.constant 0 : index
    %c0_85 = arith.constant 0 : index
    %112 = vector.load %arg2[%c0_83, %c0_84, %c0_85] : memref<2x1x8xf32, #tpu.memory_space<vmem>>, vector<1x1x8xf32>
    %113 = vector.shape_cast %112 : vector<1x1x8xf32> to vector<1x8xf32>
    %114 = vector.broadcast %113 : vector<1x8xf32> to vector<8x8xf32>
    %115 = arith.addf %111, %114 : vector<8x8xf32>
    %cst_86 = arith.constant dense<0xFF800000> : vector<8xf32>
    %116 = vector.multi_reduction <maximumf>, %115, %cst_86 [1] : vector<8x8xf32> to vector<8xf32>
    %117 = vector.shape_cast %116 : vector<8xf32> to vector<8x1xf32>
    %118 = vector.broadcast %117 : vector<8x1xf32> to vector<8x8xf32>
    %119 = arith.subf %115, %118 : vector<8x8xf32>
    %120 = math.exp %119 : vector<8x8xf32>
    %cst_87 = arith.constant dense<0.000000e+00> : vector<8xf32>
    %121 = vector.multi_reduction <add>, %120, %cst_87 [1] : vector<8x8xf32> to vector<8xf32>
    %122 = vector.shape_cast %121 : vector<8xf32> to vector<8x1xf32>
    %123 = tpu.reciprocal %122 {approx = true} : vector<8x1xf32> -> vector<8x1xf32>
    %124 = vector.broadcast %123 : vector<8x1xf32> to vector<8x8xf32>
    %125 = arith.mulf %120, %124 : vector<8x8xf32>
    %126 = arith.truncf %125 : vector<8x8xf32> to vector<8x8xbf16>
    %cst_88 = arith.constant dense<0.000000e+00> : vector<8x8xf32>
    %127 = tpu.matmul %126, %108, %cst_88 {dimension_numbers = #tpu.dot_dimension_numbers<[1], [0], [0], [1], [0, 0, 1, 1], [], []>} : vector<8x8xbf16>, vector<8x8xbf16>, vector<8x8xf32> -> vector<8x8xf32>
    %c0_89 = arith.constant 0 : index
    %c0_90 = arith.constant 0 : index
    %128 = vector.load %arg31[%c0_89, %c0_90] : memref<16x8xf32, #tpu.memory_space<vmem>>, vector<8x8xf32>
    tpu.vector_store %arg31[%c0_89, %c0_90], %127 {strides = array<i32>} : memref<16x8xf32, #tpu.memory_space<vmem>>, vector<8x8xf32>,
    %129 = vector.extract_strided_slice %103 {offsets = [8, 0], sizes = [8, 8], strides = [1, 1]} : vector<16x8xbf16> to vector<8x8xbf16>
    %130 = vector.extract_strided_slice %104 {offsets = [8, 0], sizes = [8, 8], strides = [1, 1]} : vector<16x8xbf16> to vector<8x8xbf16>
    %131 = vector.extract_strided_slice %105 {offsets = [8, 0], sizes = [8, 8], strides = [1, 1]} : vector<16x8xbf16> to vector<8x8xbf16>
    %cst_91 = arith.constant dense<0.000000e+00> : vector<8x8xf32>
    %132 = tpu.matmul %129, %130, %cst_91 {dimension_numbers = #tpu.dot_dimension_numbers<[1], [1], [0], [0], [0, 0, 1, 0], [], []>} : vector<8x8xbf16>, vector<8x8xbf16>, vector<8x8xf32> -> vector<8x8xf32>
    %cst_92 = arith.constant 0.353553385 : f32
    %133 = vector.broadcast %cst_92 : f32 to vector<8x8xf32>
    %134 = arith.mulf %132, %133 : vector<8x8xf32>
    %c1_93 = arith.constant 1 : index
    %c0_94 = arith.constant 0 : index
    %c0_95 = arith.constant 0 : index
    %135 = vector.load %arg2[%c1_93, %c0_94, %c0_95] : memref<2x1x8xf32, #tpu.memory_space<vmem>>, vector<1x1x8xf32>
    %136 = vector.shape_cast %135 : vector<1x1x8xf32> to vector<1x8xf32>
    %137 = vector.broadcast %136 : vector<1x8xf32> to vector<8x8xf32>
    %138 = arith.addf %134, %137 : vector<8x8xf32>
    %cst_96 = arith.constant dense<0xFF800000> : vector<8xf32>
    %139 = vector.multi_reduction <maximumf>, %138, %cst_96 [1] : vector<8x8xf32> to vector<8xf32>
    %140 = vector.shape_cast %139 : vector<8xf32> to vector<8x1xf32>
    %141 = vector.broadcast %140 : vector<8x1xf32> to vector<8x8xf32>
    %142 = arith.subf %138, %141 : vector<8x8xf32>
    %143 = math.exp %142 : vector<8x8xf32>
    %cst_97 = arith.constant dense<0.000000e+00> : vector<8xf32>
    %144 = vector.multi_reduction <add>, %143, %cst_97 [1] : vector<8x8xf32> to vector<8xf32>
    %145 = vector.shape_cast %144 : vector<8xf32> to vector<8x1xf32>
    %146 = tpu.reciprocal %145 {approx = true} : vector<8x1xf32> -> vector<8x1xf32>
    %147 = vector.broadcast %146 : vector<8x1xf32> to vector<8x8xf32>
    %148 = arith.mulf %143, %147 : vector<8x8xf32>
    %149 = arith.truncf %148 : vector<8x8xf32> to vector<8x8xbf16>
    %cst_98 = arith.constant dense<0.000000e+00> : vector<8x8xf32>
    %150 = tpu.matmul %149, %131, %cst_98 {dimension_numbers = #tpu.dot_dimension_numbers<[1], [0], [0], [1], [0, 0, 1, 1], [], []>} : vector<8x8xbf16>, vector<8x8xbf16>, vector<8x8xf32> -> vector<8x8xf32>
    %c8_99 = arith.constant 8 : index
    %c0_100 = arith.constant 0 : index
    %151 = vector.load %arg31[%c8_99, %c0_100] : memref<16x8xf32, #tpu.memory_space<vmem>>, vector<8x8xf32>
    tpu.vector_store %arg31[%c8_99, %c0_100], %150 {strides = array<i32>} : memref<16x8xf32, #tpu.memory_space<vmem>>, vector<8x8xf32>,
    %c0_101 = arith.constant 0 : index
    %c0_102 = arith.constant 0 : index
    %152 = vector.load %arg31[%c0_101, %c0_102] : memref<16x8xf32, #tpu.memory_space<vmem>>, vector<16x8xf32>
    %153 = arith.truncf %152 : vector<16x8xf32> to vector<16x8xbf16>
    %c0_103 = arith.constant 0 : index
    %c1_104 = arith.constant 1 : index
    %c0_105 = arith.constant 0 : index
    %c0_106 = arith.constant 0 : index
    %154 = vector.load %arg11[%c0_103, %c1_104, %c0_105, %c0_106] : memref<1x4x8x32xbf16, #tpu.memory_space<vmem>>, vector<1x1x8x32xbf16>
    %155 = vector.shape_cast %154 : vector<1x1x8x32xbf16> to vector<8x32xbf16>
    %cst_107 = arith.constant dense<0.000000e+00> : vector<16x32xf32>
    %156 = tpu.matmul %153, %155, %cst_107 {dimension_numbers = #tpu.dot_dimension_numbers<[1], [0], [0], [1], [0, 0, 1, 1], [], []>} : vector<16x8xbf16>, vector<8x32xbf16>, vector<16x32xf32> -> vector<16x32xf32>
    %157 = arith.addf %81, %156 : vector<16x32xf32>
    %c0_108 = arith.constant 0 : index
    %c2 = arith.constant 2 : index
    %c0_109 = arith.constant 0 : index
    %c0_110 = arith.constant 0 : index
    %158 = vector.load %arg5[%c0_108, %c2, %c0_109, %c0_110] : memref<1x4x32x8xbf16, #tpu.memory_space<vmem>>, vector<1x1x32x8xbf16>
    %159 = vector.shape_cast %158 : vector<1x1x32x8xbf16> to vector<32x8xbf16>
    %cst_111 = arith.constant dense<0.000000e+00> : vector<16x8xf32>
    %160 = tpu.matmul %4, %159, %cst_111 {dimension_numbers = #tpu.dot_dimension_numbers<[1], [0], [0], [1], [0, 0, 1, 1], [], []>} : vector<16x32xbf16>, vector<32x8xbf16>, vector<16x8xf32> -> vector<16x8xf32>
    %c0_112 = arith.constant 0 : index
    %c2_113 = arith.constant 2 : index
    %c0_114 = arith.constant 0 : index
    %c0_115 = arith.constant 0 : index
    %161 = vector.load %arg6[%c0_112, %c2_113, %c0_114, %c0_115] : memref<1x4x1x8xf32, #tpu.memory_space<vmem>>, vector<1x1x1x8xf32>
    %162 = vector.shape_cast %161 : vector<1x1x1x8xf32> to vector<1x8xf32>
    %163 = vector.broadcast %162 : vector<1x8xf32> to vector<16x8xf32>
    %164 = arith.addf %160, %163 : vector<16x8xf32>
    %c0_116 = arith.constant 0 : index
    %c2_117 = arith.constant 2 : index
    %c0_118 = arith.constant 0 : index
    %c0_119 = arith.constant 0 : index
    %165 = vector.load %arg7[%c0_116, %c2_117, %c0_118, %c0_119] : memref<1x4x32x8xbf16, #tpu.memory_space<vmem>>, vector<1x1x32x8xbf16>
    %166 = vector.shape_cast %165 : vector<1x1x32x8xbf16> to vector<32x8xbf16>
    %cst_120 = arith.constant dense<0.000000e+00> : vector<16x8xf32>
    %167 = tpu.matmul %4, %166, %cst_120 {dimension_numbers = #tpu.dot_dimension_numbers<[1], [0], [0], [1], [0, 0, 1, 1], [], []>} : vector<16x32xbf16>, vector<32x8xbf16>, vector<16x8xf32> -> vector<16x8xf32>
    %c0_121 = arith.constant 0 : index
    %c2_122 = arith.constant 2 : index
    %c0_123 = arith.constant 0 : index
    %c0_124 = arith.constant 0 : index
    %168 = vector.load %arg8[%c0_121, %c2_122, %c0_123, %c0_124] : memref<1x4x1x8xf32, #tpu.memory_space<vmem>>, vector<1x1x1x8xf32>
    %169 = vector.shape_cast %168 : vector<1x1x1x8xf32> to vector<1x8xf32>
    %170 = vector.broadcast %169 : vector<1x8xf32> to vector<16x8xf32>
    %171 = arith.addf %167, %170 : vector<16x8xf32>
    %c0_125 = arith.constant 0 : index
    %c2_126 = arith.constant 2 : index
    %c0_127 = arith.constant 0 : index
    %c0_128 = arith.constant 0 : index
    %172 = vector.load %arg9[%c0_125, %c2_126, %c0_127, %c0_128] : memref<1x4x32x8xbf16, #tpu.memory_space<vmem>>, vector<1x1x32x8xbf16>
    %173 = vector.shape_cast %172 : vector<1x1x32x8xbf16> to vector<32x8xbf16>
    %cst_129 = arith.constant dense<0.000000e+00> : vector<16x8xf32>
    %174 = tpu.matmul %4, %173, %cst_129 {dimension_numbers = #tpu.dot_dimension_numbers<[1], [0], [0], [1], [0, 0, 1, 1], [], []>} : vector<16x32xbf16>, vector<32x8xbf16>, vector<16x8xf32> -> vector<16x8xf32>
    %c0_130 = arith.constant 0 : index
    %c2_131 = arith.constant 2 : index
    %c0_132 = arith.constant 0 : index
    %c0_133 = arith.constant 0 : index
    %175 = vector.load %arg10[%c0_130, %c2_131, %c0_132, %c0_133] : memref<1x4x1x8xf32, #tpu.memory_space<vmem>>, vector<1x1x1x8xf32>
    %176 = vector.shape_cast %175 : vector<1x1x1x8xf32> to vector<1x8xf32>
    %177 = vector.broadcast %176 : vector<1x8xf32> to vector<16x8xf32>
    %178 = arith.addf %174, %177 : vector<16x8xf32>
    %179 = arith.truncf %164 : vector<16x8xf32> to vector<16x8xbf16>
    %180 = arith.truncf %171 : vector<16x8xf32> to vector<16x8xbf16>
    %181 = arith.truncf %178 : vector<16x8xf32> to vector<16x8xbf16>
    %182 = vector.extract_strided_slice %179 {offsets = [0, 0], sizes = [8, 8], strides = [1, 1]} : vector<16x8xbf16> to vector<8x8xbf16>
    %183 = vector.extract_strided_slice %180 {offsets = [0, 0], sizes = [8, 8], strides = [1, 1]} : vector<16x8xbf16> to vector<8x8xbf16>
    %184 = vector.extract_strided_slice %181 {offsets = [0, 0], sizes = [8, 8], strides = [1, 1]} : vector<16x8xbf16> to vector<8x8xbf16>
    %cst_134 = arith.constant dense<0.000000e+00> : vector<8x8xf32>
    %185 = tpu.matmul %182, %183, %cst_134 {dimension_numbers = #tpu.dot_dimension_numbers<[1], [1], [0], [0], [0, 0, 1, 0], [], []>} : vector<8x8xbf16>, vector<8x8xbf16>, vector<8x8xf32> -> vector<8x8xf32>
    %cst_135 = arith.constant 0.353553385 : f32
    %186 = vector.broadcast %cst_135 : f32 to vector<8x8xf32>
    %187 = arith.mulf %185, %186 : vector<8x8xf32>
    %c0_136 = arith.constant 0 : index
    %c0_137 = arith.constant 0 : index
    %c0_138 = arith.constant 0 : index
    %188 = vector.load %arg2[%c0_136, %c0_137, %c0_138] : memref<2x1x8xf32, #tpu.memory_space<vmem>>, vector<1x1x8xf32>
    %189 = vector.shape_cast %188 : vector<1x1x8xf32> to vector<1x8xf32>
    %190 = vector.broadcast %189 : vector<1x8xf32> to vector<8x8xf32>
    %191 = arith.addf %187, %190 : vector<8x8xf32>
    %cst_139 = arith.constant dense<0xFF800000> : vector<8xf32>
    %192 = vector.multi_reduction <maximumf>, %191, %cst_139 [1] : vector<8x8xf32> to vector<8xf32>
    %193 = vector.shape_cast %192 : vector<8xf32> to vector<8x1xf32>
    %194 = vector.broadcast %193 : vector<8x1xf32> to vector<8x8xf32>
    %195 = arith.subf %191, %194 : vector<8x8xf32>
    %196 = math.exp %195 : vector<8x8xf32>
    %cst_140 = arith.constant dense<0.000000e+00> : vector<8xf32>
    %197 = vector.multi_reduction <add>, %196, %cst_140 [1] : vector<8x8xf32> to vector<8xf32>
    %198 = vector.shape_cast %197 : vector<8xf32> to vector<8x1xf32>
    %199 = tpu.reciprocal %198 {approx = true} : vector<8x1xf32> -> vector<8x1xf32>
    %200 = vector.broadcast %199 : vector<8x1xf32> to vector<8x8xf32>
    %201 = arith.mulf %196, %200 : vector<8x8xf32>
    %202 = arith.truncf %201 : vector<8x8xf32> to vector<8x8xbf16>
    %cst_141 = arith.constant dense<0.000000e+00> : vector<8x8xf32>
    %203 = tpu.matmul %202, %184, %cst_141 {dimension_numbers = #tpu.dot_dimension_numbers<[1], [0], [0], [1], [0, 0, 1, 1], [], []>} : vector<8x8xbf16>, vector<8x8xbf16>, vector<8x8xf32> -> vector<8x8xf32>
    %c0_142 = arith.constant 0 : index
    %c0_143 = arith.constant 0 : index
    %204 = vector.load %arg31[%c0_142, %c0_143] : memref<16x8xf32, #tpu.memory_space<vmem>>, vector<8x8xf32>
    tpu.vector_store %arg31[%c0_142, %c0_143], %203 {strides = array<i32>} : memref<16x8xf32, #tpu.memory_space<vmem>>, vector<8x8xf32>,
    %205 = vector.extract_strided_slice %179 {offsets = [8, 0], sizes = [8, 8], strides = [1, 1]} : vector<16x8xbf16> to vector<8x8xbf16>
    %206 = vector.extract_strided_slice %180 {offsets = [8, 0], sizes = [8, 8], strides = [1, 1]} : vector<16x8xbf16> to vector<8x8xbf16>
    %207 = vector.extract_strided_slice %181 {offsets = [8, 0], sizes = [8, 8], strides = [1, 1]} : vector<16x8xbf16> to vector<8x8xbf16>
    %cst_144 = arith.constant dense<0.000000e+00> : vector<8x8xf32>
    %208 = tpu.matmul %205, %206, %cst_144 {dimension_numbers = #tpu.dot_dimension_numbers<[1], [1], [0], [0], [0, 0, 1, 0], [], []>} : vector<8x8xbf16>, vector<8x8xbf16>, vector<8x8xf32> -> vector<8x8xf32>
    %cst_145 = arith.constant 0.353553385 : f32
    %209 = vector.broadcast %cst_145 : f32 to vector<8x8xf32>
    %210 = arith.mulf %208, %209 : vector<8x8xf32>
    %c1_146 = arith.constant 1 : index
    %c0_147 = arith.constant 0 : index
    %c0_148 = arith.constant 0 : index
    %211 = vector.load %arg2[%c1_146, %c0_147, %c0_148] : memref<2x1x8xf32, #tpu.memory_space<vmem>>, vector<1x1x8xf32>
    %212 = vector.shape_cast %211 : vector<1x1x8xf32> to vector<1x8xf32>
    %213 = vector.broadcast %212 : vector<1x8xf32> to vector<8x8xf32>
    %214 = arith.addf %210, %213 : vector<8x8xf32>
    %cst_149 = arith.constant dense<0xFF800000> : vector<8xf32>
    %215 = vector.multi_reduction <maximumf>, %214, %cst_149 [1] : vector<8x8xf32> to vector<8xf32>
    %216 = vector.shape_cast %215 : vector<8xf32> to vector<8x1xf32>
    %217 = vector.broadcast %216 : vector<8x1xf32> to vector<8x8xf32>
    %218 = arith.subf %214, %217 : vector<8x8xf32>
    %219 = math.exp %218 : vector<8x8xf32>
    %cst_150 = arith.constant dense<0.000000e+00> : vector<8xf32>
    %220 = vector.multi_reduction <add>, %219, %cst_150 [1] : vector<8x8xf32> to vector<8xf32>
    %221 = vector.shape_cast %220 : vector<8xf32> to vector<8x1xf32>
    %222 = tpu.reciprocal %221 {approx = true} : vector<8x1xf32> -> vector<8x1xf32>
    %223 = vector.broadcast %222 : vector<8x1xf32> to vector<8x8xf32>
    %224 = arith.mulf %219, %223 : vector<8x8xf32>
    %225 = arith.truncf %224 : vector<8x8xf32> to vector<8x8xbf16>
    %cst_151 = arith.constant dense<0.000000e+00> : vector<8x8xf32>
    %226 = tpu.matmul %225, %207, %cst_151 {dimension_numbers = #tpu.dot_dimension_numbers<[1], [0], [0], [1], [0, 0, 1, 1], [], []>} : vector<8x8xbf16>, vector<8x8xbf16>, vector<8x8xf32> -> vector<8x8xf32>
    %c8_152 = arith.constant 8 : index
    %c0_153 = arith.constant 0 : index
    %227 = vector.load %arg31[%c8_152, %c0_153] : memref<16x8xf32, #tpu.memory_space<vmem>>, vector<8x8xf32>
    tpu.vector_store %arg31[%c8_152, %c0_153], %226 {strides = array<i32>} : memref<16x8xf32, #tpu.memory_space<vmem>>, vector<8x8xf32>,
    %c0_154 = arith.constant 0 : index
    %c0_155 = arith.constant 0 : index
    %228 = vector.load %arg31[%c0_154, %c0_155] : memref<16x8xf32, #tpu.memory_space<vmem>>, vector<16x8xf32>
    %229 = arith.truncf %228 : vector<16x8xf32> to vector<16x8xbf16>
    %c0_156 = arith.constant 0 : index
    %c2_157 = arith.constant 2 : index
    %c0_158 = arith.constant 0 : index
    %c0_159 = arith.constant 0 : index
    %230 = vector.load %arg11[%c0_156, %c2_157, %c0_158, %c0_159] : memref<1x4x8x32xbf16, #tpu.memory_space<vmem>>, vector<1x1x8x32xbf16>
    %231 = vector.shape_cast %230 : vector<1x1x8x32xbf16> to vector<8x32xbf16>
    %cst_160 = arith.constant dense<0.000000e+00> : vector<16x32xf32>
    %232 = tpu.matmul %229, %231, %cst_160 {dimension_numbers = #tpu.dot_dimension_numbers<[1], [0], [0], [1], [0, 0, 1, 1], [], []>} : vector<16x8xbf16>, vector<8x32xbf16>, vector<16x32xf32> -> vector<16x32xf32>
    %233 = arith.addf %157, %232 : vector<16x32xf32>
    %c0_161 = arith.constant 0 : index
    %c3 = arith.constant 3 : index
    %c0_162 = arith.constant 0 : index
    %c0_163 = arith.constant 0 : index
    %234 = vector.load %arg5[%c0_161, %c3, %c0_162, %c0_163] : memref<1x4x32x8xbf16, #tpu.memory_space<vmem>>, vector<1x1x32x8xbf16>
    %235 = vector.shape_cast %234 : vector<1x1x32x8xbf16> to vector<32x8xbf16>
    %cst_164 = arith.constant dense<0.000000e+00> : vector<16x8xf32>
    %236 = tpu.matmul %4, %235, %cst_164 {dimension_numbers = #tpu.dot_dimension_numbers<[1], [0], [0], [1], [0, 0, 1, 1], [], []>} : vector<16x32xbf16>, vector<32x8xbf16>, vector<16x8xf32> -> vector<16x8xf32>
    %c0_165 = arith.constant 0 : index
    %c3_166 = arith.constant 3 : index
    %c0_167 = arith.constant 0 : index
    %c0_168 = arith.constant 0 : index
    %237 = vector.load %arg6[%c0_165, %c3_166, %c0_167, %c0_168] : memref<1x4x1x8xf32, #tpu.memory_space<vmem>>, vector<1x1x1x8xf32>
    %238 = vector.shape_cast %237 : vector<1x1x1x8xf32> to vector<1x8xf32>
    %239 = vector.broadcast %238 : vector<1x8xf32> to vector<16x8xf32>
    %240 = arith.addf %236, %239 : vector<16x8xf32>
    %c0_169 = arith.constant 0 : index
    %c3_170 = arith.constant 3 : index
    %c0_171 = arith.constant 0 : index
    %c0_172 = arith.constant 0 : index
    %241 = vector.load %arg7[%c0_169, %c3_170, %c0_171, %c0_172] : memref<1x4x32x8xbf16, #tpu.memory_space<vmem>>, vector<1x1x32x8xbf16>
    %242 = vector.shape_cast %241 : vector<1x1x32x8xbf16> to vector<32x8xbf16>
    %cst_173 = arith.constant dense<0.000000e+00> : vector<16x8xf32>
    %243 = tpu.matmul %4, %242, %cst_173 {dimension_numbers = #tpu.dot_dimension_numbers<[1], [0], [0], [1], [0, 0, 1, 1], [], []>} : vector<16x32xbf16>, vector<32x8xbf16>, vector<16x8xf32> -> vector<16x8xf32>
    %c0_174 = arith.constant 0 : index
    %c3_175 = arith.constant 3 : index
    %c0_176 = arith.constant 0 : index
    %c0_177 = arith.constant 0 : index
    %244 = vector.load %arg8[%c0_174, %c3_175, %c0_176, %c0_177] : memref<1x4x1x8xf32, #tpu.memory_space<vmem>>, vector<1x1x1x8xf32>
    %245 = vector.shape_cast %244 : vector<1x1x1x8xf32> to vector<1x8xf32>
    %246 = vector.broadcast %245 : vector<1x8xf32> to vector<16x8xf32>
    %247 = arith.addf %243, %246 : vector<16x8xf32>
    %c0_178 = arith.constant 0 : index
    %c3_179 = arith.constant 3 : index
    %c0_180 = arith.constant 0 : index
    %c0_181 = arith.constant 0 : index
    %248 = vector.load %arg9[%c0_178, %c3_179, %c0_180, %c0_181] : memref<1x4x32x8xbf16, #tpu.memory_space<vmem>>, vector<1x1x32x8xbf16>
    %249 = vector.shape_cast %248 : vector<1x1x32x8xbf16> to vector<32x8xbf16>
    %cst_182 = arith.constant dense<0.000000e+00> : vector<16x8xf32>
    %250 = tpu.matmul %4, %249, %cst_182 {dimension_numbers = #tpu.dot_dimension_numbers<[1], [0], [0], [1], [0, 0, 1, 1], [], []>} : vector<16x32xbf16>, vector<32x8xbf16>, vector<16x8xf32> -> vector<16x8xf32>
    %c0_183 = arith.constant 0 : index
    %c3_184 = arith.constant 3 : index
    %c0_185 = arith.constant 0 : index
    %c0_186 = arith.constant 0 : index
    %251 = vector.load %arg10[%c0_183, %c3_184, %c0_185, %c0_186] : memref<1x4x1x8xf32, #tpu.memory_space<vmem>>, vector<1x1x1x8xf32>
    %252 = vector.shape_cast %251 : vector<1x1x1x8xf32> to vector<1x8xf32>
    %253 = vector.broadcast %252 : vector<1x8xf32> to vector<16x8xf32>
    %254 = arith.addf %250, %253 : vector<16x8xf32>
    %255 = arith.truncf %240 : vector<16x8xf32> to vector<16x8xbf16>
    %256 = arith.truncf %247 : vector<16x8xf32> to vector<16x8xbf16>
    %257 = arith.truncf %254 : vector<16x8xf32> to vector<16x8xbf16>
    %258 = vector.extract_strided_slice %255 {offsets = [0, 0], sizes = [8, 8], strides = [1, 1]} : vector<16x8xbf16> to vector<8x8xbf16>
    %259 = vector.extract_strided_slice %256 {offsets = [0, 0], sizes = [8, 8], strides = [1, 1]} : vector<16x8xbf16> to vector<8x8xbf16>
    %260 = vector.extract_strided_slice %257 {offsets = [0, 0], sizes = [8, 8], strides = [1, 1]} : vector<16x8xbf16> to vector<8x8xbf16>
    %cst_187 = arith.constant dense<0.000000e+00> : vector<8x8xf32>
    %261 = tpu.matmul %258, %259, %cst_187 {dimension_numbers = #tpu.dot_dimension_numbers<[1], [1], [0], [0], [0, 0, 1, 0], [], []>} : vector<8x8xbf16>, vector<8x8xbf16>, vector<8x8xf32> -> vector<8x8xf32>
    %cst_188 = arith.constant 0.353553385 : f32
    %262 = vector.broadcast %cst_188 : f32 to vector<8x8xf32>
    %263 = arith.mulf %261, %262 : vector<8x8xf32>
    %c0_189 = arith.constant 0 : index
    %c0_190 = arith.constant 0 : index
    %c0_191 = arith.constant 0 : index
    %264 = vector.load %arg2[%c0_189, %c0_190, %c0_191] : memref<2x1x8xf32, #tpu.memory_space<vmem>>, vector<1x1x8xf32>
    %265 = vector.shape_cast %264 : vector<1x1x8xf32> to vector<1x8xf32>
    %266 = vector.broadcast %265 : vector<1x8xf32> to vector<8x8xf32>
    %267 = arith.addf %263, %266 : vector<8x8xf32>
    %cst_192 = arith.constant dense<0xFF800000> : vector<8xf32>
    %268 = vector.multi_reduction <maximumf>, %267, %cst_192 [1] : vector<8x8xf32> to vector<8xf32>
    %269 = vector.shape_cast %268 : vector<8xf32> to vector<8x1xf32>
    %270 = vector.broadcast %269 : vector<8x1xf32> to vector<8x8xf32>
    %271 = arith.subf %267, %270 : vector<8x8xf32>
    %272 = math.exp %271 : vector<8x8xf32>
    %cst_193 = arith.constant dense<0.000000e+00> : vector<8xf32>
    %273 = vector.multi_reduction <add>, %272, %cst_193 [1] : vector<8x8xf32> to vector<8xf32>
    %274 = vector.shape_cast %273 : vector<8xf32> to vector<8x1xf32>
    %275 = tpu.reciprocal %274 {approx = true} : vector<8x1xf32> -> vector<8x1xf32>
    %276 = vector.broadcast %275 : vector<8x1xf32> to vector<8x8xf32>
    %277 = arith.mulf %272, %276 : vector<8x8xf32>
    %278 = arith.truncf %277 : vector<8x8xf32> to vector<8x8xbf16>
    %cst_194 = arith.constant dense<0.000000e+00> : vector<8x8xf32>
    %279 = tpu.matmul %278, %260, %cst_194 {dimension_numbers = #tpu.dot_dimension_numbers<[1], [0], [0], [1], [0, 0, 1, 1], [], []>} : vector<8x8xbf16>, vector<8x8xbf16>, vector<8x8xf32> -> vector<8x8xf32>
    %c0_195 = arith.constant 0 : index
    %c0_196 = arith.constant 0 : index
    %280 = vector.load %arg31[%c0_195, %c0_196] : memref<16x8xf32, #tpu.memory_space<vmem>>, vector<8x8xf32>
    tpu.vector_store %arg31[%c0_195, %c0_196], %279 {strides = array<i32>} : memref<16x8xf32, #tpu.memory_space<vmem>>, vector<8x8xf32>,
    %281 = vector.extract_strided_slice %255 {offsets = [8, 0], sizes = [8, 8], strides = [1, 1]} : vector<16x8xbf16> to vector<8x8xbf16>
    %282 = vector.extract_strided_slice %256 {offsets = [8, 0], sizes = [8, 8], strides = [1, 1]} : vector<16x8xbf16> to vector<8x8xbf16>
    %283 = vector.extract_strided_slice %257 {offsets = [8, 0], sizes = [8, 8], strides = [1, 1]} : vector<16x8xbf16> to vector<8x8xbf16>
    %cst_197 = arith.constant dense<0.000000e+00> : vector<8x8xf32>
    %284 = tpu.matmul %281, %282, %cst_197 {dimension_numbers = #tpu.dot_dimension_numbers<[1], [1], [0], [0], [0, 0, 1, 0], [], []>} : vector<8x8xbf16>, vector<8x8xbf16>, vector<8x8xf32> -> vector<8x8xf32>
    %cst_198 = arith.constant 0.353553385 : f32
    %285 = vector.broadcast %cst_198 : f32 to vector<8x8xf32>
    %286 = arith.mulf %284, %285 : vector<8x8xf32>
    %c1_199 = arith.constant 1 : index
    %c0_200 = arith.constant 0 : index
    %c0_201 = arith.constant 0 : index
    %287 = vector.load %arg2[%c1_199, %c0_200, %c0_201] : memref<2x1x8xf32, #tpu.memory_space<vmem>>, vector<1x1x8xf32>
    %288 = vector.shape_cast %287 : vector<1x1x8xf32> to vector<1x8xf32>
    %289 = vector.broadcast %288 : vector<1x8xf32> to vector<8x8xf32>
    %290 = arith.addf %286, %289 : vector<8x8xf32>
    %cst_202 = arith.constant dense<0xFF800000> : vector<8xf32>
    %291 = vector.multi_reduction <maximumf>, %290, %cst_202 [1] : vector<8x8xf32> to vector<8xf32>
    %292 = vector.shape_cast %291 : vector<8xf32> to vector<8x1xf32>
    %293 = vector.broadcast %292 : vector<8x1xf32> to vector<8x8xf32>
    %294 = arith.subf %290, %293 : vector<8x8xf32>
    %295 = math.exp %294 : vector<8x8xf32>
    %cst_203 = arith.constant dense<0.000000e+00> : vector<8xf32>
    %296 = vector.multi_reduction <add>, %295, %cst_203 [1] : vector<8x8xf32> to vector<8xf32>
    %297 = vector.shape_cast %296 : vector<8xf32> to vector<8x1xf32>
    %298 = tpu.reciprocal %297 {approx = true} : vector<8x1xf32> -> vector<8x1xf32>
    %299 = vector.broadcast %298 : vector<8x1xf32> to vector<8x8xf32>
    %300 = arith.mulf %295, %299 : vector<8x8xf32>
    %301 = arith.truncf %300 : vector<8x8xf32> to vector<8x8xbf16>
    %cst_204 = arith.constant dense<0.000000e+00> : vector<8x8xf32>
    %302 = tpu.matmul %301, %283, %cst_204 {dimension_numbers = #tpu.dot_dimension_numbers<[1], [0], [0], [1], [0, 0, 1, 1], [], []>} : vector<8x8xbf16>, vector<8x8xbf16>, vector<8x8xf32> -> vector<8x8xf32>
    %c8_205 = arith.constant 8 : index
    %c0_206 = arith.constant 0 : index
    %303 = vector.load %arg31[%c8_205, %c0_206] : memref<16x8xf32, #tpu.memory_space<vmem>>, vector<8x8xf32>
    tpu.vector_store %arg31[%c8_205, %c0_206], %302 {strides = array<i32>} : memref<16x8xf32, #tpu.memory_space<vmem>>, vector<8x8xf32>,
    %c0_207 = arith.constant 0 : index
    %c0_208 = arith.constant 0 : index
    %304 = vector.load %arg31[%c0_207, %c0_208] : memref<16x8xf32, #tpu.memory_space<vmem>>, vector<16x8xf32>
    %305 = arith.truncf %304 : vector<16x8xf32> to vector<16x8xbf16>
    %c0_209 = arith.constant 0 : index
    %c3_210 = arith.constant 3 : index
    %c0_211 = arith.constant 0 : index
    %c0_212 = arith.constant 0 : index
    %306 = vector.load %arg11[%c0_209, %c3_210, %c0_211, %c0_212] : memref<1x4x8x32xbf16, #tpu.memory_space<vmem>>, vector<1x1x8x32xbf16>
    %307 = vector.shape_cast %306 : vector<1x1x8x32xbf16> to vector<8x32xbf16>
    %cst_213 = arith.constant dense<0.000000e+00> : vector<16x32xf32>
    %308 = tpu.matmul %305, %307, %cst_213 {dimension_numbers = #tpu.dot_dimension_numbers<[1], [0], [0], [1], [0, 0, 1, 1], [], []>} : vector<16x8xbf16>, vector<8x32xbf16>, vector<16x32xf32> -> vector<16x32xf32>
    %309 = arith.addf %233, %308 : vector<16x32xf32>
    %c0_214 = arith.constant 0 : index
    %c0_215 = arith.constant 0 : index
    %c0_216 = arith.constant 0 : index
    %310 = vector.load %arg12[%c0_214, %c0_215, %c0_216] : memref<1x1x32xf32, #tpu.memory_space<vmem>>, vector<1x1x32xf32>
    %311 = vector.shape_cast %310 : vector<1x1x32xf32> to vector<1x32xf32>
    %312 = vector.broadcast %311 : vector<1x32xf32> to vector<16x32xf32>
    %313 = arith.addf %309, %312 : vector<16x32xf32>
    %314 = arith.addf %3, %313 : vector<16x32xf32>
    %c0_217 = arith.constant 0 : index
    %c0_218 = arith.constant 0 : index
    %c0_219 = arith.constant 0 : index
    %315 = vector.load %arg13[%c0_217, %c0_218, %c0_219] : memref<1x1x32xf32, #tpu.memory_space<vmem>>, vector<1x1x32xf32>
    %316 = vector.shape_cast %315 : vector<1x1x32xf32> to vector<1x32xf32>
    %c0_220 = arith.constant 0 : index
    %c0_221 = arith.constant 0 : index
    %c0_222 = arith.constant 0 : index
    %317 = vector.load %arg14[%c0_220, %c0_221, %c0_222] : memref<1x1x32xf32, #tpu.memory_space<vmem>>, vector<1x1x32xf32>
    %318 = vector.shape_cast %317 : vector<1x1x32xf32> to vector<1x32xf32>
    %cst_223 = arith.constant dense<0.000000e+00> : vector<16xf32>
    %319 = vector.multi_reduction <add>, %314, %cst_223 [1] : vector<16x32xf32> to vector<16xf32>
    %320 = vector.shape_cast %319 : vector<16xf32> to vector<16x1xf32>
    %321 = arith.mulf %314, %314 : vector<16x32xf32>
    %cst_224 = arith.constant dense<0.000000e+00> : vector<16xf32>
    %322 = vector.multi_reduction <add>, %321, %cst_224 [1] : vector<16x32xf32> to vector<16xf32>
    %323 = vector.shape_cast %322 : vector<16xf32> to vector<16x1xf32>
    %cst_225 = arith.constant 3.125000e-02 : f32
    %324 = vector.broadcast %cst_225 : f32 to vector<16x1xf32>
    %325 = arith.mulf %320, %324 : vector<16x1xf32>
    %cst_226 = arith.constant 3.125000e-02 : f32
    %326 = vector.broadcast %cst_226 : f32 to vector<16x1xf32>
    %327 = arith.mulf %323, %326 : vector<16x1xf32>
    %328 = arith.mulf %325, %325 : vector<16x1xf32>
    %329 = arith.subf %327, %328 : vector<16x1xf32>
    %cst_227 = arith.constant 0.000000e+00 : f32
    %330 = vector.broadcast %cst_227 : f32 to vector<16x1xf32>
    %331 = arith.maximumf %329, %330 : vector<16x1xf32>
    %332 = vector.broadcast %325 : vector<16x1xf32> to vector<16x32xf32>
    %333 = arith.subf %314, %332 : vector<16x32xf32>
    %cst_228 = arith.constant 9.99999996E-13 : f32
    %334 = vector.broadcast %cst_228 : f32 to vector<16x1xf32>
    %335 = arith.addf %331, %334 : vector<16x1xf32>
    %336 = math.rsqrt %335 : vector<16x1xf32>
    %337 = vector.broadcast %336 : vector<16x1xf32> to vector<16x32xf32>
    %338 = arith.mulf %333, %337 : vector<16x32xf32>
    %339 = vector.broadcast %316 : vector<1x32xf32> to vector<16x32xf32>
    %340 = arith.mulf %338, %339 : vector<16x32xf32>
    %341 = vector.broadcast %318 : vector<1x32xf32> to vector<16x32xf32>
    %342 = arith.addf %340, %341 : vector<16x32xf32>
    %343 = arith.truncf %342 : vector<16x32xf32> to vector<16x32xbf16>
    %c0_229 = arith.constant 0 : index
    %c0_230 = arith.constant 0 : index
    %c0_231 = arith.constant 0 : index
    %344 = vector.load %arg15[%c0_229, %c0_230, %c0_231] : memref<1x32x64xbf16, #tpu.memory_space<vmem>>, vector<1x32x64xbf16>
    %345 = vector.shape_cast %344 : vector<1x32x64xbf16> to vector<32x64xbf16>
    %cst_232 = arith.constant dense<0.000000e+00> : vector<16x64xf32>
    %346 = tpu.matmul %343, %345, %cst_232 {dimension_numbers = #tpu.dot_dimension_numbers<[1], [0], [0], [1], [0, 0, 1, 1], [], []>} : vector<16x32xbf16>, vector<32x64xbf16>, vector<16x64xf32> -> vector<16x64xf32>
    %c0_233 = arith.constant 0 : index
    %c0_234 = arith.constant 0 : index
    %c0_235 = arith.constant 0 : index
    %347 = vector.load %arg16[%c0_233, %c0_234, %c0_235] : memref<1x1x64xf32, #tpu.memory_space<vmem>>, vector<1x1x64xf32>
    %348 = vector.shape_cast %347 : vector<1x1x64xf32> to vector<1x64xf32>
    %349 = vector.broadcast %348 : vector<1x64xf32> to vector<16x64xf32>
    %350 = arith.addf %346, %349 : vector<16x64xf32>
    %351 = arith.mulf %350, %350 : vector<16x64xf32>
    %352 = arith.mulf %350, %351 : vector<16x64xf32>
    %cst_236 = arith.constant 4.471500e-02 : f32
    %353 = vector.broadcast %cst_236 : f32 to vector<16x64xf32>
    %354 = arith.mulf %353, %352 : vector<16x64xf32>
    %355 = arith.addf %350, %354 : vector<16x64xf32>
    %cst_237 = arith.constant 0.797884583 : f32
    %356 = vector.broadcast %cst_237 : f32 to vector<16x64xf32>
    %357 = arith.mulf %356, %355 : vector<16x64xf32>
    %358 = math.tanh %357 : vector<16x64xf32>
    %cst_238 = arith.constant 1.000000e+00 : f32
    %359 = vector.broadcast %cst_238 : f32 to vector<16x64xf32>
    %360 = arith.addf %359, %358 : vector<16x64xf32>
    %cst_239 = arith.constant 5.000000e-01 : f32
    %361 = vector.broadcast %cst_239 : f32 to vector<16x64xf32>
    %362 = arith.mulf %361, %360 : vector<16x64xf32>
    %363 = arith.mulf %350, %362 : vector<16x64xf32>
    %364 = arith.truncf %363 : vector<16x64xf32> to vector<16x64xbf16>
    %c0_240 = arith.constant 0 : index
    %c0_241 = arith.constant 0 : index
    %c0_242 = arith.constant 0 : index
    %365 = vector.load %arg17[%c0_240, %c0_241, %c0_242] : memref<1x64x32xbf16, #tpu.memory_space<vmem>>, vector<1x64x32xbf16>
    %366 = vector.shape_cast %365 : vector<1x64x32xbf16> to vector<64x32xbf16>
    %cst_243 = arith.constant dense<0.000000e+00> : vector<16x32xf32>
    %367 = tpu.matmul %364, %366, %cst_243 {dimension_numbers = #tpu.dot_dimension_numbers<[1], [0], [0], [1], [0, 0, 1, 1], [], []>} : vector<16x64xbf16>, vector<64x32xbf16>, vector<16x32xf32> -> vector<16x32xf32>
    %c0_244 = arith.constant 0 : index
    %c0_245 = arith.constant 0 : index
    %c0_246 = arith.constant 0 : index
    %368 = vector.load %arg18[%c0_244, %c0_245, %c0_246] : memref<1x1x32xf32, #tpu.memory_space<vmem>>, vector<1x1x32xf32>
    %369 = vector.shape_cast %368 : vector<1x1x32xf32> to vector<1x32xf32>
    %370 = vector.broadcast %369 : vector<1x32xf32> to vector<16x32xf32>
    %371 = arith.addf %367, %370 : vector<16x32xf32>
    %372 = arith.addf %342, %371 : vector<16x32xf32>
    %c0_247 = arith.constant 0 : index
    %c0_248 = arith.constant 0 : index
    %c0_249 = arith.constant 0 : index
    %373 = vector.load %arg19[%c0_247, %c0_248, %c0_249] : memref<1x1x32xf32, #tpu.memory_space<vmem>>, vector<1x1x32xf32>
    %374 = vector.shape_cast %373 : vector<1x1x32xf32> to vector<1x32xf32>
    %c0_250 = arith.constant 0 : index
    %c0_251 = arith.constant 0 : index
    %c0_252 = arith.constant 0 : index
    %375 = vector.load %arg20[%c0_250, %c0_251, %c0_252] : memref<1x1x32xf32, #tpu.memory_space<vmem>>, vector<1x1x32xf32>
    %376 = vector.shape_cast %375 : vector<1x1x32xf32> to vector<1x32xf32>
    %cst_253 = arith.constant dense<0.000000e+00> : vector<16xf32>
    %377 = vector.multi_reduction <add>, %372, %cst_253 [1] : vector<16x32xf32> to vector<16xf32>
    %378 = vector.shape_cast %377 : vector<16xf32> to vector<16x1xf32>
    %379 = arith.mulf %372, %372 : vector<16x32xf32>
    %cst_254 = arith.constant dense<0.000000e+00> : vector<16xf32>
    %380 = vector.multi_reduction <add>, %379, %cst_254 [1] : vector<16x32xf32> to vector<16xf32>
    %381 = vector.shape_cast %380 : vector<16xf32> to vector<16x1xf32>
    %cst_255 = arith.constant 3.125000e-02 : f32
    %382 = vector.broadcast %cst_255 : f32 to vector<16x1xf32>
    %383 = arith.mulf %378, %382 : vector<16x1xf32>
    %cst_256 = arith.constant 3.125000e-02 : f32
    %384 = vector.broadcast %cst_256 : f32 to vector<16x1xf32>
    %385 = arith.mulf %381, %384 : vector<16x1xf32>
    %386 = arith.mulf %383, %383 : vector<16x1xf32>
    %387 = arith.subf %385, %386 : vector<16x1xf32>
    %cst_257 = arith.constant 0.000000e+00 : f32
    %388 = vector.broadcast %cst_257 : f32 to vector<16x1xf32>
    %389 = arith.maximumf %387, %388 : vector<16x1xf32>
    %390 = vector.broadcast %383 : vector<16x1xf32> to vector<16x32xf32>
    %391 = arith.subf %372, %390 : vector<16x32xf32>
    %cst_258 = arith.constant 9.99999996E-13 : f32
    %392 = vector.broadcast %cst_258 : f32 to vector<16x1xf32>
    %393 = arith.addf %389, %392 : vector<16x1xf32>
    %394 = math.rsqrt %393 : vector<16x1xf32>
    %395 = vector.broadcast %394 : vector<16x1xf32> to vector<16x32xf32>
    %396 = arith.mulf %391, %395 : vector<16x32xf32>
    %397 = vector.broadcast %374 : vector<1x32xf32> to vector<16x32xf32>
    %398 = arith.mulf %396, %397 : vector<16x32xf32>
    %399 = vector.broadcast %376 : vector<1x32xf32> to vector<16x32xf32>
    %400 = arith.addf %398, %399 : vector<16x32xf32>
    %c0_259 = arith.constant 0 : index
    %c0_260 = arith.constant 0 : index
    %401 = vector.load %arg30[%c0_259, %c0_260] : memref<16x32xf32, #tpu.memory_space<vmem>>, vector<16x32xf32>
    tpu.vector_store %arg30[%c0_259, %c0_260], %400 {strides = array<i32>} : memref<16x32xf32, #tpu.memory_space<vmem>>, vector<16x32xf32>,
    %c1_i32 = arith.constant 1 : i32
    %402 = arith.cmpi eq, %arg0, %c1_i32 : i32
    %403 = arith.extui %402 : i1 to i32
    %c0_i32_261 = arith.constant 0 : i32
    %404 = arith.cmpi ne, %403, %c0_i32_261 : i32
    scf.if %404 {
      %c0_262 = arith.constant 0 : index
      %c0_263 = arith.constant 0 : index
      %405 = vector.load %arg30[%c0_262, %c0_263] : memref<16x32xf32, #tpu.memory_space<vmem>>, vector<1x32xf32>
      %c0_264 = arith.constant 0 : index
      %c0_265 = arith.constant 0 : index
      %406 = vector.load %arg32[%c0_264, %c0_265] : memref<2x32xf32, #tpu.memory_space<vmem>>, vector<1x32xf32>
      tpu.vector_store %arg32[%c0_264, %c0_265], %405 {strides = array<i32>} : memref<2x32xf32, #tpu.memory_space<vmem>>, vector<1x32xf32>,
      %c8_266 = arith.constant 8 : index
      %c0_267 = arith.constant 0 : index
      %407 = vector.load %arg30[%c8_266, %c0_267] : memref<16x32xf32, #tpu.memory_space<vmem>>, vector<1x32xf32>
      %c1_268 = arith.constant 1 : index
      %c0_269 = arith.constant 0 : index
      %408 = vector.load %arg32[%c1_268, %c0_269] : memref<2x32xf32, #tpu.memory_space<vmem>>, vector<1x32xf32>
      tpu.vector_store %arg32[%c1_268, %c0_269], %407 {strides = array<i32>} : memref<2x32xf32, #tpu.memory_space<vmem>>, vector<1x32xf32>,
      %c0_270 = arith.constant 0 : index
      %c0_271 = arith.constant 0 : index
      %409 = vector.load %arg32[%c0_270, %c0_271] : memref<2x32xf32, #tpu.memory_space<vmem>>, vector<2x32xf32>
      %410 = arith.truncf %409 : vector<2x32xf32> to vector<2x32xbf16>
      %c0_272 = arith.constant 0 : index
      %c0_273 = arith.constant 0 : index
      %411 = vector.load %arg21[%c0_272, %c0_273] : memref<32x384xbf16, #tpu.memory_space<vmem>>, vector<32x384xbf16>
      %cst_274 = arith.constant dense<0.000000e+00> : vector<2x384xf32>
      %412 = tpu.matmul %410, %411, %cst_274 {dimension_numbers = #tpu.dot_dimension_numbers<[1], [0], [0], [1], [0, 0, 1, 1], [], []>} : vector<2x32xbf16>, vector<32x384xbf16>, vector<2x384xf32> -> vector<2x384xf32>
      %c0_275 = arith.constant 0 : index
      %c0_276 = arith.constant 0 : index
      %413 = vector.load %arg22[%c0_275, %c0_276] : memref<1x384xf32, #tpu.memory_space<vmem>>, vector<1x384xf32>
      %414 = vector.broadcast %413 : vector<1x384xf32> to vector<2x384xf32>
      %415 = arith.addf %412, %414 : vector<2x384xf32>
      %cst_277 = arith.constant 0.000000e+00 : f32
      %416 = vector.broadcast %cst_277 : f32 to vector<2x384xf32>
      %417 = arith.maximumf %415, %416 : vector<2x384xf32>
      %418 = arith.truncf %417 : vector<2x384xf32> to vector<2x384xbf16>
      %c0_278 = arith.constant 0 : index
      %c0_279 = arith.constant 0 : index
      %419 = vector.load %arg23[%c0_278, %c0_279] : memref<384x128xbf16, #tpu.memory_space<vmem>>, vector<384x128xbf16>
      %cst_280 = arith.constant dense<0.000000e+00> : vector<2x128xf32>
      %420 = tpu.matmul %418, %419, %cst_280 {dimension_numbers = #tpu.dot_dimension_numbers<[1], [0], [0], [1], [0, 0, 1, 1], [], []>} : vector<2x384xbf16>, vector<384x128xbf16>, vector<2x128xf32> -> vector<2x128xf32>
      %c0_281 = arith.constant 0 : index
      %c0_282 = arith.constant 0 : index
      %421 = vector.load %arg24[%c0_281, %c0_282] : memref<1x128xf32, #tpu.memory_space<vmem>>, vector<1x128xf32>
      %422 = vector.broadcast %421 : vector<1x128xf32> to vector<2x128xf32>
      %423 = arith.addf %420, %422 : vector<2x128xf32>
      %cst_283 = arith.constant 0.000000e+00 : f32
      %424 = vector.broadcast %cst_283 : f32 to vector<2x128xf32>
      %425 = arith.maximumf %423, %424 : vector<2x128xf32>
      %426 = arith.truncf %425 : vector<2x128xf32> to vector<2x128xbf16>
      %c0_284 = arith.constant 0 : index
      %c0_285 = arith.constant 0 : index
      %427 = vector.load %arg25[%c0_284, %c0_285] : memref<128x128xbf16, #tpu.memory_space<vmem>>, vector<128x128xbf16>
      %cst_286 = arith.constant dense<0.000000e+00> : vector<2x128xf32>
      %428 = tpu.matmul %426, %427, %cst_286 {dimension_numbers = #tpu.dot_dimension_numbers<[1], [0], [0], [1], [0, 0, 1, 1], [], []>} : vector<2x128xbf16>, vector<128x128xbf16>, vector<2x128xf32> -> vector<2x128xf32>
      %c0_287 = arith.constant 0 : index
      %c0_288 = arith.constant 0 : index
      %429 = vector.load %arg26[%c0_287, %c0_288] : memref<1x128xf32, #tpu.memory_space<vmem>>, vector<1x128xf32>
      %430 = vector.broadcast %429 : vector<1x128xf32> to vector<2x128xf32>
      %431 = arith.addf %428, %430 : vector<2x128xf32>
      %cst_289 = arith.constant 0.000000e+00 : f32
      %432 = vector.broadcast %cst_289 : f32 to vector<2x128xf32>
      %433 = arith.maximumf %431, %432 : vector<2x128xf32>
      %434 = arith.truncf %433 : vector<2x128xf32> to vector<2x128xbf16>
      %c0_290 = arith.constant 0 : index
      %c0_291 = arith.constant 0 : index
      %435 = vector.load %arg27[%c0_290, %c0_291] : memref<128x128xbf16, #tpu.memory_space<vmem>>, vector<128x128xbf16>
      %cst_292 = arith.constant dense<0.000000e+00> : vector<2x128xf32>
      %436 = tpu.matmul %434, %435, %cst_292 {dimension_numbers = #tpu.dot_dimension_numbers<[1], [0], [0], [1], [0, 0, 1, 1], [], []>} : vector<2x128xbf16>, vector<128x128xbf16>, vector<2x128xf32> -> vector<2x128xf32>
      %c0_293 = arith.constant 0 : index
      %c0_294 = arith.constant 0 : index
      %437 = vector.load %arg28[%c0_293, %c0_294] : memref<1x128xf32, #tpu.memory_space<vmem>>, vector<1x128xf32>
      %438 = vector.broadcast %437 : vector<1x128xf32> to vector<2x128xf32>
      %439 = arith.addf %436, %438 : vector<2x128xf32>
      %c0_295 = arith.constant 0 : index
      %c0_296 = arith.constant 0 : index
      %440 = vector.load %arg29[%c0_295, %c0_296] : memref<2x128xf32, #tpu.memory_space<vmem>>, vector<2x128xf32>
      tpu.vector_store %arg29[%c0_295, %c0_296], %439 {strides = array<i32>} : memref<2x128xf32, #tpu.memory_space<vmem>>, vector<2x128xf32>,
    } else {
    }
    return
  }
  func.func @transform_0(%arg0: i32) -> (i32, i32) {
    %c0_i32 = arith.constant 0 : i32
    %c0_i32_0 = arith.constant 0 : i32
    %c0_i32_1 = arith.constant 0 : i32
    return %c0_i32, %c0_i32_0 : i32, i32
  }
  func.func @transform_1(%arg0: i32) -> (i32, i32, i32) {
    %c0_i32 = arith.constant 0 : i32
    %c0_i32_0 = arith.constant 0 : i32
    %c0_i32_1 = arith.constant 0 : i32
    %c0_i32_2 = arith.constant 0 : i32
    return %c0_i32, %c0_i32_0, %c0_i32_1 : i32, i32, i32
  }
  func.func @transform_2(%arg0: i32) -> (i32, i32) {
    %c0_i32 = arith.constant 0 : i32
    %c0_i32_0 = arith.constant 0 : i32
    %c0_i32_1 = arith.constant 0 : i32
    return %c0_i32, %c0_i32_0 : i32, i32
  }
  func.func @transform_3(%arg0: i32) -> (i32, i32) {
    %c0_i32 = arith.constant 0 : i32
    %c0_i32_0 = arith.constant 0 : i32
    %c0_i32_1 = arith.constant 0 : i32
    return %c0_i32, %c0_i32_0 : i32, i32
  }
  func.func @transform_4(%arg0: i32) -> (i32, i32, i32, i32) {
    %c0_i32 = arith.constant 0 : i32
    %c0_i32_0 = arith.constant 0 : i32
    %c0_i32_1 = arith.constant 0 : i32
    %c0_i32_2 = arith.constant 0 : i32
    return %arg0, %c0_i32, %c0_i32_0, %c0_i32_1 : i32, i32, i32, i32
  }
  func.func @transform_5(%arg0: i32) -> (i32, i32, i32, i32) {
    %c0_i32 = arith.constant 0 : i32
    %c0_i32_0 = arith.constant 0 : i32
    %c0_i32_1 = arith.constant 0 : i32
    %c0_i32_2 = arith.constant 0 : i32
    return %arg0, %c0_i32, %c0_i32_0, %c0_i32_1 : i32, i32, i32, i32
  }
  func.func @transform_6(%arg0: i32) -> (i32, i32, i32, i32) {
    %c0_i32 = arith.constant 0 : i32
    %c0_i32_0 = arith.constant 0 : i32
    %c0_i32_1 = arith.constant 0 : i32
    %c0_i32_2 = arith.constant 0 : i32
    return %arg0, %c0_i32, %c0_i32_0, %c0_i32_1 : i32, i32, i32, i32
  }
  func.func @transform_7(%arg0: i32) -> (i32, i32, i32, i32) {
    %c0_i32 = arith.constant 0 : i32
    %c0_i32_0 = arith.constant 0 : i32
    %c0_i32_1 = arith.constant 0 : i32
    %c0_i32_2 = arith.constant 0 : i32
    return %arg0, %c0_i32, %c0_i32_0, %c0_i32_1 : i32, i32, i32, i32
  }
  func.func @transform_8(%arg0: i32) -> (i32, i32, i32, i32) {
    %c0_i32 = arith.constant 0 : i32
    %c0_i32_0 = arith.constant 0 : i32
    %c0_i32_1 = arith.constant 0 : i32
    %c0_i32_2 = arith.constant 0 : i32
    return %arg0, %c0_i32, %c0_i32_0, %c0_i32_1 : i32, i32, i32, i32
  }
  func.func @transform_9(%arg0: i32) -> (i32, i32, i32, i32) {
    %c0_i32 = arith.constant 0 : i32
    %c0_i32_0 = arith.constant 0 : i32
    %c0_i32_1 = arith.constant 0 : i32
    %c0_i32_2 = arith.constant 0 : i32
    return %arg0, %c0_i32, %c0_i32_0, %c0_i32_1 : i32, i32, i32, i32
  }
  func.func @transform_10(%arg0: i32) -> (i32, i32, i32, i32) {
    %c0_i32 = arith.constant 0 : i32
    %c0_i32_0 = arith.constant 0 : i32
    %c0_i32_1 = arith.constant 0 : i32
    %c0_i32_2 = arith.constant 0 : i32
    return %arg0, %c0_i32, %c0_i32_0, %c0_i32_1 : i32, i32, i32, i32
  }
  func.func @transform_11(%arg0: i32) -> (i32, i32, i32) {
    %c0_i32 = arith.constant 0 : i32
    %c0_i32_0 = arith.constant 0 : i32
    %c0_i32_1 = arith.constant 0 : i32
    return %arg0, %c0_i32, %c0_i32_0 : i32, i32, i32
  }
  func.func @transform_12(%arg0: i32) -> (i32, i32, i32) {
    %c0_i32 = arith.constant 0 : i32
    %c0_i32_0 = arith.constant 0 : i32
    %c0_i32_1 = arith.constant 0 : i32
    return %arg0, %c0_i32, %c0_i32_0 : i32, i32, i32
  }
  func.func @transform_13(%arg0: i32) -> (i32, i32, i32) {
    %c0_i32 = arith.constant 0 : i32
    %c0_i32_0 = arith.constant 0 : i32
    %c0_i32_1 = arith.constant 0 : i32
    return %arg0, %c0_i32, %c0_i32_0 : i32, i32, i32
  }
  func.func @transform_14(%arg0: i32) -> (i32, i32, i32) {
    %c0_i32 = arith.constant 0 : i32
    %c0_i32_0 = arith.constant 0 : i32
    %c0_i32_1 = arith.constant 0 : i32
    return %arg0, %c0_i32, %c0_i32_0 : i32, i32, i32
  }
  func.func @transform_15(%arg0: i32) -> (i32, i32, i32) {
    %c0_i32 = arith.constant 0 : i32
    %c0_i32_0 = arith.constant 0 : i32
    %c0_i32_1 = arith.constant 0 : i32
    return %arg0, %c0_i32, %c0_i32_0 : i32, i32, i32
  }
  func.func @transform_16(%arg0: i32) -> (i32, i32, i32) {
    %c0_i32 = arith.constant 0 : i32
    %c0_i32_0 = arith.constant 0 : i32
    %c0_i32_1 = arith.constant 0 : i32
    return %arg0, %c0_i32, %c0_i32_0 : i32, i32, i32
  }
  func.func @transform_17(%arg0: i32) -> (i32, i32, i32) {
    %c0_i32 = arith.constant 0 : i32
    %c0_i32_0 = arith.constant 0 : i32
    %c0_i32_1 = arith.constant 0 : i32
    return %arg0, %c0_i32, %c0_i32_0 : i32, i32, i32
  }
  func.func @transform_18(%arg0: i32) -> (i32, i32, i32) {
    %c0_i32 = arith.constant 0 : i32
    %c0_i32_0 = arith.constant 0 : i32
    %c0_i32_1 = arith.constant 0 : i32
    return %arg0, %c0_i32, %c0_i32_0 : i32, i32, i32
  }
  func.func @transform_19(%arg0: i32) -> (i32, i32, i32) {
    %c0_i32 = arith.constant 0 : i32
    %c0_i32_0 = arith.constant 0 : i32
    %c0_i32_1 = arith.constant 0 : i32
    return %arg0, %c0_i32, %c0_i32_0 : i32, i32, i32
  }
  func.func @transform_20(%arg0: i32) -> (i32, i32) {
    %c0_i32 = arith.constant 0 : i32
    %c0_i32_0 = arith.constant 0 : i32
    %c0_i32_1 = arith.constant 0 : i32
    return %c0_i32, %c0_i32_0 : i32, i32
  }
  func.func @transform_21(%arg0: i32) -> (i32, i32) {
    %c0_i32 = arith.constant 0 : i32
    %c0_i32_0 = arith.constant 0 : i32
    %c0_i32_1 = arith.constant 0 : i32
    return %c0_i32, %c0_i32_0 : i32, i32
  }
  func.func @transform_22(%arg0: i32) -> (i32, i32) {
    %c0_i32 = arith.constant 0 : i32
    %c0_i32_0 = arith.constant 0 : i32
    %c0_i32_1 = arith.constant 0 : i32
    return %c0_i32, %c0_i32_0 : i32, i32
  }
  func.func @transform_23(%arg0: i32) -> (i32, i32) {
    %c0_i32 = arith.constant 0 : i32
    %c0_i32_0 = arith.constant 0 : i32
    %c0_i32_1 = arith.constant 0 : i32
    return %c0_i32, %c0_i32_0 : i32, i32
  }
  func.func @transform_24(%arg0: i32) -> (i32, i32) {
    %c0_i32 = arith.constant 0 : i32
    %c0_i32_0 = arith.constant 0 : i32
    %c0_i32_1 = arith.constant 0 : i32
    return %c0_i32, %c0_i32_0 : i32, i32
  }
  func.func @transform_25(%arg0: i32) -> (i32, i32) {
    %c0_i32 = arith.constant 0 : i32
    %c0_i32_0 = arith.constant 0 : i32
    %c0_i32_1 = arith.constant 0 : i32
    return %c0_i32, %c0_i32_0 : i32, i32
  }
  func.func @transform_26(%arg0: i32) -> (i32, i32) {
    %c0_i32 = arith.constant 0 : i32
    %c0_i32_0 = arith.constant 0 : i32
    %c0_i32_1 = arith.constant 0 : i32
    return %c0_i32, %c0_i32_0 : i32, i32
  }
  func.func @transform_27(%arg0: i32) -> (i32, i32) {
    %c0_i32 = arith.constant 0 : i32
    %c0_i32_0 = arith.constant 0 : i32
    %c0_i32_1 = arith.constant 0 : i32
    return %c0_i32, %c0_i32_0 : i32, i32
  }
  func.func @transform_28(%arg0: i32) -> (i32, i32) {
    %c0_i32 = arith.constant 0 : i32
    %c0_i32_0 = arith.constant 0 : i32
    %c0_i32_1 = arith.constant 0 : i32
    return %c0_i32, %c0_i32_0 : i32, i32
  }
}

</mosaic_0001>

<llo_original>
// kernel: bert_classifier_forward.1
$region0: #{bert_classifier_forward.1}
  #allocation0 [shape = 'u32[]', space=smem, size = 0x4, offset = 0x4, fixed_abs, tag = 'smem constant byte address 0x4 - core index']
  #allocation1 [shape = 'u32[144,128]{1,0:T(1,128)}', space=vmem, size = 0x12000, scoped, tag = 'internal scratch']
  #allocation2 [shape = 'f32[16,32]{1,0:T(8,128)}', space=vmem, size = 0x2000, scoped, tag = 'scratch operand']
  #allocation3 [shape = 'f32[16,8]{1,0:T(8,128)}', space=vmem, size = 0x2000, scoped, tag = 'scratch operand']
  #allocation4 [shape = 'f32[2,32]{1,0:T(2,128)}', space=vmem, size = 0x400, scoped, tag = 'scratch operand']
  %s0 = inlined_call_operand.vmem [shape: f32[16,32], index: 0, kind: input, shape index: {}]
  %s1 = inlined_call_operand.vmem [shape: f32[2,1,8], index: 1, kind: input, shape index: {}]
  %s2 = inlined_call_operand.vmem [shape: f32[1,32], index: 2, kind: input, shape index: {}]
  %s3 = inlined_call_operand.vmem [shape: f32[1,32], index: 3, kind: input, shape index: {}]
  %s4 = inlined_call_operand.vmem [shape: bf16[2,4,32,8], index: 4, kind: input, shape index: {}]
  %s5 = inlined_call_operand.vmem [shape: f32[2,4,1,8], index: 5, kind: input, shape index: {}]
  %s6 = inlined_call_operand.vmem [shape: bf16[2,4,32,8], index: 6, kind: input, shape index: {}]
  %s7 = inlined_call_operand.vmem [shape: f32[2,4,1,8], index: 7, kind: input, shape index: {}]
  %s8 = inlined_call_operand.vmem [shape: bf16[2,4,32,8], index: 8, kind: input, shape index: {}]
  %s9 = inlined_call_operand.vmem [shape: f32[2,4,1,8], index: 9, kind: input, shape index: {}]
  %s10 = inlined_call_operand.vmem [shape: bf16[2,4,8,32], index: 10, kind: input, shape index: {}]
  %s11 = inlined_call_operand.vmem [shape: f32[2,1,32], index: 11, kind: input, shape index: {}]
  %s12 = inlined_call_operand.vmem [shape: f32[2,1,32], index: 12, kind: input, shape index: {}]
  %s13 = inlined_call_operand.vmem [shape: f32[2,1,32], index: 13, kind: input, shape index: {}]
  %s14 = inlined_call_operand.vmem [shape: bf16[2,32,64], index: 14, kind: input, shape index: {}]
  %s15 = inlined_call_operand.vmem [shape: f32[2,1,64], index: 15, kind: input, shape index: {}]
  %s16 = inlined_call_operand.vmem [shape: bf16[2,64,32], index: 16, kind: input, shape index: {}]
  %s17 = inlined_call_operand.vmem [shape: f32[2,1,32], index: 17, kind: input, shape index: {}]
  %s18 = inlined_call_operand.vmem [shape: f32[2,1,32], index: 18, kind: input, shape index: {}]
  %s19 = inlined_call_operand.vmem [shape: f32[2,1,32], index: 19, kind: input, shape index: {}]
  %s20 = inlined_call_operand.vmem [shape: bf16[32,384], index: 20, kind: input, shape index: {}]
  %s21 = inlined_call_operand.vmem [shape: f32[1,384], index: 21, kind: input, shape index: {}]
  %s22 = inlined_call_operand.vmem [shape: bf16[384,128], index: 22, kind: input, shape index: {}]
  %s23 = inlined_call_operand.vmem [shape: f32[1,128], index: 23, kind: input, shape index: {}]
  %s24 = inlined_call_operand.vmem [shape: bf16[128,128], index: 24, kind: input, shape index: {}]
  %s25 = inlined_call_operand.vmem [shape: f32[1,128], index: 25, kind: input, shape index: {}]
  %s26 = inlined_call_operand.vmem [shape: bf16[128,128], index: 26, kind: input, shape index: {}]
  %s27 = inlined_call_operand.vmem [shape: f32[1,128], index: 27, kind: input, shape index: {}]
  %s28 = inlined_call_operand.hbm [shape: f32[2,128], index: 28, kind: output, shape index: {}]
  %s29 = sld [smem:[#allocation0]]
  $region153: #{bert_classifier_forward.1} parent=0
    _
  %s31 = ssub.s32 1, %s29
  %s32 = scalar_select 0, %s31, %s29
  $region1: #{bert_classifier_forward.1} parent=0
    #allocation5 [shape = 'u8[1024]{0}', space=vmem, size = 0x400, scoped, tag = 'output window, operand 0, single buffered']
    #allocation6 [shape = 's32[2]{0}', space=sflag, size = 0x8, scoped, tag = 'scoped memory for bert_classifier_forward.1']
    %33 = vsyncpa [#allocation6], 0
    loop: start=0, step=1, limit=4
    $region2: #{bert_classifier_forward.1} parent=1 // loop_pre_header
      _
    $region3: #{bert_classifier_forward.1} parent=1 // loop_header
      %s35 = sphi 0, %s39
      %p36 = scmp.ge.s32.totalorder %s35, 4
      %s43 = sphi 0, %s43
      %s45 = sphi 0, %s43
      %s46 = sphi 0, %s45
      %s60 = sphi 0, %s46
      %s64 = sphi 0, %s64
      %s66 = sphi 0, %s64
      %s67 = sphi 0, %s66
      %s81 = sphi 0, %s67
      %s85 = sphi 0, %s85
      %s87 = sphi 0, %s85
      %s88 = sphi 0, %s87
      %s102 = sphi 0, %s88
      %s106 = sphi 0, %s106
      %s108 = sphi 0, %s106
      %s109 = sphi 0, %s108
      %s123 = sphi 0, %s109
      %s129 = sphi 0, %s131
      %s132 = sphi 0, %s129
      %s133 = sphi 0, %s132
      %s149 = sphi 0, %s133
      %s155 = sphi 0, %s157
      %s158 = sphi 0, %s155
      %s159 = sphi 0, %s158
      %s175 = sphi 0, %s159
      %s181 = sphi 0, %s183
      %s184 = sphi 0, %s181
      %s185 = sphi 0, %s184
      %s201 = sphi 0, %s185
      %s207 = sphi 0, %s209
      %s210 = sphi 0, %s207
      %s211 = sphi 0, %s210
      %s227 = sphi 0, %s211
      %s233 = sphi 0, %s235
      %s236 = sphi 0, %s233
      %s237 = sphi 0, %s236
      %s253 = sphi 0, %s237
      %s259 = sphi 0, %s261
      %s262 = sphi 0, %s259
      %s263 = sphi 0, %s262
      %s279 = sphi 0, %s263
      %s285 = sphi 0, %s287
      %s288 = sphi 0, %s285
      %s289 = sphi 0, %s288
      %s305 = sphi 0, %s289
      %s311 = sphi 0, %s313
      %s314 = sphi 0, %s311
      %s315 = sphi 0, %s314
      %s331 = sphi 0, %s315
      %s337 = sphi 0, %s339
      %s340 = sphi 0, %s337
      %s341 = sphi 0, %s340
      %s357 = sphi 0, %s341
      %s363 = sphi 0, %s365
      %s366 = sphi 0, %s363
      %s367 = sphi 0, %s366
      %s383 = sphi 0, %s367
      %s389 = sphi 0, %s391
      %s392 = sphi 0, %s389
      %s393 = sphi 0, %s392
      %s409 = sphi 0, %s393
      %s415 = sphi 0, %s417
      %s418 = sphi 0, %s415
      %s419 = sphi 0, %s418
      %s435 = sphi 0, %s419
      %s441 = sphi 0, %s443
      %s444 = sphi 0, %s441
      %s445 = sphi 0, %s444
      %s461 = sphi 0, %s445
      %s467 = sphi 0, %s469
      %s470 = sphi 0, %s467
      %s471 = sphi 0, %s470
      %s487 = sphi 0, %s471
      %s493 = sphi 0, %s495
      %s496 = sphi 0, %s493
      %s497 = sphi 0, %s496
      %s513 = sphi 0, %s497
      %s519 = sphi 0, %s521
      %s522 = sphi 0, %s519
      %s523 = sphi 0, %s522
      %s539 = sphi 0, %s523
      %s543 = sphi 0, %s543
      %s545 = sphi 0, %s543
      %s546 = sphi 0, %s545
      %s560 = sphi 0, %s546
      %s564 = sphi 0, %s564
      %s566 = sphi 0, %s564
      %s567 = sphi 0, %s566
      %s581 = sphi 0, %s567
      %s585 = sphi 0, %s585
      %s587 = sphi 0, %s585
      %s588 = sphi 0, %s587
      %s602 = sphi 0, %s588
      %s606 = sphi 0, %s606
      %s608 = sphi 0, %s606
      %s609 = sphi 0, %s608
      %s623 = sphi 0, %s609
      %s627 = sphi 0, %s627
      %s629 = sphi 0, %s627
      %s630 = sphi 0, %s629
      %s644 = sphi 0, %s630
      %s648 = sphi 0, %s648
      %s650 = sphi 0, %s648
      %s651 = sphi 0, %s650
      %s665 = sphi 0, %s651
      %s669 = sphi 0, %s669
      %s671 = sphi 0, %s669
      %s672 = sphi 0, %s671
      %s686 = sphi 0, %s672
      %s690 = sphi 0, %s690
      %s692 = sphi 0, %s690
      %s693 = sphi 0, %s692
      %s707 = sphi 0, %s693
      %s711 = sphi 0, %s711
      %s713 = sphi 0, %s711
      %s714 = sphi 0, %s713
      %s728 = sphi 0, %s714
    $region4: #{bert_classifier_forward.1} parent=1 // loop_header_branch
      %38 = sbr.rel (%p36) target = $region8
    $region5: #{bert_classifier_forward.1} parent=1 // loop_body
      %s40 = ssub.s32 %s35, 1
      %s41 = ssub.s32 %s35, 2
      %s42 = sadd.s32 %s35, 1
      %s44 = sadd.s32 %s43, 1
      %p47 = scmp.eq.s32.totalorder %s35, 1
      %p48 = scmp.ne.s32.totalorder %s43, %s45
      %p49 = scmp.eq.s32.totalorder %s35, 0
      %p50 = por %p48, %p49
      %p51 = scmp.ne.s32.totalorder %s43, %s45
      %p52 = scmp.eq.s32.totalorder %s40, 1
      %p53 = por %p51, %p52
      %p54 = scmp.ne.s32.totalorder %s45, %s46
      %p55 = scmp.eq.s32.totalorder %s40, 0
      %p56 = por %p54, %p55
      %p57 = scmp.ne.s32.totalorder %s45, %s46
      %p58 = scmp.eq.s32.totalorder %s41, 1
      %p59 = por %p57, %p58
      %p61 = scmp.ne.s32.totalorder %s46, %s60
      %p62 = scmp.eq.s32.totalorder %s41, 0
      %p63 = por %p61, %p62
      %s65 = sadd.s32 %s64, 1
      %p68 = scmp.eq.s32.totalorder %s35, 1
      %p69 = scmp.ne.s32.totalorder %s64, %s66
      %p70 = scmp.eq.s32.totalorder %s35, 0
      %p71 = por %p69, %p70
      %p72 = scmp.ne.s32.totalorder %s64, %s66
      %p73 = scmp.eq.s32.totalorder %s40, 1
      %p74 = por %p72, %p73
      %p75 = scmp.ne.s32.totalorder %s66, %s67
      %p76 = scmp.eq.s32.totalorder %s40, 0
      %p77 = por %p75, %p76
      %p78 = scmp.ne.s32.totalorder %s66, %s67
      %p79 = scmp.eq.s32.totalorder %s41, 1
      %p80 = por %p78, %p79
      %p82 = scmp.ne.s32.totalorder %s67, %s81
      %p83 = scmp.eq.s32.totalorder %s41, 0
      %p84 = por %p82, %p83
      %s86 = sadd.s32 %s85, 1
      %p89 = scmp.eq.s32.totalorder %s35, 1
      %p90 = scmp.ne.s32.totalorder %s85, %s87
      %p91 = scmp.eq.s32.totalorder %s35, 0
      %p92 = por %p90, %p91
      %p93 = scmp.ne.s32.totalorder %s85, %s87
      %p94 = scmp.eq.s32.totalorder %s40, 1
      %p95 = por %p93, %p94
      %p96 = scmp.ne.s32.totalorder %s87, %s88
      %p97 = scmp.eq.s32.totalorder %s40, 0
      %p98 = por %p96, %p97
      %p99 = scmp.ne.s32.totalorder %s87, %s88
      %p100 = scmp.eq.s32.totalorder %s41, 1
      %p101 = por %p99, %p100
      %p103 = scmp.ne.s32.totalorder %s88, %s102
      %p104 = scmp.eq.s32.totalorder %s41, 0
      %p105 = por %p103, %p104
      %s107 = sadd.s32 %s106, 1
      %p110 = scmp.eq.s32.totalorder %s35, 1
      %p111 = scmp.ne.s32.totalorder %s106, %s108
      %p112 = scmp.eq.s32.totalorder %s35, 0
      %p113 = por %p111, %p112
      %p114 = scmp.ne.s32.totalorder %s106, %s108
      %p115 = scmp.eq.s32.totalorder %s40, 1
      %p116 = por %p114, %p115
      %p117 = scmp.ne.s32.totalorder %s108, %s109
      %p118 = scmp.eq.s32.totalorder %s40, 0
      %p119 = por %p117, %p118
      %p120 = scmp.ne.s32.totalorder %s108, %s109
      %p121 = scmp.eq.s32.totalorder %s41, 1
      %p122 = por %p120, %p121
      %p124 = scmp.ne.s32.totalorder %s109, %s123
      %p125 = scmp.eq.s32.totalorder %s41, 0
      %p126 = por %p124, %p125
      %s127 = ssub.s32 %s35, %s42
      %p128 = scmp.eq.s32.totalorder %s127, 0
      %s130 = sadd.s32 %s129, 1
      %s131 = scalar_select %p128, %s129, %s130
      %p134 = pneg %p128
      %p135 = scmp.eq.s32.totalorder %s35, 1
      %p136 = por %p134, %p135
      %p137 = scmp.ne.s32.totalorder %s129, %s132
      %p138 = scmp.eq.s32.totalorder %s35, 0
      %p139 = por %p137, %p138
      %p140 = scmp.ne.s32.totalorder %s129, %s132
      %p141 = scmp.eq.s32.totalorder %s40, 1
      %p142 = por %p140, %p141
      %p143 = scmp.ne.s32.totalorder %s132, %s133
      %p144 = scmp.eq.s32.totalorder %s40, 0
      %p145 = por %p143, %p144
      %p146 = scmp.ne.s32.totalorder %s132, %s133
      %p147 = scmp.eq.s32.totalorder %s41, 1
      %p148 = por %p146, %p147
      %p150 = scmp.ne.s32.totalorder %s133, %s149
      %p151 = scmp.eq.s32.totalorder %s41, 0
      %p152 = por %p150, %p151
      %s153 = ssub.s32 %s35, %s42
      %p154 = scmp.eq.s32.totalorder %s153, 0
      %s156 = sadd.s32 %s155, 1
      %s157 = scalar_select %p154, %s155, %s156
      %p160 = pneg %p154
      %p161 = scmp.eq.s32.totalorder %s35, 1
      %p162 = por %p160, %p161
      %p163 = scmp.ne.s32.totalorder %s155, %s158
      %p164 = scmp.eq.s32.totalorder %s35, 0
      %p165 = por %p163, %p164
      %p166 = scmp.ne.s32.totalorder %s155, %s158
      %p167 = scmp.eq.s32.totalorder %s40, 1
      %p168 = por %p166, %p167
      %p169 = scmp.ne.s32.totalorder %s158, %s159
      %p170 = scmp.eq.s32.totalorder %s40, 0
      %p171 = por %p169, %p170
      %p172 = scmp.ne.s32.totalorder %s158, %s159
      %p173 = scmp.eq.s32.totalorder %s41, 1
      %p174 = por %p172, %p173
      %p176 = scmp.ne.s32.totalorder %s159, %s175
      %p177 = scmp.eq.s32.totalorder %s41, 0
      %p178 = por %p176, %p177
      %s179 = ssub.s32 %s35, %s42
      %p180 = scmp.eq.s32.totalorder %s179, 0
      %s182 = sadd.s32 %s181, 1
      %s183 = scalar_select %p180, %s181, %s182
      %p186 = pneg %p180
      %p187 = scmp.eq.s32.totalorder %s35, 1
      %p188 = por %p186, %p187
      %p189 = scmp.ne.s32.totalorder %s181, %s184
      %p190 = scmp.eq.s32.totalorder %s35, 0
      %p191 = por %p189, %p190
      %p192 = scmp.ne.s32.totalorder %s181, %s184
      %p193 = scmp.eq.s32.totalorder %s40, 1
      %p194 = por %p192, %p193
      %p195 = scmp.ne.s32.totalorder %s184, %s185
      %p196 = scmp.eq.s32.totalorder %s40, 0
      %p197 = por %p195, %p196
      %p198 = scmp.ne.s32.totalorder %s184, %s185
      %p199 = scmp.eq.s32.totalorder %s41, 1
      %p200 = por %p198, %p199
      %p202 = scmp.ne.s32.totalorder %s185, %s201
      %p203 = scmp.eq.s32.totalorder %s41, 0
      %p204 = por %p202, %p203
      %s205 = ssub.s32 %s35, %s42
      %p206 = scmp.eq.s32.totalorder %s205, 0
      %s208 = sadd.s32 %s207, 1
      %s209 = scalar_select %p206, %s207, %s208
      %p212 = pneg %p206
      %p213 = scmp.eq.s32.totalorder %s35, 1
      %p214 = por %p212, %p213
      %p215 = scmp.ne.s32.totalorder %s207, %s210
      %p216 = scmp.eq.s32.totalorder %s35, 0
      %p217 = por %p215, %p216
      %p218 = scmp.ne.s32.totalorder %s207, %s210
      %p219 = scmp.eq.s32.totalorder %s40, 1
      %p220 = por %p218, %p219
      %p221 = scmp.ne.s32.totalorder %s210, %s211
      %p222 = scmp.eq.s32.totalorder %s40, 0
      %p223 = por %p221, %p222
      %p224 = scmp.ne.s32.totalorder %s210, %s211
      %p225 = scmp.eq.s32.totalorder %s41, 1
      %p226 = por %p224, %p225
      %p228 = scmp.ne.s32.totalorder %s211, %s227
      %p229 = scmp.eq.s32.totalorder %s41, 0
      %p230 = por %p228, %p229
      %s231 = ssub.s32 %s35, %s42
      %p232 = scmp.eq.s32.totalorder %s231, 0
      %s234 = sadd.s32 %s233, 1
      %s235 = scalar_select %p232, %s233, %s234
      %p238 = pneg %p232
      %p239 = scmp.eq.s32.totalorder %s35, 1
      %p240 = por %p238, %p239
      %p241 = scmp.ne.s32.totalorder %s233, %s236
      %p242 = scmp.eq.s32.totalorder %s35, 0
      %p243 = por %p241, %p242
      %p244 = scmp.ne.s32.totalorder %s233, %s236
      %p245 = scmp.eq.s32.totalorder %s40, 1
      %p246 = por %p244, %p245
      %p247 = scmp.ne.s32.totalorder %s236, %s237
      %p248 = scmp.eq.s32.totalorder %s40, 0
      %p249 = por %p247, %p248
      %p250 = scmp.ne.s32.totalorder %s236, %s237
      %p251 = scmp.eq.s32.totalorder %s41, 1
      %p252 = por %p250, %p251
      %p254 = scmp.ne.s32.totalorder %s237, %s253
      %p255 = scmp.eq.s32.totalorder %s41, 0
      %p256 = por %p254, %p255
      %s257 = ssub.s32 %s35, %s42
      %p258 = scmp.eq.s32.totalorder %s257, 0
      %s260 = sadd.s32 %s259, 1
      %s261 = scalar_select %p258, %s259, %s260
      %p264 = pneg %p258
      %p265 = scmp.eq.s32.totalorder %s35, 1
      %p266 = por %p264, %p265
      %p267 = scmp.ne.s32.totalorder %s259, %s262
      %p268 = scmp.eq.s32.totalorder %s35, 0
      %p269 = por %p267, %p268
      %p270 = scmp.ne.s32.totalorder %s259, %s262
      %p271 = scmp.eq.s32.totalorder %s40, 1
      %p272 = por %p270, %p271
      %p273 = scmp.ne.s32.totalorder %s262, %s263
      %p274 = scmp.eq.s32.totalorder %s40, 0
      %p275 = por %p273, %p274
      %p276 = scmp.ne.s32.totalorder %s262, %s263
      %p277 = scmp.eq.s32.totalorder %s41, 1
      %p278 = por %p276, %p277
      %p280 = scmp.ne.s32.totalorder %s263, %s279
      %p281 = scmp.eq.s32.totalorder %s41, 0
      %p282 = por %p280, %p281
      %s283 = ssub.s32 %s35, %s42
      %p284 = scmp.eq.s32.totalorder %s283, 0
      %s286 = sadd.s32 %s285, 1
      %s287 = scalar_select %p284, %s285, %s286
      %p290 = pneg %p284
      %p291 = scmp.eq.s32.totalorder %s35, 1
      %p292 = por %p290, %p291
      %p293 = scmp.ne.s32.totalorder %s285, %s288
      %p294 = scmp.eq.s32.totalorder %s35, 0
      %p295 = por %p293, %p294
      %p296 = scmp.ne.s32.totalorder %s285, %s288
      %p297 = scmp.eq.s32.totalorder %s40, 1
      %p298 = por %p296, %p297
      %p299 = scmp.ne.s32.totalorder %s288, %s289
      %p300 = scmp.eq.s32.totalorder %s40, 0
      %p301 = por %p299, %p300
      %p302 = scmp.ne.s32.totalorder %s288, %s289
      %p303 = scmp.eq.s32.totalorder %s41, 1
      %p304 = por %p302, %p303
      %p306 = scmp.ne.s32.totalorder %s289, %s305
      %p307 = scmp.eq.s32.totalorder %s41, 0
      %p308 = por %p306, %p307
      %s309 = ssub.s32 %s35, %s42
      %p310 = scmp.eq.s32.totalorder %s309, 0
      %s312 = sadd.s32 %s311, 1
      %s313 = scalar_select %p310, %s311, %s312
      %p316 = pneg %p310
      %p317 = scmp.eq.s32.totalorder %s35, 1
      %p318 = por %p316, %p317
      %p319 = scmp.ne.s32.totalorder %s311, %s314
      %p320 = scmp.eq.s32.totalorder %s35, 0
      %p321 = por %p319, %p320
      %p322 = scmp.ne.s32.totalorder %s311, %s314
      %p323 = scmp.eq.s32.totalorder %s40, 1
      %p324 = por %p322, %p323
      %p325 = scmp.ne.s32.totalorder %s314, %s315
      %p326 = scmp.eq.s32.totalorder %s40, 0
      %p327 = por %p325, %p326
      %p328 = scmp.ne.s32.totalorder %s314, %s315
      %p329 = scmp.eq.s32.totalorder %s41, 1
      %p330 = por %p328, %p329
      %p332 = scmp.ne.s32.totalorder %s315, %s331
      %p333 = scmp.eq.s32.totalorder %s41, 0
      %p334 = por %p332, %p333
      %s335 = ssub.s32 %s35, %s42
      %p336 = scmp.eq.s32.totalorder %s335, 0
      %s338 = sadd.s32 %s337, 1
      %s339 = scalar_select %p336, %s337, %s338
      %p342 = pneg %p336
      %p343 = scmp.eq.s32.totalorder %s35, 1
      %p344 = por %p342, %p343
      %p345 = scmp.ne.s32.totalorder %s337, %s340
      %p346 = scmp.eq.s32.totalorder %s35, 0
      %p347 = por %p345, %p346
      %p348 = scmp.ne.s32.totalorder %s337, %s340
      %p349 = scmp.eq.s32.totalorder %s40, 1
      %p350 = por %p348, %p349
      %p351 = scmp.ne.s32.totalorder %s340, %s341
      %p352 = scmp.eq.s32.totalorder %s40, 0
      %p353 = por %p351, %p352
      %p354 = scmp.ne.s32.totalorder %s340, %s341
      %p355 = scmp.eq.s32.totalorder %s41, 1
      %p356 = por %p354, %p355
      %p358 = scmp.ne.s32.totalorder %s341, %s357
      %p359 = scmp.eq.s32.totalorder %s41, 0
      %p360 = por %p358, %p359
      %s361 = ssub.s32 %s35, %s42
      %p362 = scmp.eq.s32.totalorder %s361, 0
      %s364 = sadd.s32 %s363, 1
      %s365 = scalar_select %p362, %s363, %s364
      %p368 = pneg %p362
      %p369 = scmp.eq.s32.totalorder %s35, 1
      %p370 = por %p368, %p369
      %p371 = scmp.ne.s32.totalorder %s363, %s366
      %p372 = scmp.eq.s32.totalorder %s35, 0
      %p373 = por %p371, %p372
      %p374 = scmp.ne.s32.totalorder %s363, %s366
      %p375 = scmp.eq.s32.totalorder %s40, 1
      %p376 = por %p374, %p375
      %p377 = scmp.ne.s32.totalorder %s366, %s367
      %p378 = scmp.eq.s32.totalorder %s40, 0
      %p379 = por %p377, %p378
      %p380 = scmp.ne.s32.totalorder %s366, %s367
      %p381 = scmp.eq.s32.totalorder %s41, 1
      %p382 = por %p380, %p381
      %p384 = scmp.ne.s32.totalorder %s367, %s383
      %p385 = scmp.eq.s32.totalorder %s41, 0
      %p386 = por %p384, %p385
      %s387 = ssub.s32 %s35, %s42
      %p388 = scmp.eq.s32.totalorder %s387, 0
      %s390 = sadd.s32 %s389, 1
      %s391 = scalar_select %p388, %s389, %s390
      %p394 = pneg %p388
      %p395 = scmp.eq.s32.totalorder %s35, 1
      %p396 = por %p394, %p395
      %p397 = scmp.ne.s32.totalorder %s389, %s392
      %p398 = scmp.eq.s32.totalorder %s35, 0
      %p399 = por %p397, %p398
      %p400 = scmp.ne.s32.totalorder %s389, %s392
      %p401 = scmp.eq.s32.totalorder %s40, 1
      %p402 = por %p400, %p401
      %p403 = scmp.ne.s32.totalorder %s392, %s393
      %p404 = scmp.eq.s32.totalorder %s40, 0
      %p405 = por %p403, %p404
      %p406 = scmp.ne.s32.totalorder %s392, %s393
      %p407 = scmp.eq.s32.totalorder %s41, 1
      %p408 = por %p406, %p407
      %p410 = scmp.ne.s32.totalorder %s393, %s409
      %p411 = scmp.eq.s32.totalorder %s41, 0
      %p412 = por %p410, %p411
      %s413 = ssub.s32 %s35, %s42
      %p414 = scmp.eq.s32.totalorder %s413, 0
      %s416 = sadd.s32 %s415, 1
      %s417 = scalar_select %p414, %s415, %s416
      %p420 = pneg %p414
      %p421 = scmp.eq.s32.totalorder %s35, 1
      %p422 = por %p420, %p421
      %p423 = scmp.ne.s32.totalorder %s415, %s418
      %p424 = scmp.eq.s32.totalorder %s35, 0
      %p425 = por %p423, %p424
      %p426 = scmp.ne.s32.totalorder %s415, %s418
      %p427 = scmp.eq.s32.totalorder %s40, 1
      %p428 = por %p426, %p427
      %p429 = scmp.ne.s32.totalorder %s418, %s419
      %p430 = scmp.eq.s32.totalorder %s40, 0
      %p431 = por %p429, %p430
      %p432 = scmp.ne.s32.totalorder %s418, %s419
      %p433 = scmp.eq.s32.totalorder %s41, 1
      %p434 = por %p432, %p433
      %p436 = scmp.ne.s32.totalorder %s419, %s435
      %p437 = scmp.eq.s32.totalorder %s41, 0
      %p438 = por %p436, %p437
      %s439 = ssub.s32 %s35, %s42
      %p440 = scmp.eq.s32.totalorder %s439, 0
      %s442 = sadd.s32 %s441, 1
      %s443 = scalar_select %p440, %s441, %s442
      %p446 = pneg %p440
      %p447 = scmp.eq.s32.totalorder %s35, 1
      %p448 = por %p446, %p447
      %p449 = scmp.ne.s32.totalorder %s441, %s444
      %p450 = scmp.eq.s32.totalorder %s35, 0
      %p451 = por %p449, %p450
      %p452 = scmp.ne.s32.totalorder %s441, %s444
      %p453 = scmp.eq.s32.totalorder %s40, 1
      %p454 = por %p452, %p453
      %p455 = scmp.ne.s32.totalorder %s444, %s445
      %p456 = scmp.eq.s32.totalorder %s40, 0
      %p457 = por %p455, %p456
      %p458 = scmp.ne.s32.totalorder %s444, %s445
      %p459 = scmp.eq.s32.totalorder %s41, 1
      %p460 = por %p458, %p459
      %p462 = scmp.ne.s32.totalorder %s445, %s461
      %p463 = scmp.eq.s32.totalorder %s41, 0
      %p464 = por %p462, %p463
      %s465 = ssub.s32 %s35, %s42
      %p466 = scmp.eq.s32.totalorder %s465, 0
      %s468 = sadd.s32 %s467, 1
      %s469 = scalar_select %p466, %s467, %s468
      %p472 = pneg %p466
      %p473 = scmp.eq.s32.totalorder %s35, 1
      %p474 = por %p472, %p473
      %p475 = scmp.ne.s32.totalorder %s467, %s470
      %p476 = scmp.eq.s32.totalorder %s35, 0
      %p477 = por %p475, %p476
      %p478 = scmp.ne.s32.totalorder %s467, %s470
      %p479 = scmp.eq.s32.totalorder %s40, 1
      %p480 = por %p478, %p479
      %p481 = scmp.ne.s32.totalorder %s470, %s471
      %p482 = scmp.eq.s32.totalorder %s40, 0
      %p483 = por %p481, %p482
      %p484 = scmp.ne.s32.totalorder %s470, %s471
      %p485 = scmp.eq.s32.totalorder %s41, 1
      %p486 = por %p484, %p485
      %p488 = scmp.ne.s32.totalorder %s471, %s487
      %p489 = scmp.eq.s32.totalorder %s41, 0
      %p490 = por %p488, %p489
      %s491 = ssub.s32 %s35, %s42
      %p492 = scmp.eq.s32.totalorder %s491, 0
      %s494 = sadd.s32 %s493, 1
      %s495 = scalar_select %p492, %s493, %s494
      %p498 = pneg %p492
      %p499 = scmp.eq.s32.totalorder %s35, 1
      %p500 = por %p498, %p499
      %p501 = scmp.ne.s32.totalorder %s493, %s496
      %p502 = scmp.eq.s32.totalorder %s35, 0
      %p503 = por %p501, %p502
      %p504 = scmp.ne.s32.totalorder %s493, %s496
      %p505 = scmp.eq.s32.totalorder %s40, 1
      %p506 = por %p504, %p505
      %p507 = scmp.ne.s32.totalorder %s496, %s497
      %p508 = scmp.eq.s32.totalorder %s40, 0
      %p509 = por %p507, %p508
      %p510 = scmp.ne.s32.totalorder %s496, %s497
      %p511 = scmp.eq.s32.totalorder %s41, 1
      %p512 = por %p510, %p511
      %p514 = scmp.ne.s32.totalorder %s497, %s513
      %p515 = scmp.eq.s32.totalorder %s41, 0
      %p516 = por %p514, %p515
      %s517 = ssub.s32 %s35, %s42
      %p518 = scmp.eq.s32.totalorder %s517, 0
      %s520 = sadd.s32 %s519, 1
      %s521 = scalar_select %p518, %s519, %s520
      %p524 = pneg %p518
      %p525 = scmp.eq.s32.totalorder %s35, 1
      %p526 = por %p524, %p525
      %p527 = scmp.ne.s32.totalorder %s519, %s522
      %p528 = scmp.eq.s32.totalorder %s35, 0
      %p529 = por %p527, %p528
      %p530 = scmp.ne.s32.totalorder %s519, %s522
      %p531 = scmp.eq.s32.totalorder %s40, 1
      %p532 = por %p530, %p531
      %p533 = scmp.ne.s32.totalorder %s522, %s523
      %p534 = scmp.eq.s32.totalorder %s40, 0
      %p535 = por %p533, %p534
      %p536 = scmp.ne.s32.totalorder %s522, %s523
      %p537 = scmp.eq.s32.totalorder %s41, 1
      %p538 = por %p536, %p537
      %p540 = scmp.ne.s32.totalorder %s523, %s539
      %p541 = scmp.eq.s32.totalorder %s41, 0
      %p542 = por %p540, %p541
      %s544 = sadd.s32 %s543, 1
      %p547 = scmp.eq.s32.totalorder %s35, 1
      %p548 = scmp.ne.s32.totalorder %s543, %s545
      %p549 = scmp.eq.s32.totalorder %s35, 0
      %p550 = por %p548, %p549
      %p551 = scmp.ne.s32.totalorder %s543, %s545
      %p552 = scmp.eq.s32.totalorder %s40, 1
      %p553 = por %p551, %p552
      %p554 = scmp.ne.s32.totalorder %s545, %s546
      %p555 = scmp.eq.s32.totalorder %s40, 0
      %p556 = por %p554, %p555
      %p557 = scmp.ne.s32.totalorder %s545, %s546
      %p558 = scmp.eq.s32.totalorder %s41, 1
      %p559 = por %p557, %p558
      %p561 = scmp.ne.s32.totalorder %s546, %s560
      %p562 = scmp.eq.s32.totalorder %s41, 0
      %p563 = por %p561, %p562
      %s565 = sadd.s32 %s564, 1
      %p568 = scmp.eq.s32.totalorder %s35, 1
      %p569 = scmp.ne.s32.totalorder %s564, %s566
      %p570 = scmp.eq.s32.totalorder %s35, 0
      %p571 = por %p569, %p570
      %p572 = scmp.ne.s32.totalorder %s564, %s566
      %p573 = scmp.eq.s32.totalorder %s40, 1
      %p574 = por %p572, %p573
      %p575 = scmp.ne.s32.totalorder %s566, %s567
      %p576 = scmp.eq.s32.totalorder %s40, 0
      %p577 = por %p575, %p576
      %p578 = scmp.ne.s32.totalorder %s566, %s567
      %p579 = scmp.eq.s32.totalorder %s41, 1
      %p580 = por %p578, %p579
      %p582 = scmp.ne.s32.totalorder %s567, %s581
      %p583 = scmp.eq.s32.totalorder %s41, 0
      %p584 = por %p582, %p583
      %s586 = sadd.s32 %s585, 1
      %p589 = scmp.eq.s32.totalorder %s35, 1
      %p590 = scmp.ne.s32.totalorder %s585, %s587
      %p591 = scmp.eq.s32.totalorder %s35, 0
      %p592 = por %p590, %p591
      %p593 = scmp.ne.s32.totalorder %s585, %s587
      %p594 = scmp.eq.s32.totalorder %s40, 1
      %p595 = por %p593, %p594
      %p596 = scmp.ne.s32.totalorder %s587, %s588
      %p597 = scmp.eq.s32.totalorder %s40, 0
      %p598 = por %p596, %p597
      %p599 = scmp.ne.s32.totalorder %s587, %s588
      %p600 = scmp.eq.s32.totalorder %s41, 1
      %p601 = por %p599, %p600
      %p603 = scmp.ne.s32.totalorder %s588, %s602
      %p604 = scmp.eq.s32.totalorder %s41, 0
      %p605 = por %p603, %p604
      %s607 = sadd.s32 %s606, 1
      %p610 = scmp.eq.s32.totalorder %s35, 1
      %p611 = scmp.ne.s32.totalorder %s606, %s608
      %p612 = scmp.eq.s32.totalorder %s35, 0
      %p613 = por %p611, %p612
      %p614 = scmp.ne.s32.totalorder %s606, %s608
      %p615 = scmp.eq.s32.totalorder %s40, 1
      %p616 = por %p614, %p615
      %p617 = scmp.ne.s32.totalorder %s608, %s609
      %p618 = scmp.eq.s32.totalorder %s40, 0
      %p619 = por %p617, %p618
      %p620 = scmp.ne.s32.totalorder %s608, %s609
      %p621 = scmp.eq.s32.totalorder %s41, 1
      %p622 = por %p620, %p621
      %p624 = scmp.ne.s32.totalorder %s609, %s623
      %p625 = scmp.eq.s32.totalorder %s41, 0
      %p626 = por %p624, %p625
      %s628 = sadd.s32 %s627, 1
      %p631 = scmp.eq.s32.totalorder %s35, 1
      %p632 = scmp.ne.s32.totalorder %s627, %s629
      %p633 = scmp.eq.s32.totalorder %s35, 0
      %p634 = por %p632, %p633
      %p635 = scmp.ne.s32.totalorder %s627, %s629
      %p636 = scmp.eq.s32.totalorder %s40, 1
      %p637 = por %p635, %p636
      %p638 = scmp.ne.s32.totalorder %s629, %s630
      %p639 = scmp.eq.s32.totalorder %s40, 0
      %p640 = por %p638, %p639
      %p641 = scmp.ne.s32.totalorder %s629, %s630
      %p642 = scmp.eq.s32.totalorder %s41, 1
      %p643 = por %p641, %p642
      %p645 = scmp.ne.s32.totalorder %s630, %s644
      %p646 = scmp.eq.s32.totalorder %s41, 0
      %p647 = por %p645, %p646
      %s649 = sadd.s32 %s648, 1
      %p652 = scmp.eq.s32.totalorder %s35, 1
      %p653 = scmp.ne.s32.totalorder %s648, %s650
      %p654 = scmp.eq.s32.totalorder %s35, 0
      %p655 = por %p653, %p654
      %p656 = scmp.ne.s32.totalorder %s648, %s650
      %p657 = scmp.eq.s32.totalorder %s40, 1
      %p658 = por %p656, %p657
      %p659 = scmp.ne.s32.totalorder %s650, %s651
      %p660 = scmp.eq.s32.totalorder %s40, 0
      %p661 = por %p659, %p660
      %p662 = scmp.ne.s32.totalorder %s650, %s651
      %p663 = scmp.eq.s32.totalorder %s41, 1
      %p664 = por %p662, %p663
      %p666 = scmp.ne.s32.totalorder %s651, %s665
      %p667 = scmp.eq.s32.totalorder %s41, 0
      %p668 = por %p666, %p667
      %s670 = sadd.s32 %s669, 1
      %p673 = scmp.eq.s32.totalorder %s35, 1
      %p674 = scmp.ne.s32.totalorder %s669, %s671
      %p675 = scmp.eq.s32.totalorder %s35, 0
      %p676 = por %p674, %p675
      %p677 = scmp.ne.s32.totalorder %s669, %s671
      %p678 = scmp.eq.s32.totalorder %s40, 1
      %p679 = por %p677, %p678
      %p680 = scmp.ne.s32.totalorder %s671, %s672
      %p681 = scmp.eq.s32.totalorder %s40, 0
      %p682 = por %p680, %p681
      %p683 = scmp.ne.s32.totalorder %s671, %s672
      %p684 = scmp.eq.s32.totalorder %s41, 1
      %p685 = por %p683, %p684
      %p687 = scmp.ne.s32.totalorder %s672, %s686
      %p688 = scmp.eq.s32.totalorder %s41, 0
      %p689 = por %p687, %p688
      %s691 = sadd.s32 %s690, 1
      %p694 = scmp.eq.s32.totalorder %s35, 1
      %p695 = scmp.ne.s32.totalorder %s690, %s692
      %p696 = scmp.eq.s32.totalorder %s35, 0
      %p697 = por %p695, %p696
      %p698 = scmp.ne.s32.totalorder %s690, %s692
      %p699 = scmp.eq.s32.totalorder %s40, 1
      %p700 = por %p698, %p699
      %p701 = scmp.ne.s32.totalorder %s692, %s693
      %p702 = scmp.eq.s32.totalorder %s40, 0
      %p703 = por %p701, %p702
      %p704 = scmp.ne.s32.totalorder %s692, %s693
      %p705 = scmp.eq.s32.totalorder %s41, 1
      %p706 = por %p704, %p705
      %p708 = scmp.ne.s32.totalorder %s693, %s707
      %p709 = scmp.eq.s32.totalorder %s41, 0
      %p710 = por %p708, %p709
      %s712 = sadd.s32 %s711, 1
      %p715 = scmp.eq.s32.totalorder %s35, 1
      %p716 = scmp.ne.s32.totalorder %s711, %s713
      %p717 = scmp.eq.s32.totalorder %s35, 0
      %p718 = por %p716, %p717
      %p719 = scmp.ne.s32.totalorder %s711, %s713
      %p720 = scmp.eq.s32.totalorder %s40, 1
      %p721 = por %p719, %p720
      %p722 = scmp.ne.s32.totalorder %s713, %s714
      %p723 = scmp.eq.s32.totalorder %s40, 0
      %p724 = por %p722, %p723
      %p725 = scmp.ne.s32.totalorder %s713, %s714
      %p726 = scmp.eq.s32.totalorder %s41, 1
      %p727 = por %p725, %p726
      %p729 = scmp.ne.s32.totalorder %s714, %s728
      %p730 = scmp.eq.s32.totalorder %s41, 0
      %p731 = por %p729, %p730
      %p732 = scmp.le.s32.totalorder 1, %s35
      %p733 = scmp.lt.s32.totalorder %s35, 3
      %p734 = pnand %p732, %p733
      %p735 = pneg %p734
      // Predicated region
      $region9: #{bert_classifier_forward.1} parent=5 // pred_check
        _
      $region10: #{bert_classifier_forward.1} parent=5 // pred_check_branch
        %737 = sbr.rel (%p734) target = $region12
      $region11: #{bert_classifier_forward.1} parent=5 // pred_region
        %s738 = ssub.s32 %s35, 1
        // Predicated region
        $region13: #{bert_classifier_forward.1} parent=11 // pred_check
          %p739 = pneg %p56
        $region14: #{bert_classifier_forward.1} parent=11 // pred_check_branch
          %741 = sbr.rel (%p739) target = $region16
        $region15: #{bert_classifier_forward.1} parent=11 // pred_region
          _
        $region16: #{bert_classifier_forward.1} parent=11 // pred_fallthru
          _
        // Predicated region
        $region17: #{bert_classifier_forward.1} parent=11 // pred_check
          %p742 = pneg %p77
        $region18: #{bert_classifier_forward.1} parent=11 // pred_check_branch
          %744 = sbr.rel (%p742) target = $region20
        $region19: #{bert_classifier_forward.1} parent=11 // pred_region
          _
        $region20: #{bert_classifier_forward.1} parent=11 // pred_fallthru
          _
        // Predicated region
        $region21: #{bert_classifier_forward.1} parent=11 // pred_check
          %p745 = pneg %p98
        $region22: #{bert_classifier_forward.1} parent=11 // pred_check_branch
          %747 = sbr.rel (%p745) target = $region24
        $region23: #{bert_classifier_forward.1} parent=11 // pred_region
          _
        $region24: #{bert_classifier_forward.1} parent=11 // pred_fallthru
          _
        // Predicated region
        $region25: #{bert_classifier_forward.1} parent=11 // pred_check
          %p748 = pneg %p119
        $region26: #{bert_classifier_forward.1} parent=11 // pred_check_branch
          %750 = sbr.rel (%p748) target = $region28
        $region27: #{bert_classifier_forward.1} parent=11 // pred_region
          _
        $region28: #{bert_classifier_forward.1} parent=11 // pred_fallthru
          _
        // Predicated region
        $region29: #{bert_classifier_forward.1} parent=11 // pred_check
          %p751 = pneg %p556
        $region30: #{bert_classifier_forward.1} parent=11 // pred_check_branch
          %753 = sbr.rel (%p751) target = $region32
        $region31: #{bert_classifier_forward.1} parent=11 // pred_region
          _
        $region32: #{bert_classifier_forward.1} parent=11 // pred_fallthru
          _
        // Predicated region
        $region33: #{bert_classifier_forward.1} parent=11 // pred_check
          %p754 = pneg %p577
        $region34: #{bert_classifier_forward.1} parent=11 // pred_check_branch
          %756 = sbr.rel (%p754) target = $region36
        $region35: #{bert_classifier_forward.1} parent=11 // pred_region
          _
        $region36: #{bert_classifier_forward.1} parent=11 // pred_fallthru
          _
        // Predicated region
        $region37: #{bert_classifier_forward.1} parent=11 // pred_check
          %p757 = pneg %p598
        $region38: #{bert_classifier_forward.1} parent=11 // pred_check_branch
          %759 = sbr.rel (%p757) target = $region40
        $region39: #{bert_classifier_forward.1} parent=11 // pred_region
          _
        $region40: #{bert_classifier_forward.1} parent=11 // pred_fallthru
          _
        // Predicated region
        $region41: #{bert_classifier_forward.1} parent=11 // pred_check
          %p760 = pneg %p619
        $region42: #{bert_classifier_forward.1} parent=11 // pred_check_branch
          %762 = sbr.rel (%p760) target = $region44
        $region43: #{bert_classifier_forward.1} parent=11 // pred_region
          _
        $region44: #{bert_classifier_forward.1} parent=11 // pred_fallthru
          _
        // Predicated region
        $region45: #{bert_classifier_forward.1} parent=11 // pred_check
          %p763 = pneg %p640
        $region46: #{bert_classifier_forward.1} parent=11 // pred_check_branch
          %765 = sbr.rel (%p763) target = $region48
        $region47: #{bert_classifier_forward.1} parent=11 // pred_region
          _
        $region48: #{bert_classifier_forward.1} parent=11 // pred_fallthru
          _
        // Predicated region
        $region49: #{bert_classifier_forward.1} parent=11 // pred_check
          %p766 = pneg %p661
        $region50: #{bert_classifier_forward.1} parent=11 // pred_check_branch
          %768 = sbr.rel (%p766) target = $region52
        $region51: #{bert_classifier_forward.1} parent=11 // pred_region
          _
        $region52: #{bert_classifier_forward.1} parent=11 // pred_fallthru
          _
        // Predicated region
        $region53: #{bert_classifier_forward.1} parent=11 // pred_check
          %p769 = pneg %p682
        $region54: #{bert_classifier_forward.1} parent=11 // pred_check_branch
          %771 = sbr.rel (%p769) target = $region56
        $region55: #{bert_classifier_forward.1} parent=11 // pred_region
          _
        $region56: #{bert_classifier_forward.1} parent=11 // pred_fallthru
          _
        // Predicated region
        $region57: #{bert_classifier_forward.1} parent=11 // pred_check
          %p772 = pneg %p703
        $region58: #{bert_classifier_forward.1} parent=11 // pred_check_branch
          %774 = sbr.rel (%p772) target = $region60
        $region59: #{bert_classifier_forward.1} parent=11 // pred_region
          _
        $region60: #{bert_classifier_forward.1} parent=11 // pred_fallthru
          _
      $region12: #{bert_classifier_forward.1} parent=5 // pred_fallthru
        _
      %p775 = scmp.lt.s32.totalorder %s35, 2
      // Predicated region
      $region61: #{bert_classifier_forward.1} parent=5 // pred_check
        %p776 = pneg %p775
      $region62: #{bert_classifier_forward.1} parent=5 // pred_check_branch
        %778 = sbr.rel (%p776) target = $region64
      $region63: #{bert_classifier_forward.1} parent=5 // pred_region
        // Predicated region
        $region65: #{bert_classifier_forward.1} parent=63 // pred_check
          %p779 = pneg %p139
        $region66: #{bert_classifier_forward.1} parent=63 // pred_check_branch
          %781 = sbr.rel (%p779) target = $region68
        $region67: #{bert_classifier_forward.1} parent=63 // pred_region
          %p782 = scmp.lt.s32.totalorder %s35, 1
          %s783 = scalar_select %p782, %s35, 1
          %s784 = smul.addr %s783, 16
          %s785 = smul.addr %s784, 4
          %s786 = scalar_lea.vmem %s4, %s785
        $region68: #{bert_classifier_forward.1} parent=63 // pred_fallthru
          _
        // Predicated region
        $region69: #{bert_classifier_forward.1} parent=63 // pred_check
          %p787 = pneg %p165
        $region70: #{bert_classifier_forward.1} parent=63 // pred_check_branch
          %789 = sbr.rel (%p787) target = $region72
        $region71: #{bert_classifier_forward.1} parent=63 // pred_region
          %p790 = scmp.lt.s32.totalorder %s35, 1
          %s791 = scalar_select %p790, %s35, 1
          %s792 = smul.addr %s791, 4
          %s793 = scalar_lea.vmem %s5, %s792
        $region72: #{bert_classifier_forward.1} parent=63 // pred_fallthru
          _
        // Predicated region
        $region73: #{bert_classifier_forward.1} parent=63 // pred_check
          %p794 = pneg %p191
        $region74: #{bert_classifier_forward.1} parent=63 // pred_check_branch
          %796 = sbr.rel (%p794) target = $region76
        $region75: #{bert_classifier_forward.1} parent=63 // pred_region
          %p797 = scmp.lt.s32.totalorder %s35, 1
          %s798 = scalar_select %p797, %s35, 1
          %s799 = smul.addr %s798, 16
          %s800 = smul.addr %s799, 4
          %s801 = scalar_lea.vmem %s6, %s800
        $region76: #{bert_classifier_forward.1} parent=63 // pred_fallthru
          _
        // Predicated region
        $region77: #{bert_classifier_forward.1} parent=63 // pred_check
          %p802 = pneg %p217
        $region78: #{bert_classifier_forward.1} parent=63 // pred_check_branch
          %804 = sbr.rel (%p802) target = $region80
        $region79: #{bert_classifier_forward.1} parent=63 // pred_region
          %p805 = scmp.lt.s32.totalorder %s35, 1
          %s806 = scalar_select %p805, %s35, 1
          %s807 = smul.addr %s806, 4
          %s808 = scalar_lea.vmem %s7, %s807
        $region80: #{bert_classifier_forward.1} parent=63 // pred_fallthru
          _
        // Predicated region
        $region81: #{bert_classifier_forward.1} parent=63 // pred_check
          %p809 = pneg %p243
        $region82: #{bert_classifier_forward.1} parent=63 // pred_check_branch
          %811 = sbr.rel (%p809) target = $region84
        $region83: #{bert_classifier_forward.1} parent=63 // pred_region
          %p812 = scmp.lt.s32.totalorder %s35, 1
          %s813 = scalar_select %p812, %s35, 1
          %s814 = smul.addr %s813, 16
          %s815 = smul.addr %s814, 4
          %s816 = scalar_lea.vmem %s8, %s815
        $region84: #{bert_classifier_forward.1} parent=63 // pred_fallthru
          _
        // Predicated region
        $region85: #{bert_classifier_forward.1} parent=63 // pred_check
          %p817 = pneg %p269
        $region86: #{bert_classifier_forward.1} parent=63 // pred_check_branch
          %819 = sbr.rel (%p817) target = $region88
        $region87: #{bert_classifier_forward.1} parent=63 // pred_region
          %p820 = scmp.lt.s32.totalorder %s35, 1
          %s821 = scalar_select %p820, %s35, 1
          %s822 = smul.addr %s821, 4
          %s823 = scalar_lea.vmem %s9, %s822
        $region88: #{bert_classifier_forward.1} parent=63 // pred_fallthru
          _
        // Predicated region
        $region89: #{bert_classifier_forward.1} parent=63 // pred_check
          %p824 = pneg %p295
        $region90: #{bert_classifier_forward.1} parent=63 // pred_check_branch
          %826 = sbr.rel (%p824) target = $region92
        $region91: #{bert_classifier_forward.1} parent=63 // pred_region
          %p827 = scmp.lt.s32.totalorder %s35, 1
          %s828 = scalar_select %p827, %s35, 1
          %s829 = smul.addr %s828, 4
          %s830 = smul.addr %s829, 4
          %s831 = scalar_lea.vmem %s10, %s830
        $region92: #{bert_classifier_forward.1} parent=63 // pred_fallthru
          _
        // Predicated region
        $region93: #{bert_classifier_forward.1} parent=63 // pred_check
          %p832 = pneg %p321
        $region94: #{bert_classifier_forward.1} parent=63 // pred_check_branch
          %834 = sbr.rel (%p832) target = $region96
        $region95: #{bert_classifier_forward.1} parent=63 // pred_region
          %p835 = scmp.lt.s32.totalorder %s35, 1
          %s836 = scalar_select %p835, %s35, 1
          %s837 = scalar_lea.vmem %s11, %s836
        $region96: #{bert_classifier_forward.1} parent=63 // pred_fallthru
          _
        // Predicated region
        $region97: #{bert_classifier_forward.1} parent=63 // pred_check
          %p838 = pneg %p347
        $region98: #{bert_classifier_forward.1} parent=63 // pred_check_branch
          %840 = sbr.rel (%p838) target = $region100
        $region99: #{bert_classifier_forward.1} parent=63 // pred_region
          %p841 = scmp.lt.s32.totalorder %s35, 1
          %s842 = scalar_select %p841, %s35, 1
          %s843 = scalar_lea.vmem %s12, %s842
        $region100: #{bert_classifier_forward.1} parent=63 // pred_fallthru
          _
        // Predicated region
        $region101: #{bert_classifier_forward.1} parent=63 // pred_check
          %p844 = pneg %p373
        $region102: #{bert_classifier_forward.1} parent=63 // pred_check_branch
          %846 = sbr.rel (%p844) target = $region104
        $region103: #{bert_classifier_forward.1} parent=63 // pred_region
          %p847 = scmp.lt.s32.totalorder %s35, 1
          %s848 = scalar_select %p847, %s35, 1
          %s849 = scalar_lea.vmem %s13, %s848
        $region104: #{bert_classifier_forward.1} parent=63 // pred_fallthru
          _
        // Predicated region
        $region105: #{bert_classifier_forward.1} parent=63 // pred_check
          %p850 = pneg %p399
        $region106: #{bert_classifier_forward.1} parent=63 // pred_check_branch
          %852 = sbr.rel (%p850) target = $region108
        $region107: #{bert_classifier_forward.1} parent=63 // pred_region
          %p853 = scmp.lt.s32.totalorder %s35, 1
          %s854 = scalar_select %p853, %s35, 1
          %s855 = smul.addr %s854, 4
          %s856 = smul.addr %s855, 4
          %s857 = scalar_lea.vmem %s14, %s856
        $region108: #{bert_classifier_forward.1} parent=63 // pred_fallthru
          _
        // Predicated region
        $region109: #{bert_classifier_forward.1} parent=63 // pred_check
          %p858 = pneg %p425
        $region110: #{bert_classifier_forward.1} parent=63 // pred_check_branch
          %860 = sbr.rel (%p858) target = $region112
        $region111: #{bert_classifier_forward.1} parent=63 // pred_region
          %p861 = scmp.lt.s32.totalorder %s35, 1
          %s862 = scalar_select %p861, %s35, 1
          %s863 = scalar_lea.vmem %s15, %s862
        $region112: #{bert_classifier_forward.1} parent=63 // pred_fallthru
          _
        // Predicated region
        $region113: #{bert_classifier_forward.1} parent=63 // pred_check
          %p864 = pneg %p451
        $region114: #{bert_classifier_forward.1} parent=63 // pred_check_branch
          %866 = sbr.rel (%p864) target = $region116
        $region115: #{bert_classifier_forward.1} parent=63 // pred_region
          %p867 = scmp.lt.s32.totalorder %s35, 1
          %s868 = scalar_select %p867, %s35, 1
          %s869 = smul.addr %s868, 8
          %s870 = smul.addr %s869, 4
          %s871 = scalar_lea.vmem %s16, %s870
        $region116: #{bert_classifier_forward.1} parent=63 // pred_fallthru
          _
        // Predicated region
        $region117: #{bert_classifier_forward.1} parent=63 // pred_check
          %p872 = pneg %p477
        $region118: #{bert_classifier_forward.1} parent=63 // pred_check_branch
          %874 = sbr.rel (%p872) target = $region120
        $region119: #{bert_classifier_forward.1} parent=63 // pred_region
          %p875 = scmp.lt.s32.totalorder %s35, 1
          %s876 = scalar_select %p875, %s35, 1
          %s877 = scalar_lea.vmem %s17, %s876
        $region120: #{bert_classifier_forward.1} parent=63 // pred_fallthru
          _
        // Predicated region
        $region121: #{bert_classifier_forward.1} parent=63 // pred_check
          %p878 = pneg %p503
        $region122: #{bert_classifier_forward.1} parent=63 // pred_check_branch
          %880 = sbr.rel (%p878) target = $region124
        $region123: #{bert_classifier_forward.1} parent=63 // pred_region
          %p881 = scmp.lt.s32.totalorder %s35, 1
          %s882 = scalar_select %p881, %s35, 1
          %s883 = scalar_lea.vmem %s18, %s882
        $region124: #{bert_classifier_forward.1} parent=63 // pred_fallthru
          _
        // Predicated region
        $region125: #{bert_classifier_forward.1} parent=63 // pred_check
          %p884 = pneg %p529
        $region126: #{bert_classifier_forward.1} parent=63 // pred_check_branch
          %886 = sbr.rel (%p884) target = $region128
        $region127: #{bert_classifier_forward.1} parent=63 // pred_region
          %p887 = scmp.lt.s32.totalorder %s35, 1
          %s888 = scalar_select %p887, %s35, 1
          %s889 = scalar_lea.vmem %s19, %s888
        $region128: #{bert_classifier_forward.1} parent=63 // pred_fallthru
          _
      $region64: #{bert_classifier_forward.1} parent=5 // pred_fallthru
        _
      %p890 = scmp.le.s32.totalorder 1, %s35
      %p891 = scmp.lt.s32.totalorder %s35, 3
      %p892 = pnand %p890, %p891
      %p893 = pneg %p892
      // Predicated region
      $region129: #{bert_classifier_forward.1} parent=5 // pred_check
        _
      $region130: #{bert_classifier_forward.1} parent=5 // pred_check_branch
        %895 = sbr.rel (%p892) target = $region132
      $region131: #{bert_classifier_forward.1} parent=5 // pred_region
        %s896 = ssub.s32 %s35, 1
        %p897 = pneg %p56
        %p898 = pneg %p53
        %p899 = pneg %p77
        %p900 = pneg %p74
        %p901 = pneg %p98
        %p902 = pneg %p95
        %p903 = pneg %p119
        %p904 = pneg %p116
        %p905 = scmp.lt.s32.totalorder %s40, 1
        %s906 = scalar_select %p905, %s40, 1
        %s907 = smul.addr %s906, 16
        %s908 = smul.addr %s907, 4
        %s909 = scalar_lea.vmem %s4, %s908
        %p910 = pneg %p145
        %p911 = pneg %p142
        %p912 = scmp.lt.s32.totalorder %s40, 1
        %s913 = scalar_select %p912, %s40, 1
        %s914 = smul.addr %s913, 4
        %s915 = scalar_lea.vmem %s5, %s914
        %p916 = pneg %p171
        %p917 = pneg %p168
        %p918 = scmp.lt.s32.totalorder %s40, 1
        %s919 = scalar_select %p918, %s40, 1
        %s920 = smul.addr %s919, 16
        %s921 = smul.addr %s920, 4
        %s922 = scalar_lea.vmem %s6, %s921
        %p923 = pneg %p197
        %p924 = pneg %p194
        %p925 = scmp.lt.s32.totalorder %s40, 1
        %s926 = scalar_select %p925, %s40, 1
        %s927 = smul.addr %s926, 4
        %s928 = scalar_lea.vmem %s7, %s927
        %p929 = pneg %p223
        %p930 = pneg %p220
        %p931 = scmp.lt.s32.totalorder %s40, 1
        %s932 = scalar_select %p931, %s40, 1
        %s933 = smul.addr %s932, 16
        %s934 = smul.addr %s933, 4
        %s935 = scalar_lea.vmem %s8, %s934
        %p936 = pneg %p249
        %p937 = pneg %p246
        %p938 = scmp.lt.s32.totalorder %s40, 1
        %s939 = scalar_select %p938, %s40, 1
        %s940 = smul.addr %s939, 4
        %s941 = scalar_lea.vmem %s9, %s940
        %p942 = pneg %p275
        %p943 = pneg %p272
        %p944 = scmp.lt.s32.totalorder %s40, 1
        %s945 = scalar_select %p944, %s40, 1
        %s946 = smul.addr %s945, 4
        %s947 = smul.addr %s946, 4
        %s948 = scalar_lea.vmem %s10, %s947
        %p949 = pneg %p301
        %p950 = pneg %p298
        %p951 = scmp.lt.s32.totalorder %s40, 1
        %s952 = scalar_select %p951, %s40, 1
        %s953 = scalar_lea.vmem %s11, %s952
        %p954 = pneg %p327
        %p955 = pneg %p324
        %p956 = scmp.lt.s32.totalorder %s40, 1
        %s957 = scalar_select %p956, %s40, 1
        %s958 = scalar_lea.vmem %s12, %s957
        %p959 = pneg %p353
        %p960 = pneg %p350
        %p961 = scmp.lt.s32.totalorder %s40, 1
        %s962 = scalar_select %p961, %s40, 1
        %s963 = scalar_lea.vmem %s13, %s962
        %p964 = pneg %p379
        %p965 = pneg %p376
        %p966 = scmp.lt.s32.totalorder %s40, 1
        %s967 = scalar_select %p966, %s40, 1
        %s968 = smul.addr %s967, 4
        %s969 = smul.addr %s968, 4
        %s970 = scalar_lea.vmem %s14, %s969
        %p971 = pneg %p405
        %p972 = pneg %p402
        %p973 = scmp.lt.s32.totalorder %s40, 1
        %s974 = scalar_select %p973, %s40, 1
        %s975 = scalar_lea.vmem %s15, %s974
        %p976 = pneg %p431
        %p977 = pneg %p428
        %p978 = scmp.lt.s32.totalorder %s40, 1
        %s979 = scalar_select %p978, %s40, 1
        %s980 = smul.addr %s979, 8
        %s981 = smul.addr %s980, 4
        %s982 = scalar_lea.vmem %s16, %s981
        %p983 = pneg %p457
        %p984 = pneg %p454
        %p985 = scmp.lt.s32.totalorder %s40, 1
        %s986 = scalar_select %p985, %s40, 1
        %s987 = scalar_lea.vmem %s17, %s986
        %p988 = pneg %p483
        %p989 = pneg %p480
        %p990 = scmp.lt.s32.totalorder %s40, 1
        %s991 = scalar_select %p990, %s40, 1
        %s992 = scalar_lea.vmem %s18, %s991
        %p993 = pneg %p509
        %p994 = pneg %p506
        %p995 = scmp.lt.s32.totalorder %s40, 1
        %s996 = scalar_select %p995, %s40, 1
        %s997 = scalar_lea.vmem %s19, %s996
        %p998 = pneg %p535
        %p999 = pneg %p532
        %p1000 = pneg %p556
        %p1001 = pneg %p553
        %p1002 = pneg %p577
        %p1003 = pneg %p574
        %p1004 = pneg %p598
        %p1005 = pneg %p595
        %p1006 = pneg %p619
        %p1007 = pneg %p616
        %p1008 = pneg %p640
        %p1009 = pneg %p637
        %p1010 = pneg %p661
        %p1011 = pneg %p658
        %p1012 = pneg %p682
        %p1013 = pneg %p679
        %p1014 = pneg %p703
        %p1015 = pneg %p700
        %p1016 = pneg %p724
        %p1017 = pneg %p721
        %p1018 = scmp.lt.s32.totalorder %s40, 1
        %s1019 = scalar_select %p1018, %s40, 1
        %s1020 = smul.addr %s1019, 16
        %s1021 = smul.addr %s1020, 4
        %s1022 = scalar_lea.vmem %s4, %s1021
        %p1023 = scmp.lt.s32.totalorder %s40, 1
        %s1024 = scalar_select %p1023, %s40, 1
        %s1025 = smul.addr %s1024, 4
        %s1026 = scalar_lea.vmem %s5, %s1025
        %p1027 = scmp.lt.s32.totalorder %s40, 1
        %s1028 = scalar_select %p1027, %s40, 1
        %s1029 = smul.addr %s1028, 16
        %s1030 = smul.addr %s1029, 4
        %s1031 = scalar_lea.vmem %s6, %s1030
        %p1032 = scmp.lt.s32.totalorder %s40, 1
        %s1033 = scalar_select %p1032, %s40, 1
        %s1034 = smul.addr %s1033, 4
        %s1035 = scalar_lea.vmem %s7, %s1034
        %p1036 = scmp.lt.s32.totalorder %s40, 1
        %s1037 = scalar_select %p1036, %s40, 1
        %s1038 = smul.addr %s1037, 16
        %s1039 = smul.addr %s1038, 4
        %s1040 = scalar_lea.vmem %s8, %s1039
        %p1041 = scmp.lt.s32.totalorder %s40, 1
        %s1042 = scalar_select %p1041, %s40, 1
        %s1043 = smul.addr %s1042, 4
        %s1044 = scalar_lea.vmem %s9, %s1043
        %p1045 = scmp.lt.s32.totalorder %s40, 1
        %s1046 = scalar_select %p1045, %s40, 1
        %s1047 = smul.addr %s1046, 4
        %s1048 = smul.addr %s1047, 4
        %s1049 = scalar_lea.vmem %s10, %s1048
        %p1050 = scmp.lt.s32.totalorder %s40, 1
        %s1051 = scalar_select %p1050, %s40, 1
        %s1052 = scalar_lea.vmem %s11, %s1051
        %p1053 = scmp.lt.s32.totalorder %s40, 1
        %s1054 = scalar_select %p1053, %s40, 1
        %s1055 = scalar_lea.vmem %s12, %s1054
        %p1056 = scmp.lt.s32.totalorder %s40, 1
        %s1057 = scalar_select %p1056, %s40, 1
        %s1058 = scalar_lea.vmem %s13, %s1057
        %p1059 = scmp.lt.s32.totalorder %s40, 1
        %s1060 = scalar_select %p1059, %s40, 1
        %s1061 = smul.addr %s1060, 4
        %s1062 = smul.addr %s1061, 4
        %s1063 = scalar_lea.vmem %s14, %s1062
        %p1064 = scmp.lt.s32.totalorder %s40, 1
        %s1065 = scalar_select %p1064, %s40, 1
        %s1066 = scalar_lea.vmem %s15, %s1065
        %p1067 = scmp.lt.s32.totalorder %s40, 1
        %s1068 = scalar_select %p1067, %s40, 1
        %s1069 = smul.addr %s1068, 8
        %s1070 = smul.addr %s1069, 4
        %s1071 = scalar_lea.vmem %s16, %s1070
        %p1072 = scmp.lt.s32.totalorder %s40, 1
        %s1073 = scalar_select %p1072, %s40, 1
        %s1074 = scalar_lea.vmem %s17, %s1073
        %p1075 = scmp.lt.s32.totalorder %s40, 1
        %s1076 = scalar_select %p1075, %s40, 1
        %s1077 = scalar_lea.vmem %s18, %s1076
        %p1078 = scmp.lt.s32.totalorder %s40, 1
        %s1079 = scalar_select %p1078, %s40, 1
        %s1080 = scalar_lea.vmem %s19, %s1079
        %p1082 = scmp.eq.s32.totalorder %s40, 0
        // Predicated region
        $region133: #{bert_classifier_forward.1} parent=131 // pred_check
          %p1083 = pneg %p1082
        $region134: #{bert_classifier_forward.1} parent=131 // pred_check_branch
          %1085 = sbr.rel (%p1083) target = $region136
        $region135: #{bert_classifier_forward.1} parent=131 // pred_region
          %v1086 = vld [vmem:[%s0] sm:$0xff]
          %v1087 = vld [vmem:[%s0 + $0x8] sm:$0xff]
          %v1088 = vld [vmem:[%s2] sm:$0x1]
          %v1089 = vld [vmem:[%s3] sm:$0x1]
          %vm1090 = vcmask 261120
          %v1091 = vsel %vm1090, %v1086, 0.0
          %1092 = vadd.xlane.f32.xlu0 %v1091
          %v1093 = vpop.xlane.xlu0 %1092
          %v1094 = vsel %vm1090, %v1087, 0.0
          %1095 = vadd.xlane.f32.xlu0 %v1094
          %v1096 = vpop.xlane.xlu0 %1095
          %v1097 = vmul.f32 %v1086, %v1086
          %v1098 = vmul.f32 %v1087, %v1087
          %v1099 = vsel %vm1090, %v1097, 0.0
          %1100 = vadd.xlane.f32.xlu0 %v1099
          %v1101 = vpop.xlane.xlu0 %1100
          %v1102 = vsel %vm1090, %v1098, 0.0
          %1103 = vadd.xlane.f32.xlu0 %v1102
          %v1104 = vpop.xlane.xlu0 %1103
          %v1105 = vmul.f32 %v1093, 0.03125
          %v1106 = vmul.f32 %v1096, 0.03125
          %v1107 = vmul.f32 %v1101, 0.03125
          %v1108 = vmul.f32 %v1104, 0.03125
          %v1109 = vmul.f32 %v1105, %v1105
          %v1110 = vmul.f32 %v1106, %v1106
          %v1111 = vsub.f32 %v1107, %v1109
          %v1112 = vsub.f32 %v1108, %v1110
          %v1113 = vmax.f32 %v1111, 0.0
          %v1114 = vmax.f32 %v1112, 0.0
          %v1115 = vsub.f32 %v1086, %v1105
          %v1116 = vsub.f32 %v1087, %v1106
          %v1117 = vadd.f32 %v1113, 1e-12
          %v1118 = vadd.f32 %v1114, 1e-12
          %v1119 = vrsqrt.pop %v1117
          %v1120 = vrsqrt.pop %v1118
          %v1121 = vmul.f32 %v1115, %v1119
          %v1122 = vmul.f32 %v1116, %v1120
          %v1124 = vlaneseq
          %v1125 = vshrl.u32 %v1124, 7
          %v1126 = vsub.s32 0, %v1125
          %v1127 = vrot.slane %v1088, %v1126
          %v1129 = vmul.f32 %v1121, %v1127
          %v1130 = vmul.f32 %v1122, %v1127
          %v1132 = vlaneseq
          %v1133 = vshrl.u32 %v1132, 7
          %v1134 = vsub.s32 0, %v1133
          %v1135 = vrot.slane %v1089, %v1134
          %v1137 = vadd.f32 %v1129, %v1135
          %v1138 = vadd.f32 %v1130, %v1135
          %1139 = vst.msk [vmem:[#allocation2] sm:$0xff] %vm1090, %v1137
          %1140 = vst.msk [vmem:[#allocation2 + $0x8] sm:$0xff] %vm1090, %v1138
        $region136: #{bert_classifier_forward.1} parent=131 // pred_fallthru
          _
        %v1141 = vld [vmem:[#allocation2] sm:$0xff]
        %v1142 = vld [vmem:[#allocation2 + $0x8] sm:$0xff]
        %v1143 = vpack.c.bf16 %v1142, %v1141
        %v1144 = vld [vmem:[%s1022] sm:$0xf]
        %v1145 = vld [vmem:[%s1022 + $0x4] sm:$0xf]
        %v1146 = vld [vmem:[%s1022 + $0x8] sm:$0xf]
        %v1147 = vld [vmem:[%s1022 + $0xc] sm:$0xf]
        %v1148 = vld [vmem:[%s1026] sm:$0x1]
        %v1150 = vlaneseq
        %v1151 = vshrl.u32 %v1150, 7
        %v1152 = vsub.s32 0, %v1151
        %v1153 = vrot.slane %v1148, %v1152
        %v1159 = vunpack.c.l.b16 %v1144
        %v1160 = vunpack.c.l.b16 %v1145
        %v1161 = vunpack.c.l.b16 %v1146
        %v1162 = vunpack.c.l.b16 %v1147
        %v1163 = vpack.c.b16 %v1160, %v1159
        %v1164 = vpack.c.b16 %v1162, %v1161
        %vm1167 = vcmask 261120
        %v1169 = vsel %vm1167, %v1143, 0
        %1171 = vmatprep.subr.bf16.mxu0 0
        %1172 = vmatpush1.bf16.msra.mxu0 %v1163
        %1173 = vmatprep.subr.bf16.mxu0 0
        %1174 = vmatpush1.bf16.msra.mxu0 %v1164
        %1175 = vmatprep.subr.bf16.mxu0 0
        %1176 = vmatpush1.bf16.msra.mxu0 0
        %1177 = vmatprep.subr.bf16.mxu0 0
        %1178 = vmatpush1.bf16.msra.mxu0 0
        %1179 = vmatprep.subr.bf16.mxu0 0
        %1180 = vmatpush1.bf16.msra.mxu0 0
        %1181 = vmatprep.subr.bf16.mxu0 0
        %1182 = vmatpush1.bf16.msra.mxu0 0
        %1183 = vmatprep.subr.bf16.mxu0 0
        %1184 = vmatpush1.bf16.msra.mxu0 0
        %1185 = vmatprep.subr.bf16.mxu0 0
        %1186 = vmatpush1.bf16.msra.mxu0 0
        %1187 = vmatprep.subr.bf16.mxu0 0
        %1188 = vmatpush1.bf16.msra.mxu0 0
        %1189 = vmatprep.subr.bf16.mxu0 0
        %1190 = vmatpush1.bf16.msra.mxu0 0
        %1191 = vmatprep.subr.bf16.mxu0 0
        %1192 = vmatpush1.bf16.msra.mxu0 0
        %1193 = vmatprep.subr.bf16.mxu0 0
        %1194 = vmatpush1.bf16.msra.mxu0 0
        %1195 = vmatprep.subr.bf16.mxu0 0
        %1196 = vmatpush1.bf16.msra.mxu0 0
        %1197 = vmatprep.subr.bf16.mxu0 0
        %1198 = vmatpush1.bf16.msra.mxu0 0
        %1199 = vmatprep.subr.bf16.mxu0 0
        %1200 = vmatpush1.bf16.msra.mxu0 0
        %1201 = vmatprep.subr.bf16.mxu0 0
        %1202 = vmatpush1.bf16.msra.mxu0 0
        %1203 = vmatprep.mubr.bf16.mxu0 0
        %1204 = vmatmul.mubr.bf16.gmra.mrb[0].mxu0 %v1169
        %v1205 = vpop.f32.mrb[0].mxu0
        %v1206 = vadd.f32 %v1153, %v1205
        %v1207 = vpop.f32.mrb[0].mxu0
        %v1208 = vpop.f32.mrb[0].mxu0
        %v1209 = vadd.f32 %v1153, %v1208
        %v1210 = vpop.f32.mrb[0].mxu0
        %1211 = vdwg.mxu0
        %v1212 = vld [vmem:[%s1031] sm:$0xf]
        %v1213 = vld [vmem:[%s1031 + $0x4] sm:$0xf]
        %v1214 = vld [vmem:[%s1031 + $0x8] sm:$0xf]
        %v1215 = vld [vmem:[%s1031 + $0xc] sm:$0xf]
        %v1216 = vld [vmem:[%s1035] sm:$0x1]
        %v1218 = vlaneseq
        %v1219 = vshrl.u32 %v1218, 7
        %v1220 = vsub.s32 0, %v1219
        %v1221 = vrot.slane %v1216, %v1220
        %v1227 = vunpack.c.l.b16 %v1212
        %v1228 = vunpack.c.l.b16 %v1213
        %v1229 = vunpack.c.l.b16 %v1214
        %v1230 = vunpack.c.l.b16 %v1215
        %v1231 = vpack.c.b16 %v1228, %v1227
        %v1232 = vpack.c.b16 %v1230, %v1229
        %1235 = vmatprep.subr.bf16.mxu0 0
        %1236 = vmatpush1.bf16.msra.mxu0 %v1231
        %1237 = vmatprep.subr.bf16.mxu0 0
        %1238 = vmatpush1.bf16.msra.mxu0 %v1232
        %1239 = vmatprep.subr.bf16.mxu0 0
        %1240 = vmatpush1.bf16.msra.mxu0 0
        %1241 = vmatprep.subr.bf16.mxu0 0
        %1242 = vmatpush1.bf16.msra.mxu0 0
        %1243 = vmatprep.subr.bf16.mxu0 0
        %1244 = vmatpush1.bf16.msra.mxu0 0
        %1245 = vmatprep.subr.bf16.mxu0 0
        %1246 = vmatpush1.bf16.msra.mxu0 0
        %1247 = vmatprep.subr.bf16.mxu0 0
        %1248 = vmatpush1.bf16.msra.mxu0 0
        %1249 = vmatprep.subr.bf16.mxu0 0
        %1250 = vmatpush1.bf16.msra.mxu0 0
        %1251 = vmatprep.subr.bf16.mxu0 0
        %1252 = vmatpush1.bf16.msra.mxu0 0
        %1253 = vmatprep.subr.bf16.mxu0 0
        %1254 = vmatpush1.bf16.msra.mxu0 0
        %1255 = vmatprep.subr.bf16.mxu0 0
        %1256 = vmatpush1.bf16.msra.mxu0 0
        %1257 = vmatprep.subr.bf16.mxu0 0
        %1258 = vmatpush1.bf16.msra.mxu0 0
        %1259 = vmatprep.subr.bf16.mxu0 0
        %1260 = vmatpush1.bf16.msra.mxu0 0
        %1261 = vmatprep.subr.bf16.mxu0 0
        %1262 = vmatpush1.bf16.msra.mxu0 0
        %1263 = vmatprep.subr.bf16.mxu0 0
        %1264 = vmatpush1.bf16.msra.mxu0 0
        %1265 = vmatprep.subr.bf16.mxu0 0
        %1266 = vmatpush1.bf16.msra.mxu0 0
        %1267 = vmatprep.mubr.bf16.mxu0 0
        %1268 = vmatmul.mubr.bf16.gmra.mrb[0].mxu0 %v1169
        %v1269 = vpop.f32.mrb[0].mxu0
        %v1270 = vadd.f32 %v1221, %v1269
        %v1271 = vpop.f32.mrb[0].mxu0
        %v1272 = vpop.f32.mrb[0].mxu0
        %v1273 = vadd.f32 %v1221, %v1272
        %v1274 = vpop.f32.mrb[0].mxu0
        %1275 = vdwg.mxu0
        %v1276 = vld [vmem:[%s1040] sm:$0xf]
        %v1277 = vld [vmem:[%s1040 + $0x4] sm:$0xf]
        %v1278 = vld [vmem:[%s1040 + $0x8] sm:$0xf]
        %v1279 = vld [vmem:[%s1040 + $0xc] sm:$0xf]
        %v1280 = vld [vmem:[%s1044] sm:$0x1]
        %v1282 = vlaneseq
        %v1283 = vshrl.u32 %v1282, 7
        %v1284 = vsub.s32 0, %v1283
        %v1285 = vrot.slane %v1280, %v1284
        %v1291 = vunpack.c.l.b16 %v1276
        %v1292 = vunpack.c.l.b16 %v1277
        %v1293 = vunpack.c.l.b16 %v1278
        %v1294 = vunpack.c.l.b16 %v1279
        %v1295 = vpack.c.b16 %v1292, %v1291
        %v1296 = vpack.c.b16 %v1294, %v1293
        %1299 = vmatprep.subr.bf16.mxu0 0
        %1300 = vmatpush1.bf16.msra.mxu0 %v1295
        %1301 = vmatprep.subr.bf16.mxu0 0
        %1302 = vmatpush1.bf16.msra.mxu0 %v1296
        %1303 = vmatprep.subr.bf16.mxu0 0
        %1304 = vmatpush1.bf16.msra.mxu0 0
        %1305 = vmatprep.subr.bf16.mxu0 0
        %1306 = vmatpush1.bf16.msra.mxu0 0
        %1307 = vmatprep.subr.bf16.mxu0 0
        %1308 = vmatpush1.bf16.msra.mxu0 0
        %1309 = vmatprep.subr.bf16.mxu0 0
        %1310 = vmatpush1.bf16.msra.mxu0 0
        %1311 = vmatprep.subr.bf16.mxu0 0
        %1312 = vmatpush1.bf16.msra.mxu0 0
        %1313 = vmatprep.subr.bf16.mxu0 0
        %1314 = vmatpush1.bf16.msra.mxu0 0
        %1315 = vmatprep.subr.bf16.mxu0 0
        %1316 = vmatpush1.bf16.msra.mxu0 0
        %1317 = vmatprep.subr.bf16.mxu0 0
        %1318 = vmatpush1.bf16.msra.mxu0 0
        %1319 = vmatprep.subr.bf16.mxu0 0
        %1320 = vmatpush1.bf16.msra.mxu0 0
        %1321 = vmatprep.subr.bf16.mxu0 0
        %1322 = vmatpush1.bf16.msra.mxu0 0
        %1323 = vmatprep.subr.bf16.mxu0 0
        %1324 = vmatpush1.bf16.msra.mxu0 0
        %1325 = vmatprep.subr.bf16.mxu0 0
        %1326 = vmatpush1.bf16.msra.mxu0 0
        %1327 = vmatprep.subr.bf16.mxu0 0
        %1328 = vmatpush1.bf16.msra.mxu0 0
        %1329 = vmatprep.subr.bf16.mxu0 0
        %1330 = vmatpush1.bf16.msra.mxu0 0
        %1331 = vmatprep.mubr.bf16.mxu0 0
        %1332 = vmatmul.mubr.bf16.gmra.mrb[0].mxu0 %v1169
        %v1333 = vpop.f32.mrb[0].mxu0
        %v1334 = vadd.f32 %v1285, %v1333
        %v1335 = vpop.f32.mrb[0].mxu0
        %v1336 = vpop.f32.mrb[0].mxu0
        %v1337 = vadd.f32 %v1285, %v1336
        %v1338 = vpop.f32.mrb[0].mxu0
        %1339 = vdwg.mxu0
        %v1340 = vpack.c.bf16 %v1209, %v1206
        %v1341 = vpack.c.bf16 %v1273, %v1270
        %v1342 = vpack.c.bf16 %v1337, %v1334
        %vm1343 = vcmask 64512
        %v1345 = vsel %vm1343, %v1340, 0
        %v1348 = vsel %vm1343, %v1341, 0
        %1350 = vmatprep.subr.bf16.mxu0 0
        %1351 = vmatpush1.bf16.xpose.msra.mxu0 %v1348
        %1352 = vmatprep.subr.bf16.mxu0 0
        %1353 = vmatpush1.bf16.xpose.msra.mxu0 0
        %1354 = vmatprep.subr.bf16.mxu0 0
        %1355 = vmatpush1.bf16.xpose.msra.mxu0 0
        %1356 = vmatprep.subr.bf16.mxu0 0
        %1357 = vmatpush1.bf16.xpose.msra.mxu0 0
        %1358 = vmatprep.subr.bf16.mxu0 0
        %1359 = vmatpush1.bf16.xpose.msra.mxu0 0
        %1360 = vmatprep.subr.bf16.mxu0 0
        %1361 = vmatpush1.bf16.xpose.msra.mxu0 0
        %1362 = vmatprep.subr.bf16.mxu0 0
        %1363 = vmatpush1.bf16.xpose.msra.mxu0 0
        %1364 = vmatprep.subr.bf16.mxu0 0
        %1365 = vmatpush1.bf16.xpose.msra.mxu0 0
        %1366 = vmatprep.subr.bf16.mxu0 0
        %1367 = vmatpush1.bf16.xpose.msra.mxu0 0
        %1368 = vmatprep.subr.bf16.mxu0 0
        %1369 = vmatpush1.bf16.xpose.msra.mxu0 0
        %1370 = vmatprep.subr.bf16.mxu0 0
        %1371 = vmatpush1.bf16.xpose.msra.mxu0 0
        %1372 = vmatprep.subr.bf16.mxu0 0
        %1373 = vmatpush1.bf16.xpose.msra.mxu0 0
        %1374 = vmatprep.subr.bf16.mxu0 0
        %1375 = vmatpush1.bf16.xpose.msra.mxu0 0
        %1376 = vmatprep.subr.bf16.mxu0 0
        %1377 = vmatpush1.bf16.xpose.msra.mxu0 0
        %1378 = vmatprep.subr.bf16.mxu0 0
        %1379 = vmatpush1.bf16.xpose.msra.mxu0 0
        %1380 = vmatprep.subr.bf16.mxu0 0
        %1381 = vmatpush1.bf16.xpose.msra.mxu0 0
        %1382 = vmatprep.mubr.bf16.mxu0 0
        %1383 = vmatmul.mubr.bf16.gmra.mrb[0].mxu0 %v1345
        %v1384 = vpop.f32.mrb[0].mxu0
        %v1385 = vadd.f32 0.0, %v1384
        %v1386 = vpop.f32.mrb[0].mxu0
        %v1387 = vpop.f32.mrb[0].mxu0
        %v1388 = vpop.f32.mrb[0].mxu0
        %1389 = vdwg.mxu0
        %v1390 = vmul.f32 %v1385, 0.35355338
        %v1391 = vld [vmem:[%s1] sm:$0x1]
        %v1393 = vlaneseq
        %v1394 = vshrl.u32 %v1393, 7
        %v1395 = vsub.s32 0, %v1394
        %v1396 = vrot.slane %v1391, %v1395
        %v1398 = vadd.f32 %v1390, %v1396
        %v1399 = vsel %vm1343, %v1398, -inf
        %1400 = vmax.xlane.f32.xlu0 %v1399
        %v1401 = vpop.xlane.xlu0 %1400
        %v1402 = vsub.f32 %v1398, %v1401
        %v1403 = vmul.f32 %v1402, 1.442695
        %v1404 = vpow.pop %v1403
        %v1405 = vsel %vm1343, %v1404, 0.0
        %1406 = vadd.xlane.f32.xlu0 %v1405
        %v1407 = vpop.xlane.xlu0 %1406
        %v1408 = vrcp.pop %v1407
        %v1409 = vmul.f32 %v1404, %v1408
        %v1410 = vpack.c.bf16 %v1409, %v1409
        %v1412 = vsel %vm1343, %v1410, 0
        %vm1414 = vcmask 1043456
        %v1416 = vsel %vm1414, %v1342, 0
        %1418 = vmatprep.subr.bf16.mxu0 0
        %1419 = vmatpush1.bf16.msra.mxu0 %v1416
        %1420 = vmatprep.subr.bf16.mxu0 0
        %1421 = vmatpush1.bf16.msra.mxu0 0
        %1422 = vmatprep.subr.bf16.mxu0 0
        %1423 = vmatpush1.bf16.msra.mxu0 0
        %1424 = vmatprep.subr.bf16.mxu0 0
        %1425 = vmatpush1.bf16.msra.mxu0 0
        %1426 = vmatprep.subr.bf16.mxu0 0
        %1427 = vmatpush1.bf16.msra.mxu0 0
        %1428 = vmatprep.subr.bf16.mxu0 0
        %1429 = vmatpush1.bf16.msra.mxu0 0
        %1430 = vmatprep.subr.bf16.mxu0 0
        %1431 = vmatpush1.bf16.msra.mxu0 0
        %1432 = vmatprep.subr.bf16.mxu0 0
        %1433 = vmatpush1.bf16.msra.mxu0 0
        %1434 = vmatprep.subr.bf16.mxu0 0
        %1435 = vmatpush1.bf16.msra.mxu0 0
        %1436 = vmatprep.subr.bf16.mxu0 0
        %1437 = vmatpush1.bf16.msra.mxu0 0
        %1438 = vmatprep.subr.bf16.mxu0 0
        %1439 = vmatpush1.bf16.msra.mxu0 0
        %1440 = vmatprep.subr.bf16.mxu0 0
        %1441 = vmatpush1.bf16.msra.mxu0 0
        %1442 = vmatprep.subr.bf16.mxu0 0
        %1443 = vmatpush1.bf16.msra.mxu0 0
        %1444 = vmatprep.subr.bf16.mxu0 0
        %1445 = vmatpush1.bf16.msra.mxu0 0
        %1446 = vmatprep.subr.bf16.mxu0 0
        %1447 = vmatpush1.bf16.msra.mxu0 0
        %1448 = vmatprep.subr.bf16.mxu0 0
        %1449 = vmatpush1.bf16.msra.mxu0 0
        %1450 = vmatprep.mubr.bf16.mxu0 0
        %1451 = vmatmul.mubr.bf16.gmra.mrb[0].mxu0 %v1412
        %v1452 = vpop.f32.mrb[0].mxu0
        %v1453 = vadd.f32 0.0, %v1452
        %v1454 = vpop.f32.mrb[0].mxu0
        %v1455 = vpop.f32.mrb[0].mxu0
        %v1456 = vpop.f32.mrb[0].mxu0
        %1457 = vdwg.mxu0
        %1458 = vst.msk [vmem:[#allocation3] sm:$0xff] %vm1343, %v1453
        %v1460 = vrot.slane %v1340, 4
        %v1462 = vrot.slane %v1341, 4
        %v1464 = vsel %vm1343, %v1460, 0
        %v1467 = vsel %vm1343, %v1462, 0
        %1469 = vmatprep.subr.bf16.mxu0 0
        %1470 = vmatpush1.bf16.xpose.msra.mxu0 %v1467
        %1471 = vmatprep.subr.bf16.mxu0 0
        %1472 = vmatpush1.bf16.xpose.msra.mxu0 0
        %1473 = vmatprep.subr.bf16.mxu0 0
        %1474 = vmatpush1.bf16.xpose.msra.mxu0 0
        %1475 = vmatprep.subr.bf16.mxu0 0
        %1476 = vmatpush1.bf16.xpose.msra.mxu0 0
        %1477 = vmatprep.subr.bf16.mxu0 0
        %1478 = vmatpush1.bf16.xpose.msra.mxu0 0
        %1479 = vmatprep.subr.bf16.mxu0 0
        %1480 = vmatpush1.bf16.xpose.msra.mxu0 0
        %1481 = vmatprep.subr.bf16.mxu0 0
        %1482 = vmatpush1.bf16.xpose.msra.mxu0 0
        %1483 = vmatprep.subr.bf16.mxu0 0
        %1484 = vmatpush1.bf16.xpose.msra.mxu0 0
        %1485 = vmatprep.subr.bf16.mxu0 0
        %1486 = vmatpush1.bf16.xpose.msra.mxu0 0
        %1487 = vmatprep.subr.bf16.mxu0 0
        %1488 = vmatpush1.bf16.xpose.msra.mxu0 0
        %1489 = vmatprep.subr.bf16.mxu0 0
        %1490 = vmatpush1.bf16.xpose.msra.mxu0 0
        %1491 = vmatprep.subr.bf16.mxu0 0
        %1492 = vmatpush1.bf16.xpose.msra.mxu0 0
        %1493 = vmatprep.subr.bf16.mxu0 0
        %1494 = vmatpush1.bf16.xpose.msra.mxu0 0
        %1495 = vmatprep.subr.bf16.mxu0 0
        %1496 = vmatpush1.bf16.xpose.msra.mxu0 0
        %1497 = vmatprep.subr.bf16.mxu0 0
        %1498 = vmatpush1.bf16.xpose.msra.mxu0 0
        %1499 = vmatprep.subr.bf16.mxu0 0
        %1500 = vmatpush1.bf16.xpose.msra.mxu0 0
        %1501 = vmatprep.mubr.bf16.mxu0 0
        %1502 = vmatmul.mubr.bf16.gmra.mrb[0].mxu0 %v1464
        %v1503 = vpop.f32.mrb[0].mxu0
        %v1504 = vadd.f32 0.0, %v1503
        %v1505 = vpop.f32.mrb[0].mxu0
        %v1506 = vpop.f32.mrb[0].mxu0
        %v1507 = vpop.f32.mrb[0].mxu0
        %1508 = vdwg.mxu0
        %v1509 = vmul.f32 %v1504, 0.35355338
        %s1510 = scalar_lea.vmem %s1, 1
        %v1511 = vld [vmem:[%s1510] sm:$0x1]
        %v1513 = vlaneseq
        %v1514 = vshrl.u32 %v1513, 7
        %v1515 = vsub.s32 0, %v1514
        %v1516 = vrot.slane %v1511, %v1515
        %v1518 = vadd.f32 %v1509, %v1516
        %v1519 = vsel %vm1343, %v1518, -inf
        %1520 = vmax.xlane.f32.xlu0 %v1519
        %v1521 = vpop.xlane.xlu0 %1520
        %v1522 = vsub.f32 %v1518, %v1521
        %v1523 = vmul.f32 %v1522, 1.442695
        %v1524 = vpow.pop %v1523
        %v1525 = vsel %vm1343, %v1524, 0.0
        %1526 = vadd.xlane.f32.xlu0 %v1525
        %v1527 = vpop.xlane.xlu0 %1526
        %v1528 = vrcp.pop %v1527
        %v1529 = vmul.f32 %v1524, %v1528
        %v1530 = vpack.c.bf16 %v1529, %v1529
        %v1532 = vrot.slane %v1342, 4
        %v1534 = vsel %vm1343, %v1530, 0
        %v1537 = vsel %vm1414, %v1532, 0
        %1539 = vmatprep.subr.bf16.mxu0 0
        %1540 = vmatpush1.bf16.msra.mxu0 %v1537
        %1541 = vmatprep.subr.bf16.mxu0 0
        %1542 = vmatpush1.bf16.msra.mxu0 0
        %1543 = vmatprep.subr.bf16.mxu0 0
        %1544 = vmatpush1.bf16.msra.mxu0 0
        %1545 = vmatprep.subr.bf16.mxu0 0
        %1546 = vmatpush1.bf16.msra.mxu0 0
        %1547 = vmatprep.subr.bf16.mxu0 0
        %1548 = vmatpush1.bf16.msra.mxu0 0
        %1549 = vmatprep.subr.bf16.mxu0 0
        %1550 = vmatpush1.bf16.msra.mxu0 0
        %1551 = vmatprep.subr.bf16.mxu0 0
        %1552 = vmatpush1.bf16.msra.mxu0 0
        %1553 = vmatprep.subr.bf16.mxu0 0
        %1554 = vmatpush1.bf16.msra.mxu0 0
        %1555 = vmatprep.subr.bf16.mxu0 0
        %1556 = vmatpush1.bf16.msra.mxu0 0
        %1557 = vmatprep.subr.bf16.mxu0 0
        %1558 = vmatpush1.bf16.msra.mxu0 0
        %1559 = vmatprep.subr.bf16.mxu0 0
        %1560 = vmatpush1.bf16.msra.mxu0 0
        %1561 = vmatprep.subr.bf16.mxu0 0
        %1562 = vmatpush1.bf16.msra.mxu0 0
        %1563 = vmatprep.subr.bf16.mxu0 0
        %1564 = vmatpush1.bf16.msra.mxu0 0
        %1565 = vmatprep.subr.bf16.mxu0 0
        %1566 = vmatpush1.bf16.msra.mxu0 0
        %1567 = vmatprep.subr.bf16.mxu0 0
        %1568 = vmatpush1.bf16.msra.mxu0 0
        %1569 = vmatprep.subr.bf16.mxu0 0
        %1570 = vmatpush1.bf16.msra.mxu0 0
        %1571 = vmatprep.mubr.bf16.mxu0 0
        %1572 = vmatmul.mubr.bf16.gmra.mrb[0].mxu0 %v1534
        %v1573 = vpop.f32.mrb[0].mxu0
        %v1574 = vadd.f32 0.0, %v1573
        %v1575 = vpop.f32.mrb[0].mxu0
        %v1576 = vpop.f32.mrb[0].mxu0
        %v1577 = vpop.f32.mrb[0].mxu0
        %1578 = vdwg.mxu0
        %1579 = vst.msk [vmem:[#allocation3 + $0x8] sm:$0xff] %vm1343, %v1574
        %v1580 = vld [vmem:[#allocation3] sm:$0xff]
        %v1581 = vld [vmem:[#allocation3 + $0x8] sm:$0xff]
        %v1582 = vpack.c.bf16 %v1581, %v1580
        %v1583 = vld [vmem:[%s1049] sm:$0xf]
        %s1584 = scalar_lea.vmem %s1022, 16
        %v1585 = vld [vmem:[%s1584] sm:$0xf]
        %v1586 = vld [vmem:[%s1584 + $0x4] sm:$0xf]
        %v1587 = vld [vmem:[%s1584 + $0x8] sm:$0xf]
        %v1588 = vld [vmem:[%s1584 + $0xc] sm:$0xf]
        %s1589 = scalar_lea.vmem %s1026, 1
        %v1590 = vld [vmem:[%s1589] sm:$0x1]
        %v1592 = vlaneseq
        %v1593 = vshrl.u32 %v1592, 7
        %v1594 = vsub.s32 0, %v1593
        %v1595 = vrot.slane %v1590, %v1594
        %v1601 = vunpack.c.l.b16 %v1585
        %v1602 = vunpack.c.l.b16 %v1586
        %v1603 = vunpack.c.l.b16 %v1587
        %v1604 = vunpack.c.l.b16 %v1588
        %v1605 = vpack.c.b16 %v1602, %v1601
        %v1606 = vpack.c.b16 %v1604, %v1603
        %1609 = vmatprep.subr.bf16.mxu0 0
        %1610 = vmatpush1.bf16.msra.mxu0 %v1605
        %1611 = vmatprep.subr.bf16.mxu0 0
        %1612 = vmatpush1.bf16.msra.mxu0 %v1606
        %1613 = vmatprep.subr.bf16.mxu0 0
        %1614 = vmatpush1.bf16.msra.mxu0 0
        %1615 = vmatprep.subr.bf16.mxu0 0
        %1616 = vmatpush1.bf16.msra.mxu0 0
        %1617 = vmatprep.subr.bf16.mxu0 0
        %1618 = vmatpush1.bf16.msra.mxu0 0
        %1619 = vmatprep.subr.bf16.mxu0 0
        %1620 = vmatpush1.bf16.msra.mxu0 0
        %1621 = vmatprep.subr.bf16.mxu0 0
        %1622 = vmatpush1.bf16.msra.mxu0 0
        %1623 = vmatprep.subr.bf16.mxu0 0
        %1624 = vmatpush1.bf16.msra.mxu0 0
        %1625 = vmatprep.subr.bf16.mxu0 0
        %1626 = vmatpush1.bf16.msra.mxu0 0
        %1627 = vmatprep.subr.bf16.mxu0 0
        %1628 = vmatpush1.bf16.msra.mxu0 0
        %1629 = vmatprep.subr.bf16.mxu0 0
        %1630 = vmatpush1.bf16.msra.mxu0 0
        %1631 = vmatprep.subr.bf16.mxu0 0
        %1632 = vmatpush1.bf16.msra.mxu0 0
        %1633 = vmatprep.subr.bf16.mxu0 0
        %1634 = vmatpush1.bf16.msra.mxu0 0
        %1635 = vmatprep.subr.bf16.mxu0 0
        %1636 = vmatpush1.bf16.msra.mxu0 0
        %1637 = vmatprep.subr.bf16.mxu0 0
        %1638 = vmatpush1.bf16.msra.mxu0 0
        %1639 = vmatprep.subr.bf16.mxu0 0
        %1640 = vmatpush1.bf16.msra.mxu0 0
        %1641 = vmatprep.mubr.bf16.mxu0 0
        %1642 = vmatmul.mubr.bf16.gmra.mrb[0].mxu0 %v1169
        %v1643 = vpop.f32.mrb[0].mxu0
        %v1644 = vadd.f32 %v1595, %v1643
        %v1645 = vpop.f32.mrb[0].mxu0
        %v1646 = vpop.f32.mrb[0].mxu0
        %v1647 = vadd.f32 %v1595, %v1646
        %v1648 = vpop.f32.mrb[0].mxu0
        %1649 = vdwg.mxu0
        %s1650 = scalar_lea.vmem %s1031, 16
        %v1651 = vld [vmem:[%s1650] sm:$0xf]
        %v1652 = vld [vmem:[%s1650 + $0x4] sm:$0xf]
        %v1653 = vld [vmem:[%s1650 + $0x8] sm:$0xf]
        %v1654 = vld [vmem:[%s1650 + $0xc] sm:$0xf]
        %s1655 = scalar_lea.vmem %s1035, 1
        %v1656 = vld [vmem:[%s1655] sm:$0x1]
        %v1658 = vlaneseq
        %v1659 = vshrl.u32 %v1658, 7
        %v1660 = vsub.s32 0, %v1659
        %v1661 = vrot.slane %v1656, %v1660
        %v1667 = vunpack.c.l.b16 %v1651
        %v1668 = vunpack.c.l.b16 %v1652
        %v1669 = vunpack.c.l.b16 %v1653
        %v1670 = vunpack.c.l.b16 %v1654
        %v1671 = vpack.c.b16 %v1668, %v1667
        %v1672 = vpack.c.b16 %v1670, %v1669
        %1675 = vmatprep.subr.bf16.mxu0 0
        %1676 = vmatpush1.bf16.msra.mxu0 %v1671
        %1677 = vmatprep.subr.bf16.mxu0 0
        %1678 = vmatpush1.bf16.msra.mxu0 %v1672
        %1679 = vmatprep.subr.bf16.mxu0 0
        %1680 = vmatpush1.bf16.msra.mxu0 0
        %1681 = vmatprep.subr.bf16.mxu0 0
        %1682 = vmatpush1.bf16.msra.mxu0 0
        %1683 = vmatprep.subr.bf16.mxu0 0
        %1684 = vmatpush1.bf16.msra.mxu0 0
        %1685 = vmatprep.subr.bf16.mxu0 0
        %1686 = vmatpush1.bf16.msra.mxu0 0
        %1687 = vmatprep.subr.bf16.mxu0 0
        %1688 = vmatpush1.bf16.msra.mxu0 0
        %1689 = vmatprep.subr.bf16.mxu0 0
        %1690 = vmatpush1.bf16.msra.mxu0 0
        %1691 = vmatprep.subr.bf16.mxu0 0
        %1692 = vmatpush1.bf16.msra.mxu0 0
        %1693 = vmatprep.subr.bf16.mxu0 0
        %1694 = vmatpush1.bf16.msra.mxu0 0
        %1695 = vmatprep.subr.bf16.mxu0 0
        %1696 = vmatpush1.bf16.msra.mxu0 0
        %1697 = vmatprep.subr.bf16.mxu0 0
        %1698 = vmatpush1.bf16.msra.mxu0 0
        %1699 = vmatprep.subr.bf16.mxu0 0
        %1700 = vmatpush1.bf16.msra.mxu0 0
        %1701 = vmatprep.subr.bf16.mxu0 0
        %1702 = vmatpush1.bf16.msra.mxu0 0
        %1703 = vmatprep.subr.bf16.mxu0 0
        %1704 = vmatpush1.bf16.msra.mxu0 0
        %1705 = vmatprep.subr.bf16.mxu0 0
        %1706 = vmatpush1.bf16.msra.mxu0 0
        %1707 = vmatprep.mubr.bf16.mxu0 0
        %1708 = vmatmul.mubr.bf16.gmra.mrb[0].mxu0 %v1169
        %v1709 = vpop.f32.mrb[0].mxu0
        %v1710 = vadd.f32 %v1661, %v1709
        %v1711 = vpop.f32.mrb[0].mxu0
        %v1712 = vpop.f32.mrb[0].mxu0
        %v1713 = vadd.f32 %v1661, %v1712
        %v1714 = vpop.f32.mrb[0].mxu0
        %1715 = vdwg.mxu0
        %s1716 = scalar_lea.vmem %s1040, 16
        %v1717 = vld [vmem:[%s1716] sm:$0xf]
        %v1718 = vld [vmem:[%s1716 + $0x4] sm:$0xf]
        %v1719 = vld [vmem:[%s1716 + $0x8] sm:$0xf]
        %v1720 = vld [vmem:[%s1716 + $0xc] sm:$0xf]
        %s1721 = scalar_lea.vmem %s1044, 1
        %v1722 = vld [vmem:[%s1721] sm:$0x1]
        %v1724 = vlaneseq
        %v1725 = vshrl.u32 %v1724, 7
        %v1726 = vsub.s32 0, %v1725
        %v1727 = vrot.slane %v1722, %v1726
        %v1733 = vunpack.c.l.b16 %v1717
        %v1734 = vunpack.c.l.b16 %v1718
        %v1735 = vunpack.c.l.b16 %v1719
        %v1736 = vunpack.c.l.b16 %v1720
        %v1737 = vpack.c.b16 %v1734, %v1733
        %v1738 = vpack.c.b16 %v1736, %v1735
        %1741 = vmatprep.subr.bf16.mxu0 0
        %1742 = vmatpush1.bf16.msra.mxu0 %v1737
        %1743 = vmatprep.subr.bf16.mxu0 0
        %1744 = vmatpush1.bf16.msra.mxu0 %v1738
        %1745 = vmatprep.subr.bf16.mxu0 0
        %1746 = vmatpush1.bf16.msra.mxu0 0
        %1747 = vmatprep.subr.bf16.mxu0 0
        %1748 = vmatpush1.bf16.msra.mxu0 0
        %1749 = vmatprep.subr.bf16.mxu0 0
        %1750 = vmatpush1.bf16.msra.mxu0 0
        %1751 = vmatprep.subr.bf16.mxu0 0
        %1752 = vmatpush1.bf16.msra.mxu0 0
        %1753 = vmatprep.subr.bf16.mxu0 0
        %1754 = vmatpush1.bf16.msra.mxu0 0
        %1755 = vmatprep.subr.bf16.mxu0 0
        %1756 = vmatpush1.bf16.msra.mxu0 0
        %1757 = vmatprep.subr.bf16.mxu0 0
        %1758 = vmatpush1.bf16.msra.mxu0 0
        %1759 = vmatprep.subr.bf16.mxu0 0
        %1760 = vmatpush1.bf16.msra.mxu0 0
        %1761 = vmatprep.subr.bf16.mxu0 0
        %1762 = vmatpush1.bf16.msra.mxu0 0
        %1763 = vmatprep.subr.bf16.mxu0 0
        %1764 = vmatpush1.bf16.msra.mxu0 0
        %1765 = vmatprep.subr.bf16.mxu0 0
        %1766 = vmatpush1.bf16.msra.mxu0 0
        %1767 = vmatprep.subr.bf16.mxu0 0
        %1768 = vmatpush1.bf16.msra.mxu0 0
        %1769 = vmatprep.subr.bf16.mxu0 0
        %1770 = vmatpush1.bf16.msra.mxu0 0
        %1771 = vmatprep.subr.bf16.mxu0 0
        %1772 = vmatpush1.bf16.msra.mxu0 0
        %1773 = vmatprep.mubr.bf16.mxu0 0
        %1774 = vmatmul.mubr.bf16.gmra.mrb[0].mxu0 %v1169
        %v1775 = vpop.f32.mrb[0].mxu0
        %v1776 = vadd.f32 %v1727, %v1775
        %v1777 = vpop.f32.mrb[0].mxu0
        %v1778 = vpop.f32.mrb[0].mxu0
        %v1779 = vadd.f32 %v1727, %v1778
        %v1780 = vpop.f32.mrb[0].mxu0
        %1781 = vdwg.mxu0
        %v1782 = vpack.c.bf16 %v1647, %v1644
        %v1783 = vpack.c.bf16 %v1713, %v1710
        %v1784 = vpack.c.bf16 %v1779, %v1776
        %v1786 = vsel %vm1343, %v1782, 0
        %v1789 = vsel %vm1343, %v1783, 0
        %1791 = vmatprep.subr.bf16.mxu0 0
        %1792 = vmatpush1.bf16.xpose.msra.mxu0 %v1789
        %1793 = vmatprep.subr.bf16.mxu0 0
        %1794 = vmatpush1.bf16.xpose.msra.mxu0 0
        %1795 = vmatprep.subr.bf16.mxu0 0
        %1796 = vmatpush1.bf16.xpose.msra.mxu0 0
        %1797 = vmatprep.subr.bf16.mxu0 0
        %1798 = vmatpush1.bf16.xpose.msra.mxu0 0
        %1799 = vmatprep.subr.bf16.mxu0 0
        %1800 = vmatpush1.bf16.xpose.msra.mxu0 0
        %1801 = vmatprep.subr.bf16.mxu0 0
        %1802 = vmatpush1.bf16.xpose.msra.mxu0 0
        %1803 = vmatprep.subr.bf16.mxu0 0
        %1804 = vmatpush1.bf16.xpose.msra.mxu0 0
        %1805 = vmatprep.subr.bf16.mxu0 0
        %1806 = vmatpush1.bf16.xpose.msra.mxu0 0
        %1807 = vmatprep.subr.bf16.mxu0 0
        %1808 = vmatpush1.bf16.xpose.msra.mxu0 0
        %1809 = vmatprep.subr.bf16.mxu0 0
        %1810 = vmatpush1.bf16.xpose.msra.mxu0 0
        %1811 = vmatprep.subr.bf16.mxu0 0
        %1812 = vmatpush1.bf16.xpose.msra.mxu0 0
        %1813 = vmatprep.subr.bf16.mxu0 0
        %1814 = vmatpush1.bf16.xpose.msra.mxu0 0
        %1815 = vmatprep.subr.bf16.mxu0 0
        %1816 = vmatpush1.bf16.xpose.msra.mxu0 0
        %1817 = vmatprep.subr.bf16.mxu0 0
        %1818 = vmatpush1.bf16.xpose.msra.mxu0 0
        %1819 = vmatprep.subr.bf16.mxu0 0
        %1820 = vmatpush1.bf16.xpose.msra.mxu0 0
        %1821 = vmatprep.subr.bf16.mxu0 0
        %1822 = vmatpush1.bf16.xpose.msra.mxu0 0
        %1823 = vmatprep.mubr.bf16.mxu0 0
        %1824 = vmatmul.mubr.bf16.gmra.mrb[0].mxu0 %v1786
        %v1825 = vpop.f32.mrb[0].mxu0
        %v1826 = vadd.f32 0.0, %v1825
        %v1827 = vpop.f32.mrb[0].mxu0
        %v1828 = vpop.f32.mrb[0].mxu0
        %v1829 = vpop.f32.mrb[0].mxu0
        %1830 = vdwg.mxu0
        %v1831 = vmul.f32 %v1826, 0.35355338
        %v1832 = vld [vmem:[%s1] sm:$0x1]
        %v1834 = vlaneseq
        %v1835 = vshrl.u32 %v1834, 7
        %v1836 = vsub.s32 0, %v1835
        %v1837 = vrot.slane %v1832, %v1836
        %v1839 = vadd.f32 %v1831, %v1837
        %v1840 = vsel %vm1343, %v1839, -inf
        %1841 = vmax.xlane.f32.xlu0 %v1840
        %v1842 = vpop.xlane.xlu0 %1841
        %v1843 = vsub.f32 %v1839, %v1842
        %v1844 = vmul.f32 %v1843, 1.442695
        %v1845 = vpow.pop %v1844
        %v1846 = vsel %vm1343, %v1845, 0.0
        %1847 = vadd.xlane.f32.xlu0 %v1846
        %v1848 = vpop.xlane.xlu0 %1847
        %v1849 = vrcp.pop %v1848
        %v1850 = vmul.f32 %v1845, %v1849
        %v1851 = vpack.c.bf16 %v1850, %v1850
        %v1853 = vsel %vm1343, %v1851, 0
        %v1856 = vsel %vm1414, %v1784, 0
        %1858 = vmatprep.subr.bf16.mxu0 0
        %1859 = vmatpush1.bf16.msra.mxu0 %v1856
        %1860 = vmatprep.subr.bf16.mxu0 0
        %1861 = vmatpush1.bf16.msra.mxu0 0
        %1862 = vmatprep.subr.bf16.mxu0 0
        %1863 = vmatpush1.bf16.msra.mxu0 0
        %1864 = vmatprep.subr.bf16.mxu0 0
        %1865 = vmatpush1.bf16.msra.mxu0 0
        %1866 = vmatprep.subr.bf16.mxu0 0
        %1867 = vmatpush1.bf16.msra.mxu0 0
        %1868 = vmatprep.subr.bf16.mxu0 0
        %1869 = vmatpush1.bf16.msra.mxu0 0
        %1870 = vmatprep.subr.bf16.mxu0 0
        %1871 = vmatpush1.bf16.msra.mxu0 0
        %1872 = vmatprep.subr.bf16.mxu0 0
        %1873 = vmatpush1.bf16.msra.mxu0 0
        %1874 = vmatprep.subr.bf16.mxu0 0
        %1875 = vmatpush1.bf16.msra.mxu0 0
        %1876 = vmatprep.subr.bf16.mxu0 0
        %1877 = vmatpush1.bf16.msra.mxu0 0
        %1878 = vmatprep.subr.bf16.mxu0 0
        %1879 = vmatpush1.bf16.msra.mxu0 0
        %1880 = vmatprep.subr.bf16.mxu0 0
        %1881 = vmatpush1.bf16.msra.mxu0 0
        %1882 = vmatprep.subr.bf16.mxu0 0
        %1883 = vmatpush1.bf16.msra.mxu0 0
        %1884 = vmatprep.subr.bf16.mxu0 0
        %1885 = vmatpush1.bf16.msra.mxu0 0
        %1886 = vmatprep.subr.bf16.mxu0 0
        %1887 = vmatpush1.bf16.msra.mxu0 0
        %1888 = vmatprep.subr.bf16.mxu0 0
        %1889 = vmatpush1.bf16.msra.mxu0 0
        %1890 = vmatprep.mubr.bf16.mxu0 0
        %1891 = vmatmul.mubr.bf16.gmra.mrb[0].mxu0 %v1853
        %v1892 = vpop.f32.mrb[0].mxu0
        %v1893 = vadd.f32 0.0, %v1892
        %v1894 = vpop.f32.mrb[0].mxu0
        %v1895 = vpop.f32.mrb[0].mxu0
        %v1896 = vpop.f32.mrb[0].mxu0
        %1897 = vdwg.mxu0
        %1898 = vst.msk [vmem:[#allocation3] sm:$0xff] %vm1343, %v1893
        %v1900 = vrot.slane %v1782, 4
        %v1902 = vrot.slane %v1783, 4
        %v1904 = vsel %vm1343, %v1900, 0
        %v1907 = vsel %vm1343, %v1902, 0
        %1909 = vmatprep.subr.bf16.mxu0 0
        %1910 = vmatpush1.bf16.xpose.msra.mxu0 %v1907
        %1911 = vmatprep.subr.bf16.mxu0 0
        %1912 = vmatpush1.bf16.xpose.msra.mxu0 0
        %1913 = vmatprep.subr.bf16.mxu0 0
        %1914 = vmatpush1.bf16.xpose.msra.mxu0 0
        %1915 = vmatprep.subr.bf16.mxu0 0
        %1916 = vmatpush1.bf16.xpose.msra.mxu0 0
        %1917 = vmatprep.subr.bf16.mxu0 0
        %1918 = vmatpush1.bf16.xpose.msra.mxu0 0
        %1919 = vmatprep.subr.bf16.mxu0 0
        %1920 = vmatpush1.bf16.xpose.msra.mxu0 0
        %1921 = vmatprep.subr.bf16.mxu0 0
        %1922 = vmatpush1.bf16.xpose.msra.mxu0 0
        %1923 = vmatprep.subr.bf16.mxu0 0
        %1924 = vmatpush1.bf16.xpose.msra.mxu0 0
        %1925 = vmatprep.subr.bf16.mxu0 0
        %1926 = vmatpush1.bf16.xpose.msra.mxu0 0
        %1927 = vmatprep.subr.bf16.mxu0 0
        %1928 = vmatpush1.bf16.xpose.msra.mxu0 0
        %1929 = vmatprep.subr.bf16.mxu0 0
        %1930 = vmatpush1.bf16.xpose.msra.mxu0 0
        %1931 = vmatprep.subr.bf16.mxu0 0
        %1932 = vmatpush1.bf16.xpose.msra.mxu0 0
        %1933 = vmatprep.subr.bf16.mxu0 0
        %1934 = vmatpush1.bf16.xpose.msra.mxu0 0
        %1935 = vmatprep.subr.bf16.mxu0 0
        %1936 = vmatpush1.bf16.xpose.msra.mxu0 0
        %1937 = vmatprep.subr.bf16.mxu0 0
        %1938 = vmatpush1.bf16.xpose.msra.mxu0 0
        %1939 = vmatprep.subr.bf16.mxu0 0
        %1940 = vmatpush1.bf16.xpose.msra.mxu0 0
        %1941 = vmatprep.mubr.bf16.mxu0 0
        %1942 = vmatmul.mubr.bf16.gmra.mrb[0].mxu0 %v1904
        %v1943 = vpop.f32.mrb[0].mxu0
        %v1944 = vadd.f32 0.0, %v1943
        %v1945 = vpop.f32.mrb[0].mxu0
        %v1946 = vpop.f32.mrb[0].mxu0
        %v1947 = vpop.f32.mrb[0].mxu0
        %1948 = vdwg.mxu0
        %v1949 = vmul.f32 %v1944, 0.35355338
        %v1950 = vld [vmem:[%s1510] sm:$0x1]
        %v1952 = vlaneseq
        %v1953 = vshrl.u32 %v1952, 7
        %v1954 = vsub.s32 0, %v1953
        %v1955 = vrot.slane %v1950, %v1954
        %v1957 = vadd.f32 %v1949, %v1955
        %v1958 = vsel %vm1343, %v1957, -inf
        %1959 = vmax.xlane.f32.xlu0 %v1958
        %v1960 = vpop.xlane.xlu0 %1959
        %v1961 = vsub.f32 %v1957, %v1960
        %v1962 = vmul.f32 %v1961, 1.442695
        %v1963 = vpow.pop %v1962
        %v1964 = vsel %vm1343, %v1963, 0.0
        %1965 = vadd.xlane.f32.xlu0 %v1964
        %v1966 = vpop.xlane.xlu0 %1965
        %v1967 = vrcp.pop %v1966
        %v1968 = vmul.f32 %v1963, %v1967
        %v1969 = vpack.c.bf16 %v1968, %v1968
        %v1971 = vrot.slane %v1784, 4
        %v1973 = vsel %vm1343, %v1969, 0
        %v1976 = vsel %vm1414, %v1971, 0
        %1978 = vmatprep.subr.bf16.mxu0 0
        %1979 = vmatpush1.bf16.msra.mxu0 %v1976
        %1980 = vmatprep.subr.bf16.mxu0 0
        %1981 = vmatpush1.bf16.msra.mxu0 0
        %1982 = vmatprep.subr.bf16.mxu0 0
        %1983 = vmatpush1.bf16.msra.mxu0 0
        %1984 = vmatprep.subr.bf16.mxu0 0
        %1985 = vmatpush1.bf16.msra.mxu0 0
        %1986 = vmatprep.subr.bf16.mxu0 0
        %1987 = vmatpush1.bf16.msra.mxu0 0
        %1988 = vmatprep.subr.bf16.mxu0 0
        %1989 = vmatpush1.bf16.msra.mxu0 0
        %1990 = vmatprep.subr.bf16.mxu0 0
        %1991 = vmatpush1.bf16.msra.mxu0 0
        %1992 = vmatprep.subr.bf16.mxu0 0
        %1993 = vmatpush1.bf16.msra.mxu0 0
        %1994 = vmatprep.subr.bf16.mxu0 0
        %1995 = vmatpush1.bf16.msra.mxu0 0
        %1996 = vmatprep.subr.bf16.mxu0 0
        %1997 = vmatpush1.bf16.msra.mxu0 0
        %1998 = vmatprep.subr.bf16.mxu0 0
        %1999 = vmatpush1.bf16.msra.mxu0 0
        %2000 = vmatprep.subr.bf16.mxu0 0
        %2001 = vmatpush1.bf16.msra.mxu0 0
        %2002 = vmatprep.subr.bf16.mxu0 0
        %2003 = vmatpush1.bf16.msra.mxu0 0
        %2004 = vmatprep.subr.bf16.mxu0 0
        %2005 = vmatpush1.bf16.msra.mxu0 0
        %2006 = vmatprep.subr.bf16.mxu0 0
        %2007 = vmatpush1.bf16.msra.mxu0 0
        %2008 = vmatprep.subr.bf16.mxu0 0
        %2009 = vmatpush1.bf16.msra.mxu0 0
        %2010 = vmatprep.mubr.bf16.mxu0 0
        %2011 = vmatmul.mubr.bf16.gmra.mrb[0].mxu0 %v1973
        %v2012 = vpop.f32.mrb[0].mxu0
        %v2013 = vadd.f32 0.0, %v2012
        %v2014 = vpop.f32.mrb[0].mxu0
        %v2015 = vpop.f32.mrb[0].mxu0
        %v2016 = vpop.f32.mrb[0].mxu0
        %2017 = vdwg.mxu0
        %2018 = vst.msk [vmem:[#allocation3 + $0x8] sm:$0xff] %vm1343, %v2013
        %v2019 = vld [vmem:[#allocation3] sm:$0xff]
        %v2020 = vld [vmem:[#allocation3 + $0x8] sm:$0xff]
        %v2021 = vpack.c.bf16 %v2020, %v2019
        %s2022 = scalar_lea.vmem %s1049, 4
        %v2023 = vld [vmem:[%s2022] sm:$0xf]
        %v2025 = vsel %vm1343, %v2021, 0
        %v2028 = vsel %vm1414, %v2023, 0
        %2030 = vmatprep.subr.bf16.mxu0 0
        %2031 = vmatpush1.bf16.msra.mxu0 %v2028
        %2032 = vmatprep.subr.bf16.mxu0 0
        %2033 = vmatpush1.bf16.msra.mxu0 0
        %2034 = vmatprep.subr.bf16.mxu0 0
        %2035 = vmatpush1.bf16.msra.mxu0 0
        %2036 = vmatprep.subr.bf16.mxu0 0
        %2037 = vmatpush1.bf16.msra.mxu0 0
        %2038 = vmatprep.subr.bf16.mxu0 0
        %2039 = vmatpush1.bf16.msra.mxu0 0
        %2040 = vmatprep.subr.bf16.mxu0 0
        %2041 = vmatpush1.bf16.msra.mxu0 0
        %2042 = vmatprep.subr.bf16.mxu0 0
        %2043 = vmatpush1.bf16.msra.mxu0 0
        %2044 = vmatprep.subr.bf16.mxu0 0
        %2045 = vmatpush1.bf16.msra.mxu0 0
        %2046 = vmatprep.subr.bf16.mxu0 0
        %2047 = vmatpush1.bf16.msra.mxu0 0
        %2048 = vmatprep.subr.bf16.mxu0 0
        %2049 = vmatpush1.bf16.msra.mxu0 0
        %2050 = vmatprep.subr.bf16.mxu0 0
        %2051 = vmatpush1.bf16.msra.mxu0 0
        %2052 = vmatprep.subr.bf16.mxu0 0
        %2053 = vmatpush1.bf16.msra.mxu0 0
        %2054 = vmatprep.subr.bf16.mxu0 0
        %2055 = vmatpush1.bf16.msra.mxu0 0
        %2056 = vmatprep.subr.bf16.mxu0 0
        %2057 = vmatpush1.bf16.msra.mxu0 0
        %2058 = vmatprep.subr.bf16.mxu0 0
        %2059 = vmatpush1.bf16.msra.mxu0 0
        %2060 = vmatprep.subr.bf16.mxu0 0
        %2061 = vmatpush1.bf16.msra.mxu0 0
        %2062 = vmatprep.mubr.bf16.mxu0 0
        %2063 = vmatmul.mubr.bf16.gmra.mrb[0].mxu0 %v2025
        %v2064 = vpop.f32.mrb[0].mxu0
        %v2065 = vadd.f32 0.0, %v2064
        %v2066 = vpop.f32.mrb[0].mxu0
        %v2067 = vpop.f32.mrb[0].mxu0
        %v2068 = vadd.f32 0.0, %v2067
        %v2069 = vpop.f32.mrb[0].mxu0
        %2070 = vdwg.mxu0
        %v2072 = vsel %vm1343, %v1582, 0
        %v2075 = vsel %vm1414, %v1583, 0
        %2077 = vmatprep.subr.bf16.mxu0 0
        %2078 = vmatpush1.bf16.msra.mxu0 %v2075
        %2079 = vmatprep.subr.bf16.mxu0 0
        %2080 = vmatpush1.bf16.msra.mxu0 0
        %2081 = vmatprep.subr.bf16.mxu0 0
        %2082 = vmatpush1.bf16.msra.mxu0 0
        %2083 = vmatprep.subr.bf16.mxu0 0
        %2084 = vmatpush1.bf16.msra.mxu0 0
        %2085 = vmatprep.subr.bf16.mxu0 0
        %2086 = vmatpush1.bf16.msra.mxu0 0
        %2087 = vmatprep.subr.bf16.mxu0 0
        %2088 = vmatpush1.bf16.msra.mxu0 0
        %2089 = vmatprep.subr.bf16.mxu0 0
        %2090 = vmatpush1.bf16.msra.mxu0 0
        %2091 = vmatprep.subr.bf16.mxu0 0
        %2092 = vmatpush1.bf16.msra.mxu0 0
        %2093 = vmatprep.subr.bf16.mxu0 0
        %2094 = vmatpush1.bf16.msra.mxu0 0
        %2095 = vmatprep.subr.bf16.mxu0 0
        %2096 = vmatpush1.bf16.msra.mxu0 0
        %2097 = vmatprep.subr.bf16.mxu0 0
        %2098 = vmatpush1.bf16.msra.mxu0 0
        %2099 = vmatprep.subr.bf16.mxu0 0
        %2100 = vmatpush1.bf16.msra.mxu0 0
        %2101 = vmatprep.subr.bf16.mxu0 0
        %2102 = vmatpush1.bf16.msra.mxu0 0
        %2103 = vmatprep.subr.bf16.mxu0 0
        %2104 = vmatpush1.bf16.msra.mxu0 0
        %2105 = vmatprep.subr.bf16.mxu0 0
        %2106 = vmatpush1.bf16.msra.mxu0 0
        %2107 = vmatprep.subr.bf16.mxu0 0
        %2108 = vmatpush1.bf16.msra.mxu0 0
        %2109 = vmatprep.mubr.bf16.mxu0 0
        %2110 = vmatmul.mubr.bf16.gmra.mrb[0].mxu0 %v2072
        %v2111 = vpop.f32.mrb[0].mxu0
        %v2112 = vadd.f32 %v2065, %v2111
        %v2113 = vpop.f32.mrb[0].mxu0
        %v2114 = vpop.f32.mrb[0].mxu0
        %v2115 = vadd.f32 %v2068, %v2114
        %v2116 = vpop.f32.mrb[0].mxu0
        %2117 = vdwg.mxu0
        %s2118 = scalar_lea.vmem %s1022, 32
        %v2119 = vld [vmem:[%s2118] sm:$0xf]
        %v2120 = vld [vmem:[%s2118 + $0x4] sm:$0xf]
        %v2121 = vld [vmem:[%s2118 + $0x8] sm:$0xf]
        %v2122 = vld [vmem:[%s2118 + $0xc] sm:$0xf]
        %s2123 = scalar_lea.vmem %s1026, 2
        %v2124 = vld [vmem:[%s2123] sm:$0x1]
        %v2126 = vlaneseq
        %v2127 = vshrl.u32 %v2126, 7
        %v2128 = vsub.s32 0, %v2127
        %v2129 = vrot.slane %v2124, %v2128
        %v2135 = vunpack.c.l.b16 %v2119
        %v2136 = vunpack.c.l.b16 %v2120
        %v2137 = vunpack.c.l.b16 %v2121
        %v2138 = vunpack.c.l.b16 %v2122
        %v2139 = vpack.c.b16 %v2136, %v2135
        %v2140 = vpack.c.b16 %v2138, %v2137
        %2143 = vmatprep.subr.bf16.mxu0 0
        %2144 = vmatpush1.bf16.msra.mxu0 %v2139
        %2145 = vmatprep.subr.bf16.mxu0 0
        %2146 = vmatpush1.bf16.msra.mxu0 %v2140
        %2147 = vmatprep.subr.bf16.mxu0 0
        %2148 = vmatpush1.bf16.msra.mxu0 0
        %2149 = vmatprep.subr.bf16.mxu0 0
        %2150 = vmatpush1.bf16.msra.mxu0 0
        %2151 = vmatprep.subr.bf16.mxu0 0
        %2152 = vmatpush1.bf16.msra.mxu0 0
        %2153 = vmatprep.subr.bf16.mxu0 0
        %2154 = vmatpush1.bf16.msra.mxu0 0
        %2155 = vmatprep.subr.bf16.mxu0 0
        %2156 = vmatpush1.bf16.msra.mxu0 0
        %2157 = vmatprep.subr.bf16.mxu0 0
        %2158 = vmatpush1.bf16.msra.mxu0 0
        %2159 = vmatprep.subr.bf16.mxu0 0
        %2160 = vmatpush1.bf16.msra.mxu0 0
        %2161 = vmatprep.subr.bf16.mxu0 0
        %2162 = vmatpush1.bf16.msra.mxu0 0
        %2163 = vmatprep.subr.bf16.mxu0 0
        %2164 = vmatpush1.bf16.msra.mxu0 0
        %2165 = vmatprep.subr.bf16.mxu0 0
        %2166 = vmatpush1.bf16.msra.mxu0 0
        %2167 = vmatprep.subr.bf16.mxu0 0
        %2168 = vmatpush1.bf16.msra.mxu0 0
        %2169 = vmatprep.subr.bf16.mxu0 0
        %2170 = vmatpush1.bf16.msra.mxu0 0
        %2171 = vmatprep.subr.bf16.mxu0 0
        %2172 = vmatpush1.bf16.msra.mxu0 0
        %2173 = vmatprep.subr.bf16.mxu0 0
        %2174 = vmatpush1.bf16.msra.mxu0 0
        %2175 = vmatprep.mubr.bf16.mxu0 0
        %2176 = vmatmul.mubr.bf16.gmra.mrb[0].mxu0 %v1169
        %v2177 = vpop.f32.mrb[0].mxu0
        %v2178 = vadd.f32 %v2129, %v2177
        %v2179 = vpop.f32.mrb[0].mxu0
        %v2180 = vpop.f32.mrb[0].mxu0
        %v2181 = vadd.f32 %v2129, %v2180
        %v2182 = vpop.f32.mrb[0].mxu0
        %2183 = vdwg.mxu0
        %s2184 = scalar_lea.vmem %s1031, 32
        %v2185 = vld [vmem:[%s2184] sm:$0xf]
        %v2186 = vld [vmem:[%s2184 + $0x4] sm:$0xf]
        %v2187 = vld [vmem:[%s2184 + $0x8] sm:$0xf]
        %v2188 = vld [vmem:[%s2184 + $0xc] sm:$0xf]
        %s2189 = scalar_lea.vmem %s1035, 2
        %v2190 = vld [vmem:[%s2189] sm:$0x1]
        %v2192 = vlaneseq
        %v2193 = vshrl.u32 %v2192, 7
        %v2194 = vsub.s32 0, %v2193
        %v2195 = vrot.slane %v2190, %v2194
        %v2201 = vunpack.c.l.b16 %v2185
        %v2202 = vunpack.c.l.b16 %v2186
        %v2203 = vunpack.c.l.b16 %v2187
        %v2204 = vunpack.c.l.b16 %v2188
        %v2205 = vpack.c.b16 %v2202, %v2201
        %v2206 = vpack.c.b16 %v2204, %v2203
        %2209 = vmatprep.subr.bf16.mxu0 0
        %2210 = vmatpush1.bf16.msra.mxu0 %v2205
        %2211 = vmatprep.subr.bf16.mxu0 0
        %2212 = vmatpush1.bf16.msra.mxu0 %v2206
        %2213 = vmatprep.subr.bf16.mxu0 0
        %2214 = vmatpush1.bf16.msra.mxu0 0
        %2215 = vmatprep.subr.bf16.mxu0 0
        %2216 = vmatpush1.bf16.msra.mxu0 0
        %2217 = vmatprep.subr.bf16.mxu0 0
        %2218 = vmatpush1.bf16.msra.mxu0 0
        %2219 = vmatprep.subr.bf16.mxu0 0
        %2220 = vmatpush1.bf16.msra.mxu0 0
        %2221 = vmatprep.subr.bf16.mxu0 0
        %2222 = vmatpush1.bf16.msra.mxu0 0
        %2223 = vmatprep.subr.bf16.mxu0 0
        %2224 = vmatpush1.bf16.msra.mxu0 0
        %2225 = vmatprep.subr.bf16.mxu0 0
        %2226 = vmatpush1.bf16.msra.mxu0 0
        %2227 = vmatprep.subr.bf16.mxu0 0
        %2228 = vmatpush1.bf16.msra.mxu0 0
        %2229 = vmatprep.subr.bf16.mxu0 0
        %2230 = vmatpush1.bf16.msra.mxu0 0
        %2231 = vmatprep.subr.bf16.mxu0 0
        %2232 = vmatpush1.bf16.msra.mxu0 0
        %2233 = vmatprep.subr.bf16.mxu0 0
        %2234 = vmatpush1.bf16.msra.mxu0 0
        %2235 = vmatprep.subr.bf16.mxu0 0
        %2236 = vmatpush1.bf16.msra.mxu0 0
        %2237 = vmatprep.subr.bf16.mxu0 0
        %2238 = vmatpush1.bf16.msra.mxu0 0
        %2239 = vmatprep.subr.bf16.mxu0 0
        %2240 = vmatpush1.bf16.msra.mxu0 0
        %2241 = vmatprep.mubr.bf16.mxu0 0
        %2242 = vmatmul.mubr.bf16.gmra.mrb[0].mxu0 %v1169
        %v2243 = vpop.f32.mrb[0].mxu0
        %v2244 = vadd.f32 %v2195, %v2243
        %v2245 = vpop.f32.mrb[0].mxu0
        %v2246 = vpop.f32.mrb[0].mxu0
        %v2247 = vadd.f32 %v2195, %v2246
        %v2248 = vpop.f32.mrb[0].mxu0
        %2249 = vdwg.mxu0
        %s2250 = scalar_lea.vmem %s1040, 32
        %v2251 = vld [vmem:[%s2250] sm:$0xf]
        %v2252 = vld [vmem:[%s2250 + $0x4] sm:$0xf]
        %v2253 = vld [vmem:[%s2250 + $0x8] sm:$0xf]
        %v2254 = vld [vmem:[%s2250 + $0xc] sm:$0xf]
        %s2255 = scalar_lea.vmem %s1044, 2
        %v2256 = vld [vmem:[%s2255] sm:$0x1]
        %v2258 = vlaneseq
        %v2259 = vshrl.u32 %v2258, 7
        %v2260 = vsub.s32 0, %v2259
        %v2261 = vrot.slane %v2256, %v2260
        %v2267 = vunpack.c.l.b16 %v2251
        %v2268 = vunpack.c.l.b16 %v2252
        %v2269 = vunpack.c.l.b16 %v2253
        %v2270 = vunpack.c.l.b16 %v2254
        %v2271 = vpack.c.b16 %v2268, %v2267
        %v2272 = vpack.c.b16 %v2270, %v2269
        %2275 = vmatprep.subr.bf16.mxu0 0
        %2276 = vmatpush1.bf16.msra.mxu0 %v2271
        %2277 = vmatprep.subr.bf16.mxu0 0
        %2278 = vmatpush1.bf16.msra.mxu0 %v2272
        %2279 = vmatprep.subr.bf16.mxu0 0
        %2280 = vmatpush1.bf16.msra.mxu0 0
        %2281 = vmatprep.subr.bf16.mxu0 0
        %2282 = vmatpush1.bf16.msra.mxu0 0
        %2283 = vmatprep.subr.bf16.mxu0 0
        %2284 = vmatpush1.bf16.msra.mxu0 0
        %2285 = vmatprep.subr.bf16.mxu0 0
        %2286 = vmatpush1.bf16.msra.mxu0 0
        %2287 = vmatprep.subr.bf16.mxu0 0
        %2288 = vmatpush1.bf16.msra.mxu0 0
        %2289 = vmatprep.subr.bf16.mxu0 0
        %2290 = vmatpush1.bf16.msra.mxu0 0
        %2291 = vmatprep.subr.bf16.mxu0 0
        %2292 = vmatpush1.bf16.msra.mxu0 0
        %2293 = vmatprep.subr.bf16.mxu0 0
        %2294 = vmatpush1.bf16.msra.mxu0 0
        %2295 = vmatprep.subr.bf16.mxu0 0
        %2296 = vmatpush1.bf16.msra.mxu0 0
        %2297 = vmatprep.subr.bf16.mxu0 0
        %2298 = vmatpush1.bf16.msra.mxu0 0
        %2299 = vmatprep.subr.bf16.mxu0 0
        %2300 = vmatpush1.bf16.msra.mxu0 0
        %2301 = vmatprep.subr.bf16.mxu0 0
        %2302 = vmatpush1.bf16.msra.mxu0 0
        %2303 = vmatprep.subr.bf16.mxu0 0
        %2304 = vmatpush1.bf16.msra.mxu0 0
        %2305 = vmatprep.subr.bf16.mxu0 0
        %2306 = vmatpush1.bf16.msra.mxu0 0
        %2307 = vmatprep.mubr.bf16.mxu0 0
        %2308 = vmatmul.mubr.bf16.gmra.mrb[0].mxu0 %v1169
        %v2309 = vpop.f32.mrb[0].mxu0
        %v2310 = vadd.f32 %v2261, %v2309
        %v2311 = vpop.f32.mrb[0].mxu0
        %v2312 = vpop.f32.mrb[0].mxu0
        %v2313 = vadd.f32 %v2261, %v2312
        %v2314 = vpop.f32.mrb[0].mxu0
        %2315 = vdwg.mxu0
        %v2316 = vpack.c.bf16 %v2181, %v2178
        %v2317 = vpack.c.bf16 %v2247, %v2244
        %v2318 = vpack.c.bf16 %v2313, %v2310
        %v2320 = vsel %vm1343, %v2316, 0
        %v2323 = vsel %vm1343, %v2317, 0
        %2325 = vmatprep.subr.bf16.mxu0 0
        %2326 = vmatpush1.bf16.xpose.msra.mxu0 %v2323
        %2327 = vmatprep.subr.bf16.mxu0 0
        %2328 = vmatpush1.bf16.xpose.msra.mxu0 0
        %2329 = vmatprep.subr.bf16.mxu0 0
        %2330 = vmatpush1.bf16.xpose.msra.mxu0 0
        %2331 = vmatprep.subr.bf16.mxu0 0
        %2332 = vmatpush1.bf16.xpose.msra.mxu0 0
        %2333 = vmatprep.subr.bf16.mxu0 0
        %2334 = vmatpush1.bf16.xpose.msra.mxu0 0
        %2335 = vmatprep.subr.bf16.mxu0 0
        %2336 = vmatpush1.bf16.xpose.msra.mxu0 0
        %2337 = vmatprep.subr.bf16.mxu0 0
        %2338 = vmatpush1.bf16.xpose.msra.mxu0 0
        %2339 = vmatprep.subr.bf16.mxu0 0
        %2340 = vmatpush1.bf16.xpose.msra.mxu0 0
        %2341 = vmatprep.subr.bf16.mxu0 0
        %2342 = vmatpush1.bf16.xpose.msra.mxu0 0
        %2343 = vmatprep.subr.bf16.mxu0 0
        %2344 = vmatpush1.bf16.xpose.msra.mxu0 0
        %2345 = vmatprep.subr.bf16.mxu0 0
        %2346 = vmatpush1.bf16.xpose.msra.mxu0 0
        %2347 = vmatprep.subr.bf16.mxu0 0
        %2348 = vmatpush1.bf16.xpose.msra.mxu0 0
        %2349 = vmatprep.subr.bf16.mxu0 0
        %2350 = vmatpush1.bf16.xpose.msra.mxu0 0
        %2351 = vmatprep.subr.bf16.mxu0 0
        %2352 = vmatpush1.bf16.xpose.msra.mxu0 0
        %2353 = vmatprep.subr.bf16.mxu0 0
        %2354 = vmatpush1.bf16.xpose.msra.mxu0 0
        %2355 = vmatprep.subr.bf16.mxu0 0
        %2356 = vmatpush1.bf16.xpose.msra.mxu0 0
        %2357 = vmatprep.mubr.bf16.mxu0 0
        %2358 = vmatmul.mubr.bf16.gmra.mrb[0].mxu0 %v2320
        %v2359 = vpop.f32.mrb[0].mxu0
        %v2360 = vadd.f32 0.0, %v2359
        %v2361 = vpop.f32.mrb[0].mxu0
        %v2362 = vpop.f32.mrb[0].mxu0
        %v2363 = vpop.f32.mrb[0].mxu0
        %2364 = vdwg.mxu0
        %v2365 = vmul.f32 %v2360, 0.35355338
        %v2366 = vld [vmem:[%s1] sm:$0x1]
        %v2368 = vlaneseq
        %v2369 = vshrl.u32 %v2368, 7
        %v2370 = vsub.s32 0, %v2369
        %v2371 = vrot.slane %v2366, %v2370
        %v2373 = vadd.f32 %v2365, %v2371
        %v2374 = vsel %vm1343, %v2373, -inf
        %2375 = vmax.xlane.f32.xlu0 %v2374
        %v2376 = vpop.xlane.xlu0 %2375
        %v2377 = vsub.f32 %v2373, %v2376
        %v2378 = vmul.f32 %v2377, 1.442695
        %v2379 = vpow.pop %v2378
        %v2380 = vsel %vm1343, %v2379, 0.0
        %2381 = vadd.xlane.f32.xlu0 %v2380
        %v2382 = vpop.xlane.xlu0 %2381
        %v2383 = vrcp.pop %v2382
        %v2384 = vmul.f32 %v2379, %v2383
        %v2385 = vpack.c.bf16 %v2384, %v2384
        %v2387 = vsel %vm1343, %v2385, 0
        %v2390 = vsel %vm1414, %v2318, 0
        %2392 = vmatprep.subr.bf16.mxu0 0
        %2393 = vmatpush1.bf16.msra.mxu0 %v2390
        %2394 = vmatprep.subr.bf16.mxu0 0
        %2395 = vmatpush1.bf16.msra.mxu0 0
        %2396 = vmatprep.subr.bf16.mxu0 0
        %2397 = vmatpush1.bf16.msra.mxu0 0
        %2398 = vmatprep.subr.bf16.mxu0 0
        %2399 = vmatpush1.bf16.msra.mxu0 0
        %2400 = vmatprep.subr.bf16.mxu0 0
        %2401 = vmatpush1.bf16.msra.mxu0 0
        %2402 = vmatprep.subr.bf16.mxu0 0
        %2403 = vmatpush1.bf16.msra.mxu0 0
        %2404 = vmatprep.subr.bf16.mxu0 0
        %2405 = vmatpush1.bf16.msra.mxu0 0
        %2406 = vmatprep.subr.bf16.mxu0 0
        %2407 = vmatpush1.bf16.msra.mxu0 0
        %2408 = vmatprep.subr.bf16.mxu0 0
        %2409 = vmatpush1.bf16.msra.mxu0 0
        %2410 = vmatprep.subr.bf16.mxu0 0
        %2411 = vmatpush1.bf16.msra.mxu0 0
        %2412 = vmatprep.subr.bf16.mxu0 0
        %2413 = vmatpush1.bf16.msra.mxu0 0
        %2414 = vmatprep.subr.bf16.mxu0 0
        %2415 = vmatpush1.bf16.msra.mxu0 0
        %2416 = vmatprep.subr.bf16.mxu0 0
        %2417 = vmatpush1.bf16.msra.mxu0 0
        %2418 = vmatprep.subr.bf16.mxu0 0
        %2419 = vmatpush1.bf16.msra.mxu0 0
        %2420 = vmatprep.subr.bf16.mxu0 0
        %2421 = vmatpush1.bf16.msra.mxu0 0
        %2422 = vmatprep.subr.bf16.mxu0 0
        %2423 = vmatpush1.bf16.msra.mxu0 0
        %2424 = vmatprep.mubr.bf16.mxu0 0
        %2425 = vmatmul.mubr.bf16.gmra.mrb[0].mxu0 %v2387
        %v2426 = vpop.f32.mrb[0].mxu0
        %v2427 = vadd.f32 0.0, %v2426
        %v2428 = vpop.f32.mrb[0].mxu0
        %v2429 = vpop.f32.mrb[0].mxu0
        %v2430 = vpop.f32.mrb[0].mxu0
        %2431 = vdwg.mxu0
        %2432 = vst.msk [vmem:[#allocation3] sm:$0xff] %vm1343, %v2427
        %v2434 = vrot.slane %v2316, 4
        %v2436 = vrot.slane %v2317, 4
        %v2438 = vsel %vm1343, %v2434, 0
        %v2441 = vsel %vm1343, %v2436, 0
        %2443 = vmatprep.subr.bf16.mxu0 0
        %2444 = vmatpush1.bf16.xpose.msra.mxu0 %v2441
        %2445 = vmatprep.subr.bf16.mxu0 0
        %2446 = vmatpush1.bf16.xpose.msra.mxu0 0
        %2447 = vmatprep.subr.bf16.mxu0 0
        %2448 = vmatpush1.bf16.xpose.msra.mxu0 0
        %2449 = vmatprep.subr.bf16.mxu0 0
        %2450 = vmatpush1.bf16.xpose.msra.mxu0 0
        %2451 = vmatprep.subr.bf16.mxu0 0
        %2452 = vmatpush1.bf16.xpose.msra.mxu0 0
        %2453 = vmatprep.subr.bf16.mxu0 0
        %2454 = vmatpush1.bf16.xpose.msra.mxu0 0
        %2455 = vmatprep.subr.bf16.mxu0 0
        %2456 = vmatpush1.bf16.xpose.msra.mxu0 0
        %2457 = vmatprep.subr.bf16.mxu0 0
        %2458 = vmatpush1.bf16.xpose.msra.mxu0 0
        %2459 = vmatprep.subr.bf16.mxu0 0
        %2460 = vmatpush1.bf16.xpose.msra.mxu0 0
        %2461 = vmatprep.subr.bf16.mxu0 0
        %2462 = vmatpush1.bf16.xpose.msra.mxu0 0
        %2463 = vmatprep.subr.bf16.mxu0 0
        %2464 = vmatpush1.bf16.xpose.msra.mxu0 0
        %2465 = vmatprep.subr.bf16.mxu0 0
        %2466 = vmatpush1.bf16.xpose.msra.mxu0 0
        %2467 = vmatprep.subr.bf16.mxu0 0
        %2468 = vmatpush1.bf16.xpose.msra.mxu0 0
        %2469 = vmatprep.subr.bf16.mxu0 0
        %2470 = vmatpush1.bf16.xpose.msra.mxu0 0
        %2471 = vmatprep.subr.bf16.mxu0 0
        %2472 = vmatpush1.bf16.xpose.msra.mxu0 0
        %2473 = vmatprep.subr.bf16.mxu0 0
        %2474 = vmatpush1.bf16.xpose.msra.mxu0 0
        %2475 = vmatprep.mubr.bf16.mxu0 0
        %2476 = vmatmul.mubr.bf16.gmra.mrb[0].mxu0 %v2438
        %v2477 = vpop.f32.mrb[0].mxu0
        %v2478 = vadd.f32 0.0, %v2477
        %v2479 = vpop.f32.mrb[0].mxu0
        %v2480 = vpop.f32.mrb[0].mxu0
        %v2481 = vpop.f32.mrb[0].mxu0
        %2482 = vdwg.mxu0
        %v2483 = vmul.f32 %v2478, 0.35355338
        %v2484 = vld [vmem:[%s1510] sm:$0x1]
        %v2486 = vlaneseq
        %v2487 = vshrl.u32 %v2486, 7
        %v2488 = vsub.s32 0, %v2487
        %v2489 = vrot.slane %v2484, %v2488
        %v2491 = vadd.f32 %v2483, %v2489
        %v2492 = vsel %vm1343, %v2491, -inf
        %2493 = vmax.xlane.f32.xlu0 %v2492
        %v2494 = vpop.xlane.xlu0 %2493
        %v2495 = vsub.f32 %v2491, %v2494
        %v2496 = vmul.f32 %v2495, 1.442695
        %v2497 = vpow.pop %v2496
        %v2498 = vsel %vm1343, %v2497, 0.0
        %2499 = vadd.xlane.f32.xlu0 %v2498
        %v2500 = vpop.xlane.xlu0 %2499
        %v2501 = vrcp.pop %v2500
        %v2502 = vmul.f32 %v2497, %v2501
        %v2503 = vpack.c.bf16 %v2502, %v2502
        %v2505 = vrot.slane %v2318, 4
        %v2507 = vsel %vm1343, %v2503, 0
        %v2510 = vsel %vm1414, %v2505, 0
        %2512 = vmatprep.subr.bf16.mxu0 0
        %2513 = vmatpush1.bf16.msra.mxu0 %v2510
        %2514 = vmatprep.subr.bf16.mxu0 0
        %2515 = vmatpush1.bf16.msra.mxu0 0
        %2516 = vmatprep.subr.bf16.mxu0 0
        %2517 = vmatpush1.bf16.msra.mxu0 0
        %2518 = vmatprep.subr.bf16.mxu0 0
        %2519 = vmatpush1.bf16.msra.mxu0 0
        %2520 = vmatprep.subr.bf16.mxu0 0
        %2521 = vmatpush1.bf16.msra.mxu0 0
        %2522 = vmatprep.subr.bf16.mxu0 0
        %2523 = vmatpush1.bf16.msra.mxu0 0
        %2524 = vmatprep.subr.bf16.mxu0 0
        %2525 = vmatpush1.bf16.msra.mxu0 0
        %2526 = vmatprep.subr.bf16.mxu0 0
        %2527 = vmatpush1.bf16.msra.mxu0 0
        %2528 = vmatprep.subr.bf16.mxu0 0
        %2529 = vmatpush1.bf16.msra.mxu0 0
        %2530 = vmatprep.subr.bf16.mxu0 0
        %2531 = vmatpush1.bf16.msra.mxu0 0
        %2532 = vmatprep.subr.bf16.mxu0 0
        %2533 = vmatpush1.bf16.msra.mxu0 0
        %2534 = vmatprep.subr.bf16.mxu0 0
        %2535 = vmatpush1.bf16.msra.mxu0 0
        %2536 = vmatprep.subr.bf16.mxu0 0
        %2537 = vmatpush1.bf16.msra.mxu0 0
        %2538 = vmatprep.subr.bf16.mxu0 0
        %2539 = vmatpush1.bf16.msra.mxu0 0
        %2540 = vmatprep.subr.bf16.mxu0 0
        %2541 = vmatpush1.bf16.msra.mxu0 0
        %2542 = vmatprep.subr.bf16.mxu0 0
        %2543 = vmatpush1.bf16.msra.mxu0 0
        %2544 = vmatprep.mubr.bf16.mxu0 0
        %2545 = vmatmul.mubr.bf16.gmra.mrb[0].mxu0 %v2507
        %v2546 = vpop.f32.mrb[0].mxu0
        %v2547 = vadd.f32 0.0, %v2546
        %v2548 = vpop.f32.mrb[0].mxu0
        %v2549 = vpop.f32.mrb[0].mxu0
        %v2550 = vpop.f32.mrb[0].mxu0
        %2551 = vdwg.mxu0
        %2552 = vst.msk [vmem:[#allocation3 + $0x8] sm:$0xff] %vm1343, %v2547
        %v2553 = vld [vmem:[#allocation3] sm:$0xff]
        %v2554 = vld [vmem:[#allocation3 + $0x8] sm:$0xff]
        %v2555 = vpack.c.bf16 %v2554, %v2553
        %s2556 = scalar_lea.vmem %s1049, 8
        %v2557 = vld [vmem:[%s2556] sm:$0xf]
        %v2559 = vsel %vm1343, %v2555, 0
        %v2562 = vsel %vm1414, %v2557, 0
        %2564 = vmatprep.subr.bf16.mxu0 0
        %2565 = vmatpush1.bf16.msra.mxu0 %v2562
        %2566 = vmatprep.subr.bf16.mxu0 0
        %2567 = vmatpush1.bf16.msra.mxu0 0
        %2568 = vmatprep.subr.bf16.mxu0 0
        %2569 = vmatpush1.bf16.msra.mxu0 0
        %2570 = vmatprep.subr.bf16.mxu0 0
        %2571 = vmatpush1.bf16.msra.mxu0 0
        %2572 = vmatprep.subr.bf16.mxu0 0
        %2573 = vmatpush1.bf16.msra.mxu0 0
        %2574 = vmatprep.subr.bf16.mxu0 0
        %2575 = vmatpush1.bf16.msra.mxu0 0
        %2576 = vmatprep.subr.bf16.mxu0 0
        %2577 = vmatpush1.bf16.msra.mxu0 0
        %2578 = vmatprep.subr.bf16.mxu0 0
        %2579 = vmatpush1.bf16.msra.mxu0 0
        %2580 = vmatprep.subr.bf16.mxu0 0
        %2581 = vmatpush1.bf16.msra.mxu0 0
        %2582 = vmatprep.subr.bf16.mxu0 0
        %2583 = vmatpush1.bf16.msra.mxu0 0
        %2584 = vmatprep.subr.bf16.mxu0 0
        %2585 = vmatpush1.bf16.msra.mxu0 0
        %2586 = vmatprep.subr.bf16.mxu0 0
        %2587 = vmatpush1.bf16.msra.mxu0 0
        %2588 = vmatprep.subr.bf16.mxu0 0
        %2589 = vmatpush1.bf16.msra.mxu0 0
        %2590 = vmatprep.subr.bf16.mxu0 0
        %2591 = vmatpush1.bf16.msra.mxu0 0
        %2592 = vmatprep.subr.bf16.mxu0 0
        %2593 = vmatpush1.bf16.msra.mxu0 0
        %2594 = vmatprep.subr.bf16.mxu0 0
        %2595 = vmatpush1.bf16.msra.mxu0 0
        %2596 = vmatprep.mubr.bf16.mxu0 0
        %2597 = vmatmul.mubr.bf16.gmra.mrb[0].mxu0 %v2559
        %v2598 = vpop.f32.mrb[0].mxu0
        %v2599 = vadd.f32 0.0, %v2598
        %v2600 = vpop.f32.mrb[0].mxu0
        %v2601 = vpop.f32.mrb[0].mxu0
        %v2602 = vadd.f32 0.0, %v2601
        %v2603 = vpop.f32.mrb[0].mxu0
        %2604 = vdwg.mxu0
        %v2605 = vadd.f32 %v2112, %v2599
        %v2606 = vadd.f32 %v2115, %v2602
        %s2607 = scalar_lea.vmem %s1022, 48
        %v2608 = vld [vmem:[%s2607] sm:$0xf]
        %v2609 = vld [vmem:[%s2607 + $0x4] sm:$0xf]
        %v2610 = vld [vmem:[%s2607 + $0x8] sm:$0xf]
        %v2611 = vld [vmem:[%s2607 + $0xc] sm:$0xf]
        %s2612 = scalar_lea.vmem %s1026, 3
        %v2613 = vld [vmem:[%s2612] sm:$0x1]
        %v2615 = vlaneseq
        %v2616 = vshrl.u32 %v2615, 7
        %v2617 = vsub.s32 0, %v2616
        %v2618 = vrot.slane %v2613, %v2617
        %v2624 = vunpack.c.l.b16 %v2608
        %v2625 = vunpack.c.l.b16 %v2609
        %v2626 = vunpack.c.l.b16 %v2610
        %v2627 = vunpack.c.l.b16 %v2611
        %v2628 = vpack.c.b16 %v2625, %v2624
        %v2629 = vpack.c.b16 %v2627, %v2626
        %2632 = vmatprep.subr.bf16.mxu0 0
        %2633 = vmatpush1.bf16.msra.mxu0 %v2628
        %2634 = vmatprep.subr.bf16.mxu0 0
        %2635 = vmatpush1.bf16.msra.mxu0 %v2629
        %2636 = vmatprep.subr.bf16.mxu0 0
        %2637 = vmatpush1.bf16.msra.mxu0 0
        %2638 = vmatprep.subr.bf16.mxu0 0
        %2639 = vmatpush1.bf16.msra.mxu0 0
        %2640 = vmatprep.subr.bf16.mxu0 0
        %2641 = vmatpush1.bf16.msra.mxu0 0
        %2642 = vmatprep.subr.bf16.mxu0 0
        %2643 = vmatpush1.bf16.msra.mxu0 0
        %2644 = vmatprep.subr.bf16.mxu0 0
        %2645 = vmatpush1.bf16.msra.mxu0 0
        %2646 = vmatprep.subr.bf16.mxu0 0
        %2647 = vmatpush1.bf16.msra.mxu0 0
        %2648 = vmatprep.subr.bf16.mxu0 0
        %2649 = vmatpush1.bf16.msra.mxu0 0
        %2650 = vmatprep.subr.bf16.mxu0 0
        %2651 = vmatpush1.bf16.msra.mxu0 0
        %2652 = vmatprep.subr.bf16.mxu0 0
        %2653 = vmatpush1.bf16.msra.mxu0 0
        %2654 = vmatprep.subr.bf16.mxu0 0
        %2655 = vmatpush1.bf16.msra.mxu0 0
        %2656 = vmatprep.subr.bf16.mxu0 0
        %2657 = vmatpush1.bf16.msra.mxu0 0
        %2658 = vmatprep.subr.bf16.mxu0 0
        %2659 = vmatpush1.bf16.msra.mxu0 0
        %2660 = vmatprep.subr.bf16.mxu0 0
        %2661 = vmatpush1.bf16.msra.mxu0 0
        %2662 = vmatprep.subr.bf16.mxu0 0
        %2663 = vmatpush1.bf16.msra.mxu0 0
        %2664 = vmatprep.mubr.bf16.mxu0 0
        %2665 = vmatmul.mubr.bf16.gmra.mrb[0].mxu0 %v1169
        %v2666 = vpop.f32.mrb[0].mxu0
        %v2667 = vadd.f32 %v2618, %v2666
        %v2668 = vpop.f32.mrb[0].mxu0
        %v2669 = vpop.f32.mrb[0].mxu0
        %v2670 = vadd.f32 %v2618, %v2669
        %v2671 = vpop.f32.mrb[0].mxu0
        %2672 = vdwg.mxu0
        %s2673 = scalar_lea.vmem %s1031, 48
        %v2674 = vld [vmem:[%s2673] sm:$0xf]
        %v2675 = vld [vmem:[%s2673 + $0x4] sm:$0xf]
        %v2676 = vld [vmem:[%s2673 + $0x8] sm:$0xf]
        %v2677 = vld [vmem:[%s2673 + $0xc] sm:$0xf]
        %s2678 = scalar_lea.vmem %s1035, 3
        %v2679 = vld [vmem:[%s2678] sm:$0x1]
        %v2681 = vlaneseq
        %v2682 = vshrl.u32 %v2681, 7
        %v2683 = vsub.s32 0, %v2682
        %v2684 = vrot.slane %v2679, %v2683
        %v2690 = vunpack.c.l.b16 %v2674
        %v2691 = vunpack.c.l.b16 %v2675
        %v2692 = vunpack.c.l.b16 %v2676
        %v2693 = vunpack.c.l.b16 %v2677
        %v2694 = vpack.c.b16 %v2691, %v2690
        %v2695 = vpack.c.b16 %v2693, %v2692
        %2698 = vmatprep.subr.bf16.mxu0 0
        %2699 = vmatpush1.bf16.msra.mxu0 %v2694
        %2700 = vmatprep.subr.bf16.mxu0 0
        %2701 = vmatpush1.bf16.msra.mxu0 %v2695
        %2702 = vmatprep.subr.bf16.mxu0 0
        %2703 = vmatpush1.bf16.msra.mxu0 0
        %2704 = vmatprep.subr.bf16.mxu0 0
        %2705 = vmatpush1.bf16.msra.mxu0 0
        %2706 = vmatprep.subr.bf16.mxu0 0
        %2707 = vmatpush1.bf16.msra.mxu0 0
        %2708 = vmatprep.subr.bf16.mxu0 0
        %2709 = vmatpush1.bf16.msra.mxu0 0
        %2710 = vmatprep.subr.bf16.mxu0 0
        %2711 = vmatpush1.bf16.msra.mxu0 0
        %2712 = vmatprep.subr.bf16.mxu0 0
        %2713 = vmatpush1.bf16.msra.mxu0 0
        %2714 = vmatprep.subr.bf16.mxu0 0
        %2715 = vmatpush1.bf16.msra.mxu0 0
        %2716 = vmatprep.subr.bf16.mxu0 0
        %2717 = vmatpush1.bf16.msra.mxu0 0
        %2718 = vmatprep.subr.bf16.mxu0 0
        %2719 = vmatpush1.bf16.msra.mxu0 0
        %2720 = vmatprep.subr.bf16.mxu0 0
        %2721 = vmatpush1.bf16.msra.mxu0 0
        %2722 = vmatprep.subr.bf16.mxu0 0
        %2723 = vmatpush1.bf16.msra.mxu0 0
        %2724 = vmatprep.subr.bf16.mxu0 0
        %2725 = vmatpush1.bf16.msra.mxu0 0
        %2726 = vmatprep.subr.bf16.mxu0 0
        %2727 = vmatpush1.bf16.msra.mxu0 0
        %2728 = vmatprep.subr.bf16.mxu0 0
        %2729 = vmatpush1.bf16.msra.mxu0 0
        %2730 = vmatprep.mubr.bf16.mxu0 0
        %2731 = vmatmul.mubr.bf16.gmra.mrb[0].mxu0 %v1169
        %v2732 = vpop.f32.mrb[0].mxu0
        %v2733 = vadd.f32 %v2684, %v2732
        %v2734 = vpop.f32.mrb[0].mxu0
        %v2735 = vpop.f32.mrb[0].mxu0
        %v2736 = vadd.f32 %v2684, %v2735
        %v2737 = vpop.f32.mrb[0].mxu0
        %2738 = vdwg.mxu0
        %s2739 = scalar_lea.vmem %s1040, 48
        %v2740 = vld [vmem:[%s2739] sm:$0xf]
        %v2741 = vld [vmem:[%s2739 + $0x4] sm:$0xf]
        %v2742 = vld [vmem:[%s2739 + $0x8] sm:$0xf]
        %v2743 = vld [vmem:[%s2739 + $0xc] sm:$0xf]
        %s2744 = scalar_lea.vmem %s1044, 3
        %v2745 = vld [vmem:[%s2744] sm:$0x1]
        %v2747 = vlaneseq
        %v2748 = vshrl.u32 %v2747, 7
        %v2749 = vsub.s32 0, %v2748
        %v2750 = vrot.slane %v2745, %v2749
        %v2756 = vunpack.c.l.b16 %v2740
        %v2757 = vunpack.c.l.b16 %v2741
        %v2758 = vunpack.c.l.b16 %v2742
        %v2759 = vunpack.c.l.b16 %v2743
        %v2760 = vpack.c.b16 %v2757, %v2756
        %v2761 = vpack.c.b16 %v2759, %v2758
        %2764 = vmatprep.subr.bf16.mxu0 0
        %2765 = vmatpush1.bf16.msra.mxu0 %v2760
        %2766 = vmatprep.subr.bf16.mxu0 0
        %2767 = vmatpush1.bf16.msra.mxu0 %v2761
        %2768 = vmatprep.subr.bf16.mxu0 0
        %2769 = vmatpush1.bf16.msra.mxu0 0
        %2770 = vmatprep.subr.bf16.mxu0 0
        %2771 = vmatpush1.bf16.msra.mxu0 0
        %2772 = vmatprep.subr.bf16.mxu0 0
        %2773 = vmatpush1.bf16.msra.mxu0 0
        %2774 = vmatprep.subr.bf16.mxu0 0
        %2775 = vmatpush1.bf16.msra.mxu0 0
        %2776 = vmatprep.subr.bf16.mxu0 0
        %2777 = vmatpush1.bf16.msra.mxu0 0
        %2778 = vmatprep.subr.bf16.mxu0 0
        %2779 = vmatpush1.bf16.msra.mxu0 0
        %2780 = vmatprep.subr.bf16.mxu0 0
        %2781 = vmatpush1.bf16.msra.mxu0 0
        %2782 = vmatprep.subr.bf16.mxu0 0
        %2783 = vmatpush1.bf16.msra.mxu0 0
        %2784 = vmatprep.subr.bf16.mxu0 0
        %2785 = vmatpush1.bf16.msra.mxu0 0
        %2786 = vmatprep.subr.bf16.mxu0 0
        %2787 = vmatpush1.bf16.msra.mxu0 0
        %2788 = vmatprep.subr.bf16.mxu0 0
        %2789 = vmatpush1.bf16.msra.mxu0 0
        %2790 = vmatprep.subr.bf16.mxu0 0
        %2791 = vmatpush1.bf16.msra.mxu0 0
        %2792 = vmatprep.subr.bf16.mxu0 0
        %2793 = vmatpush1.bf16.msra.mxu0 0
        %2794 = vmatprep.subr.bf16.mxu0 0
        %2795 = vmatpush1.bf16.msra.mxu0 0
        %2796 = vmatprep.mubr.bf16.mxu0 0
        %2797 = vmatmul.mubr.bf16.gmra.mrb[0].mxu0 %v1169
        %v2798 = vpop.f32.mrb[0].mxu0
        %v2799 = vadd.f32 %v2750, %v2798
        %v2800 = vpop.f32.mrb[0].mxu0
        %v2801 = vpop.f32.mrb[0].mxu0
        %v2802 = vadd.f32 %v2750, %v2801
        %v2803 = vpop.f32.mrb[0].mxu0
        %2804 = vdwg.mxu0
        %v2805 = vpack.c.bf16 %v2670, %v2667
        %v2806 = vpack.c.bf16 %v2736, %v2733
        %v2807 = vpack.c.bf16 %v2802, %v2799
        %v2809 = vsel %vm1343, %v2805, 0
        %v2812 = vsel %vm1343, %v2806, 0
        %2814 = vmatprep.subr.bf16.mxu0 0
        %2815 = vmatpush1.bf16.xpose.msra.mxu0 %v2812
        %2816 = vmatprep.subr.bf16.mxu0 0
        %2817 = vmatpush1.bf16.xpose.msra.mxu0 0
        %2818 = vmatprep.subr.bf16.mxu0 0
        %2819 = vmatpush1.bf16.xpose.msra.mxu0 0
        %2820 = vmatprep.subr.bf16.mxu0 0
        %2821 = vmatpush1.bf16.xpose.msra.mxu0 0
        %2822 = vmatprep.subr.bf16.mxu0 0
        %2823 = vmatpush1.bf16.xpose.msra.mxu0 0
        %2824 = vmatprep.subr.bf16.mxu0 0
        %2825 = vmatpush1.bf16.xpose.msra.mxu0 0
        %2826 = vmatprep.subr.bf16.mxu0 0
        %2827 = vmatpush1.bf16.xpose.msra.mxu0 0
        %2828 = vmatprep.subr.bf16.mxu0 0
        %2829 = vmatpush1.bf16.xpose.msra.mxu0 0
        %2830 = vmatprep.subr.bf16.mxu0 0
        %2831 = vmatpush1.bf16.xpose.msra.mxu0 0
        %2832 = vmatprep.subr.bf16.mxu0 0
        %2833 = vmatpush1.bf16.xpose.msra.mxu0 0
        %2834 = vmatprep.subr.bf16.mxu0 0
        %2835 = vmatpush1.bf16.xpose.msra.mxu0 0
        %2836 = vmatprep.subr.bf16.mxu0 0
        %2837 = vmatpush1.bf16.xpose.msra.mxu0 0
        %2838 = vmatprep.subr.bf16.mxu0 0
        %2839 = vmatpush1.bf16.xpose.msra.mxu0 0
        %2840 = vmatprep.subr.bf16.mxu0 0
        %2841 = vmatpush1.bf16.xpose.msra.mxu0 0
        %2842 = vmatprep.subr.bf16.mxu0 0
        %2843 = vmatpush1.bf16.xpose.msra.mxu0 0
        %2844 = vmatprep.subr.bf16.mxu0 0
        %2845 = vmatpush1.bf16.xpose.msra.mxu0 0
        %2846 = vmatprep.mubr.bf16.mxu0 0
        %2847 = vmatmul.mubr.bf16.gmra.mrb[0].mxu0 %v2809
        %v2848 = vpop.f32.mrb[0].mxu0
        %v2849 = vadd.f32 0.0, %v2848
        %v2850 = vpop.f32.mrb[0].mxu0
        %v2851 = vpop.f32.mrb[0].mxu0
        %v2852 = vpop.f32.mrb[0].mxu0
        %2853 = vdwg.mxu0
        %v2854 = vmul.f32 %v2849, 0.35355338
        %v2855 = vld [vmem:[%s1] sm:$0x1]
        %v2857 = vlaneseq
        %v2858 = vshrl.u32 %v2857, 7
        %v2859 = vsub.s32 0, %v2858
        %v2860 = vrot.slane %v2855, %v2859
        %v2862 = vadd.f32 %v2854, %v2860
        %v2863 = vsel %vm1343, %v2862, -inf
        %2864 = vmax.xlane.f32.xlu0 %v2863
        %v2865 = vpop.xlane.xlu0 %2864
        %v2866 = vsub.f32 %v2862, %v2865
        %v2867 = vmul.f32 %v2866, 1.442695
        %v2868 = vpow.pop %v2867
        %v2869 = vsel %vm1343, %v2868, 0.0
        %2870 = vadd.xlane.f32.xlu0 %v2869
        %v2871 = vpop.xlane.xlu0 %2870
        %v2872 = vrcp.pop %v2871
        %v2873 = vmul.f32 %v2868, %v2872
        %v2874 = vpack.c.bf16 %v2873, %v2873
        %v2876 = vsel %vm1343, %v2874, 0
        %v2879 = vsel %vm1414, %v2807, 0
        %2881 = vmatprep.subr.bf16.mxu0 0
        %2882 = vmatpush1.bf16.msra.mxu0 %v2879
        %2883 = vmatprep.subr.bf16.mxu0 0
        %2884 = vmatpush1.bf16.msra.mxu0 0
        %2885 = vmatprep.subr.bf16.mxu0 0
        %2886 = vmatpush1.bf16.msra.mxu0 0
        %2887 = vmatprep.subr.bf16.mxu0 0
        %2888 = vmatpush1.bf16.msra.mxu0 0
        %2889 = vmatprep.subr.bf16.mxu0 0
        %2890 = vmatpush1.bf16.msra.mxu0 0
        %2891 = vmatprep.subr.bf16.mxu0 0
        %2892 = vmatpush1.bf16.msra.mxu0 0
        %2893 = vmatprep.subr.bf16.mxu0 0
        %2894 = vmatpush1.bf16.msra.mxu0 0
        %2895 = vmatprep.subr.bf16.mxu0 0
        %2896 = vmatpush1.bf16.msra.mxu0 0
        %2897 = vmatprep.subr.bf16.mxu0 0
        %2898 = vmatpush1.bf16.msra.mxu0 0
        %2899 = vmatprep.subr.bf16.mxu0 0
        %2900 = vmatpush1.bf16.msra.mxu0 0
        %2901 = vmatprep.subr.bf16.mxu0 0
        %2902 = vmatpush1.bf16.msra.mxu0 0
        %2903 = vmatprep.subr.bf16.mxu0 0
        %2904 = vmatpush1.bf16.msra.mxu0 0
        %2905 = vmatprep.subr.bf16.mxu0 0
        %2906 = vmatpush1.bf16.msra.mxu0 0
        %2907 = vmatprep.subr.bf16.mxu0 0
        %2908 = vmatpush1.bf16.msra.mxu0 0
        %2909 = vmatprep.subr.bf16.mxu0 0
        %2910 = vmatpush1.bf16.msra.mxu0 0
        %2911 = vmatprep.subr.bf16.mxu0 0
        %2912 = vmatpush1.bf16.msra.mxu0 0
        %2913 = vmatprep.mubr.bf16.mxu0 0
        %2914 = vmatmul.mubr.bf16.gmra.mrb[0].mxu0 %v2876
        %v2915 = vpop.f32.mrb[0].mxu0
        %v2916 = vadd.f32 0.0, %v2915
        %v2917 = vpop.f32.mrb[0].mxu0
        %v2918 = vpop.f32.mrb[0].mxu0
        %v2919 = vpop.f32.mrb[0].mxu0
        %2920 = vdwg.mxu0
        %2921 = vst.msk [vmem:[#allocation3] sm:$0xff] %vm1343, %v2916
        %v2923 = vrot.slane %v2805, 4
        %v2925 = vrot.slane %v2806, 4
        %v2927 = vsel %vm1343, %v2923, 0
        %v2930 = vsel %vm1343, %v2925, 0
        %2932 = vmatprep.subr.bf16.mxu0 0
        %2933 = vmatpush1.bf16.xpose.msra.mxu0 %v2930
        %2934 = vmatprep.subr.bf16.mxu0 0
        %2935 = vmatpush1.bf16.xpose.msra.mxu0 0
        %2936 = vmatprep.subr.bf16.mxu0 0
        %2937 = vmatpush1.bf16.xpose.msra.mxu0 0
        %2938 = vmatprep.subr.bf16.mxu0 0
        %2939 = vmatpush1.bf16.xpose.msra.mxu0 0
        %2940 = vmatprep.subr.bf16.mxu0 0
        %2941 = vmatpush1.bf16.xpose.msra.mxu0 0
        %2942 = vmatprep.subr.bf16.mxu0 0
        %2943 = vmatpush1.bf16.xpose.msra.mxu0 0
        %2944 = vmatprep.subr.bf16.mxu0 0
        %2945 = vmatpush1.bf16.xpose.msra.mxu0 0
        %2946 = vmatprep.subr.bf16.mxu0 0
        %2947 = vmatpush1.bf16.xpose.msra.mxu0 0
        %2948 = vmatprep.subr.bf16.mxu0 0
        %2949 = vmatpush1.bf16.xpose.msra.mxu0 0
        %2950 = vmatprep.subr.bf16.mxu0 0
        %2951 = vmatpush1.bf16.xpose.msra.mxu0 0
        %2952 = vmatprep.subr.bf16.mxu0 0
        %2953 = vmatpush1.bf16.xpose.msra.mxu0 0
        %2954 = vmatprep.subr.bf16.mxu0 0
        %2955 = vmatpush1.bf16.xpose.msra.mxu0 0
        %2956 = vmatprep.subr.bf16.mxu0 0
        %2957 = vmatpush1.bf16.xpose.msra.mxu0 0
        %2958 = vmatprep.subr.bf16.mxu0 0
        %2959 = vmatpush1.bf16.xpose.msra.mxu0 0
        %2960 = vmatprep.subr.bf16.mxu0 0
        %2961 = vmatpush1.bf16.xpose.msra.mxu0 0
        %2962 = vmatprep.subr.bf16.mxu0 0
        %2963 = vmatpush1.bf16.xpose.msra.mxu0 0
        %2964 = vmatprep.mubr.bf16.mxu0 0
        %2965 = vmatmul.mubr.bf16.gmra.mrb[0].mxu0 %v2927
        %v2966 = vpop.f32.mrb[0].mxu0
        %v2967 = vadd.f32 0.0, %v2966
        %v2968 = vpop.f32.mrb[0].mxu0
        %v2969 = vpop.f32.mrb[0].mxu0
        %v2970 = vpop.f32.mrb[0].mxu0
        %2971 = vdwg.mxu0
        %v2972 = vmul.f32 %v2967, 0.35355338
        %v2973 = vld [vmem:[%s1510] sm:$0x1]
        %v2975 = vlaneseq
        %v2976 = vshrl.u32 %v2975, 7
        %v2977 = vsub.s32 0, %v2976
        %v2978 = vrot.slane %v2973, %v2977
        %v2980 = vadd.f32 %v2972, %v2978
        %v2981 = vsel %vm1343, %v2980, -inf
        %2982 = vmax.xlane.f32.xlu0 %v2981
        %v2983 = vpop.xlane.xlu0 %2982
        %v2984 = vsub.f32 %v2980, %v2983
        %v2985 = vmul.f32 %v2984, 1.442695
        %v2986 = vpow.pop %v2985
        %v2987 = vsel %vm1343, %v2986, 0.0
        %2988 = vadd.xlane.f32.xlu0 %v2987
        %v2989 = vpop.xlane.xlu0 %2988
        %v2990 = vrcp.pop %v2989
        %v2991 = vmul.f32 %v2986, %v2990
        %v2992 = vpack.c.bf16 %v2991, %v2991
        %v2994 = vrot.slane %v2807, 4
        %v2996 = vsel %vm1343, %v2992, 0
        %v2999 = vsel %vm1414, %v2994, 0
        %3001 = vmatprep.subr.bf16.mxu0 0
        %3002 = vmatpush1.bf16.msra.mxu0 %v2999
        %3003 = vmatprep.subr.bf16.mxu0 0
        %3004 = vmatpush1.bf16.msra.mxu0 0
        %3005 = vmatprep.subr.bf16.mxu0 0
        %3006 = vmatpush1.bf16.msra.mxu0 0
        %3007 = vmatprep.subr.bf16.mxu0 0
        %3008 = vmatpush1.bf16.msra.mxu0 0
        %3009 = vmatprep.subr.bf16.mxu0 0
        %3010 = vmatpush1.bf16.msra.mxu0 0
        %3011 = vmatprep.subr.bf16.mxu0 0
        %3012 = vmatpush1.bf16.msra.mxu0 0
        %3013 = vmatprep.subr.bf16.mxu0 0
        %3014 = vmatpush1.bf16.msra.mxu0 0
        %3015 = vmatprep.subr.bf16.mxu0 0
        %3016 = vmatpush1.bf16.msra.mxu0 0
        %3017 = vmatprep.subr.bf16.mxu0 0
        %3018 = vmatpush1.bf16.msra.mxu0 0
        %3019 = vmatprep.subr.bf16.mxu0 0
        %3020 = vmatpush1.bf16.msra.mxu0 0
        %3021 = vmatprep.subr.bf16.mxu0 0
        %3022 = vmatpush1.bf16.msra.mxu0 0
        %3023 = vmatprep.subr.bf16.mxu0 0
        %3024 = vmatpush1.bf16.msra.mxu0 0
        %3025 = vmatprep.subr.bf16.mxu0 0
        %3026 = vmatpush1.bf16.msra.mxu0 0
        %3027 = vmatprep.subr.bf16.mxu0 0
        %3028 = vmatpush1.bf16.msra.mxu0 0
        %3029 = vmatprep.subr.bf16.mxu0 0
        %3030 = vmatpush1.bf16.msra.mxu0 0
        %3031 = vmatprep.subr.bf16.mxu0 0
        %3032 = vmatpush1.bf16.msra.mxu0 0
        %3033 = vmatprep.mubr.bf16.mxu0 0
        %3034 = vmatmul.mubr.bf16.gmra.mrb[0].mxu0 %v2996
        %v3035 = vpop.f32.mrb[0].mxu0
        %v3036 = vadd.f32 0.0, %v3035
        %v3037 = vpop.f32.mrb[0].mxu0
        %v3038 = vpop.f32.mrb[0].mxu0
        %v3039 = vpop.f32.mrb[0].mxu0
        %3040 = vdwg.mxu0
        %3041 = vst.msk [vmem:[#allocation3 + $0x8] sm:$0xff] %vm1343, %v3036
        %v3042 = vld [vmem:[#allocation3] sm:$0xff]
        %v3043 = vld [vmem:[#allocation3 + $0x8] sm:$0xff]
        %v3044 = vpack.c.bf16 %v3043, %v3042
        %s3045 = scalar_lea.vmem %s1049, 12
        %v3046 = vld [vmem:[%s3045] sm:$0xf]
        %v3048 = vsel %vm1343, %v3044, 0
        %v3051 = vsel %vm1414, %v3046, 0
        %3053 = vmatprep.subr.bf16.mxu0 0
        %3054 = vmatpush1.bf16.msra.mxu0 %v3051
        %3055 = vmatprep.subr.bf16.mxu0 0
        %3056 = vmatpush1.bf16.msra.mxu0 0
        %3057 = vmatprep.subr.bf16.mxu0 0
        %3058 = vmatpush1.bf16.msra.mxu0 0
        %3059 = vmatprep.subr.bf16.mxu0 0
        %3060 = vmatpush1.bf16.msra.mxu0 0
        %3061 = vmatprep.subr.bf16.mxu0 0
        %3062 = vmatpush1.bf16.msra.mxu0 0
        %3063 = vmatprep.subr.bf16.mxu0 0
        %3064 = vmatpush1.bf16.msra.mxu0 0
        %3065 = vmatprep.subr.bf16.mxu0 0
        %3066 = vmatpush1.bf16.msra.mxu0 0
        %3067 = vmatprep.subr.bf16.mxu0 0
        %3068 = vmatpush1.bf16.msra.mxu0 0
        %3069 = vmatprep.subr.bf16.mxu0 0
        %3070 = vmatpush1.bf16.msra.mxu0 0
        %3071 = vmatprep.subr.bf16.mxu0 0
        %3072 = vmatpush1.bf16.msra.mxu0 0
        %3073 = vmatprep.subr.bf16.mxu0 0
        %3074 = vmatpush1.bf16.msra.mxu0 0
        %3075 = vmatprep.subr.bf16.mxu0 0
        %3076 = vmatpush1.bf16.msra.mxu0 0
        %3077 = vmatprep.subr.bf16.mxu0 0
        %3078 = vmatpush1.bf16.msra.mxu0 0
        %3079 = vmatprep.subr.bf16.mxu0 0
        %3080 = vmatpush1.bf16.msra.mxu0 0
        %3081 = vmatprep.subr.bf16.mxu0 0
        %3082 = vmatpush1.bf16.msra.mxu0 0
        %3083 = vmatprep.subr.bf16.mxu0 0
        %3084 = vmatpush1.bf16.msra.mxu0 0
        %3085 = vmatprep.mubr.bf16.mxu0 0
        %3086 = vmatmul.mubr.bf16.gmra.mrb[0].mxu0 %v3048
        %v3087 = vpop.f32.mrb[0].mxu0
        %v3088 = vadd.f32 0.0, %v3087
        %v3089 = vpop.f32.mrb[0].mxu0
        %v3090 = vpop.f32.mrb[0].mxu0
        %v3091 = vadd.f32 0.0, %v3090
        %v3092 = vpop.f32.mrb[0].mxu0
        %3093 = vdwg.mxu0
        %v3094 = vadd.f32 %v2605, %v3088
        %v3095 = vadd.f32 %v2606, %v3091
        %v3096 = vld [vmem:[%s1052] sm:$0x1]
        %v3098 = vlaneseq
        %v3099 = vshrl.u32 %v3098, 7
        %v3100 = vsub.s32 0, %v3099
        %v3101 = vrot.slane %v3096, %v3100
        %v3103 = vadd.f32 %v3094, %v3101
        %v3104 = vadd.f32 %v3095, %v3101
        %v3105 = vadd.f32 %v1141, %v3103
        %v3106 = vadd.f32 %v1142, %v3104
        %v3107 = vld [vmem:[%s1055] sm:$0x1]
        %v3108 = vld [vmem:[%s1058] sm:$0x1]
        %v3109 = vsel %vm1167, %v3105, 0.0
        %3110 = vadd.xlane.f32.xlu0 %v3109
        %v3111 = vpop.xlane.xlu0 %3110
        %v3112 = vsel %vm1167, %v3106, 0.0
        %3113 = vadd.xlane.f32.xlu0 %v3112
        %v3114 = vpop.xlane.xlu0 %3113
        %v3115 = vmul.f32 %v3105, %v3105
        %v3116 = vmul.f32 %v3106, %v3106
        %v3117 = vsel %vm1167, %v3115, 0.0
        %3118 = vadd.xlane.f32.xlu0 %v3117
        %v3119 = vpop.xlane.xlu0 %3118
        %v3120 = vsel %vm1167, %v3116, 0.0
        %3121 = vadd.xlane.f32.xlu0 %v3120
        %v3122 = vpop.xlane.xlu0 %3121
        %v3123 = vmul.f32 %v3111, 0.03125
        %v3124 = vmul.f32 %v3114, 0.03125
        %v3125 = vmul.f32 %v3119, 0.03125
        %v3126 = vmul.f32 %v3122, 0.03125
        %v3127 = vmul.f32 %v3123, %v3123
        %v3128 = vmul.f32 %v3124, %v3124
        %v3129 = vsub.f32 %v3125, %v3127
        %v3130 = vsub.f32 %v3126, %v3128
        %v3131 = vmax.f32 %v3129, 0.0
        %v3132 = vmax.f32 %v3130, 0.0
        %v3133 = vsub.f32 %v3105, %v3123
        %v3134 = vsub.f32 %v3106, %v3124
        %v3135 = vadd.f32 %v3131, 1e-12
        %v3136 = vadd.f32 %v3132, 1e-12
        %v3137 = vrsqrt.pop %v3135
        %v3138 = vrsqrt.pop %v3136
        %v3139 = vmul.f32 %v3133, %v3137
        %v3140 = vmul.f32 %v3134, %v3138
        %v3142 = vlaneseq
        %v3143 = vshrl.u32 %v3142, 7
        %v3144 = vsub.s32 0, %v3143
        %v3145 = vrot.slane %v3107, %v3144
        %v3147 = vmul.f32 %v3139, %v3145
        %v3148 = vmul.f32 %v3140, %v3145
        %v3150 = vlaneseq
        %v3151 = vshrl.u32 %v3150, 7
        %v3152 = vsub.s32 0, %v3151
        %v3153 = vrot.slane %v3108, %v3152
        %v3155 = vadd.f32 %v3147, %v3153
        %v3156 = vadd.f32 %v3148, %v3153
        %v3157 = vpack.c.bf16 %v3156, %v3155
        %v3158 = vld [vmem:[%s1063] sm:$0xf]
        %v3159 = vld [vmem:[%s1063 + $0x4] sm:$0xf]
        %v3160 = vld [vmem:[%s1063 + $0x8] sm:$0xf]
        %v3161 = vld [vmem:[%s1063 + $0xc] sm:$0xf]
        %v3162 = vld [vmem:[%s1066] sm:$0x1]
        %v3164 = vlaneseq
        %v3165 = vshrl.u32 %v3164, 7
        %v3166 = vsub.s32 0, %v3165
        %v3167 = vrot.slane %v3162, %v3166
        %v3173 = vunpack.c.l.b16 %v3158
        %v3174 = vunpack.c.l.b16 %v3159
        %v3175 = vunpack.c.l.b16 %v3160
        %v3176 = vunpack.c.l.b16 %v3161
        %v3177 = vpack.c.b16 %v3174, %v3173
        %v3178 = vpack.c.b16 %v3176, %v3175
        %v3182 = vsel %vm1167, %v3157, 0
        %3184 = vmatprep.subr.bf16.mxu0 0
        %3185 = vmatpush1.bf16.msra.mxu0 %v3177
        %3186 = vmatprep.subr.bf16.mxu0 0
        %3187 = vmatpush1.bf16.msra.mxu0 %v3178
        %3188 = vmatprep.subr.bf16.mxu0 0
        %3189 = vmatpush1.bf16.msra.mxu0 0
        %3190 = vmatprep.subr.bf16.mxu0 0
        %3191 = vmatpush1.bf16.msra.mxu0 0
        %3192 = vmatprep.subr.bf16.mxu0 0
        %3193 = vmatpush1.bf16.msra.mxu0 0
        %3194 = vmatprep.subr.bf16.mxu0 0
        %3195 = vmatpush1.bf16.msra.mxu0 0
        %3196 = vmatprep.subr.bf16.mxu0 0
        %3197 = vmatpush1.bf16.msra.mxu0 0
        %3198 = vmatprep.subr.bf16.mxu0 0
        %3199 = vmatpush1.bf16.msra.mxu0 0
        %3200 = vmatprep.subr.bf16.mxu0 0
        %3201 = vmatpush1.bf16.msra.mxu0 0
        %3202 = vmatprep.subr.bf16.mxu0 0
        %3203 = vmatpush1.bf16.msra.mxu0 0
        %3204 = vmatprep.subr.bf16.mxu0 0
        %3205 = vmatpush1.bf16.msra.mxu0 0
        %3206 = vmatprep.subr.bf16.mxu0 0
        %3207 = vmatpush1.bf16.msra.mxu0 0
        %3208 = vmatprep.subr.bf16.mxu0 0
        %3209 = vmatpush1.bf16.msra.mxu0 0
        %3210 = vmatprep.subr.bf16.mxu0 0
        %3211 = vmatpush1.bf16.msra.mxu0 0
        %3212 = vmatprep.subr.bf16.mxu0 0
        %3213 = vmatpush1.bf16.msra.mxu0 0
        %3214 = vmatprep.subr.bf16.mxu0 0
        %3215 = vmatpush1.bf16.msra.mxu0 0
        %3216 = vmatprep.mubr.bf16.mxu0 0
        %3217 = vmatmul.mubr.bf16.gmra.mrb[0].mxu0 %v3182
        %v3218 = vpop.f32.mrb[0].mxu0
        %v3219 = vadd.f32 %v3167, %v3218
        %v3220 = vpop.f32.mrb[0].mxu0
        %v3221 = vpop.f32.mrb[0].mxu0
        %v3222 = vadd.f32 %v3167, %v3221
        %v3223 = vpop.f32.mrb[0].mxu0
        %3224 = vdwg.mxu0
        %v3225 = vmul.f32 %v3219, %v3219
        %v3226 = vmul.f32 %v3222, %v3222
        %v3227 = vmul.f32 %v3219, %v3225
        %v3228 = vmul.f32 %v3222, %v3226
        %v3229 = vmul.f32 %v3227, 0.044715
        %v3230 = vmul.f32 %v3228, 0.044715
        %v3231 = vadd.f32 %v3219, %v3229
        %v3232 = vadd.f32 %v3222, %v3230
        %v3233 = vmul.f32 %v3231, 0.7978846
        %v3234 = vmul.f32 %v3232, 0.7978846
        %v3235 = vtanh.pop %v3233
        %v3236 = vtanh.pop %v3234
        %v3237 = vadd.f32 %v3235, 1.0
        %v3238 = vadd.f32 %v3236, 1.0
        %v3239 = vmul.f32 %v3237, 0.5
        %v3240 = vmul.f32 %v3238, 0.5
        %v3241 = vmul.f32 %v3219, %v3239
        %v3242 = vmul.f32 %v3222, %v3240
        %v3243 = vpack.c.bf16 %v3242, %v3241
        %v3244 = vld [vmem:[%s1071] sm:$0xf]
        %v3245 = vld [vmem:[%s1071 + $0x4] sm:$0xf]
        %v3246 = vld [vmem:[%s1071 + $0x8] sm:$0xf]
        %v3247 = vld [vmem:[%s1071 + $0xc] sm:$0xf]
        %v3248 = vld [vmem:[%s1071 + $0x10] sm:$0xf]
        %v3249 = vld [vmem:[%s1071 + $0x14] sm:$0xf]
        %v3250 = vld [vmem:[%s1071 + $0x18] sm:$0xf]
        %v3251 = vld [vmem:[%s1071 + $0x1c] sm:$0xf]
        %v3252 = vld [vmem:[%s1074] sm:$0x1]
        %v3254 = vlaneseq
        %v3255 = vshrl.u32 %v3254, 7
        %v3256 = vsub.s32 0, %v3255
        %v3257 = vrot.slane %v3252, %v3256
        %v3267 = vunpack.c.l.b16 %v3244
        %v3268 = vunpack.c.l.b16 %v3245
        %v3269 = vunpack.c.l.b16 %v3246
        %v3270 = vunpack.c.l.b16 %v3247
        %v3271 = vunpack.c.l.b16 %v3248
        %v3272 = vunpack.c.l.b16 %v3249
        %v3273 = vunpack.c.l.b16 %v3250
        %v3274 = vunpack.c.l.b16 %v3251
        %v3275 = vpack.c.b16 %v3268, %v3267
        %v3276 = vpack.c.b16 %v3270, %v3269
        %v3277 = vpack.c.b16 %v3272, %v3271
        %v3278 = vpack.c.b16 %v3274, %v3273
        %vm3283 = vcmask 523264
        %v3285 = vsel %vm3283, %v3243, 0
        %3287 = vmatprep.subr.bf16.mxu0 0
        %3288 = vmatpush1.bf16.msra.mxu0 %v3275
        %3289 = vmatprep.subr.bf16.mxu0 0
        %3290 = vmatpush1.bf16.msra.mxu0 %v3276
        %3291 = vmatprep.subr.bf16.mxu0 0
        %3292 = vmatpush1.bf16.msra.mxu0 %v3277
        %3293 = vmatprep.subr.bf16.mxu0 0
        %3294 = vmatpush1.bf16.msra.mxu0 %v3278
        %3295 = vmatprep.subr.bf16.mxu0 0
        %3296 = vmatpush1.bf16.msra.mxu0 0
        %3297 = vmatprep.subr.bf16.mxu0 0
        %3298 = vmatpush1.bf16.msra.mxu0 0
        %3299 = vmatprep.subr.bf16.mxu0 0
        %3300 = vmatpush1.bf16.msra.mxu0 0
        %3301 = vmatprep.subr.bf16.mxu0 0
        %3302 = vmatpush1.bf16.msra.mxu0 0
        %3303 = vmatprep.subr.bf16.mxu0 0
        %3304 = vmatpush1.bf16.msra.mxu0 0
        %3305 = vmatprep.subr.bf16.mxu0 0
        %3306 = vmatpush1.bf16.msra.mxu0 0
        %3307 = vmatprep.subr.bf16.mxu0 0
        %3308 = vmatpush1.bf16.msra.mxu0 0
        %3309 = vmatprep.subr.bf16.mxu0 0
        %3310 = vmatpush1.bf16.msra.mxu0 0
        %3311 = vmatprep.subr.bf16.mxu0 0
        %3312 = vmatpush1.bf16.msra.mxu0 0
        %3313 = vmatprep.subr.bf16.mxu0 0
        %3314 = vmatpush1.bf16.msra.mxu0 0
        %3315 = vmatprep.subr.bf16.mxu0 0
        %3316 = vmatpush1.bf16.msra.mxu0 0
        %3317 = vmatprep.subr.bf16.mxu0 0
        %3318 = vmatpush1.bf16.msra.mxu0 0
        %3319 = vmatprep.mubr.bf16.mxu0 0
        %3320 = vmatmul.mubr.bf16.gmra.mrb[0].mxu0 %v3285
        %v3321 = vpop.f32.mrb[0].mxu0
        %v3322 = vadd.f32 %v3257, %v3321
        %v3323 = vpop.f32.mrb[0].mxu0
        %v3324 = vpop.f32.mrb[0].mxu0
        %v3325 = vadd.f32 %v3257, %v3324
        %v3326 = vpop.f32.mrb[0].mxu0
        %3327 = vdwg.mxu0
        %v3328 = vadd.f32 %v3155, %v3322
        %v3329 = vadd.f32 %v3156, %v3325
        %v3330 = vld [vmem:[%s1077] sm:$0x1]
        %v3331 = vld [vmem:[%s1080] sm:$0x1]
        %v3332 = vsel %vm1167, %v3328, 0.0
        %3333 = vadd.xlane.f32.xlu0 %v3332
        %v3334 = vpop.xlane.xlu0 %3333
        %v3335 = vsel %vm1167, %v3329, 0.0
        %3336 = vadd.xlane.f32.xlu0 %v3335
        %v3337 = vpop.xlane.xlu0 %3336
        %v3338 = vmul.f32 %v3328, %v3328
        %v3339 = vmul.f32 %v3329, %v3329
        %v3340 = vsel %vm1167, %v3338, 0.0
        %3341 = vadd.xlane.f32.xlu0 %v3340
        %v3342 = vpop.xlane.xlu0 %3341
        %v3343 = vsel %vm1167, %v3339, 0.0
        %3344 = vadd.xlane.f32.xlu0 %v3343
        %v3345 = vpop.xlane.xlu0 %3344
        %v3346 = vmul.f32 %v3334, 0.03125
        %v3347 = vmul.f32 %v3337, 0.03125
        %v3348 = vmul.f32 %v3342, 0.03125
        %v3349 = vmul.f32 %v3345, 0.03125
        %v3350 = vmul.f32 %v3346, %v3346
        %v3351 = vmul.f32 %v3347, %v3347
        %v3352 = vsub.f32 %v3348, %v3350
        %v3353 = vsub.f32 %v3349, %v3351
        %v3354 = vmax.f32 %v3352, 0.0
        %v3355 = vmax.f32 %v3353, 0.0
        %v3356 = vsub.f32 %v3328, %v3346
        %v3357 = vsub.f32 %v3329, %v3347
        %v3358 = vadd.f32 %v3354, 1e-12
        %v3359 = vadd.f32 %v3355, 1e-12
        %v3360 = vrsqrt.pop %v3358
        %v3361 = vrsqrt.pop %v3359
        %v3362 = vmul.f32 %v3356, %v3360
        %v3363 = vmul.f32 %v3357, %v3361
        %v3365 = vlaneseq
        %v3366 = vshrl.u32 %v3365, 7
        %v3367 = vsub.s32 0, %v3366
        %v3368 = vrot.slane %v3330, %v3367
        %v3370 = vmul.f32 %v3362, %v3368
        %v3371 = vmul.f32 %v3363, %v3368
        %v3373 = vlaneseq
        %v3374 = vshrl.u32 %v3373, 7
        %v3375 = vsub.s32 0, %v3374
        %v3376 = vrot.slane %v3331, %v3375
        %v3378 = vadd.f32 %v3370, %v3376
        %v3379 = vadd.f32 %v3371, %v3376
        %3380 = vst.msk [vmem:[#allocation2] sm:$0xff] %vm1167, %v3378
        %3381 = vst.msk [vmem:[#allocation2 + $0x8] sm:$0xff] %vm1167, %v3379
        %p3382 = scmp.eq.s32.totalorder %s40, 1
        // Predicated region
        $region137: #{bert_classifier_forward.1} parent=131 // pred_check
          %p3383 = pneg %p3382
        $region138: #{bert_classifier_forward.1} parent=131 // pred_check_branch
          %3385 = sbr.rel (%p3383) target = $region140
        $region139: #{bert_classifier_forward.1} parent=131 // pred_region
          %v3386 = vld [vmem:[#allocation2] sm:$0x1]
          %vm3387 = vcmask 253952
          %3388 = vst.msk [vmem:[#allocation4] sm:$0x1] %vm3387, %v3386
          %v3389 = vld [vmem:[#allocation2 + $0x8] sm:$0x1]
          %3390 = vst.msk [vmem:[#allocation4 + $0x1] sm:$0x1] %vm3387, %v3389
          %v3391 = vld [vmem:[#allocation4] sm:$0x3]
          %v3392 = vpack.c.bf16 %v3391, %v3391
          %v3393 = vld [vmem:[%s20] sm:$0xff]
          %v3394 = vld [vmem:[%s20 + $0x8] sm:$0xf]
          %v3395 = vld [vmem:[%s20 + $0xc] sm:$0xff]
          %v3396 = vld [vmem:[%s20 + $0x14] sm:$0xf]
          %v3397 = vld [vmem:[%s20 + $0x18] sm:$0xff]
          %v3398 = vld [vmem:[%s20 + $0x20] sm:$0xf]
          %v3399 = vld [vmem:[%s20 + $0x24] sm:$0xff]
          %v3400 = vld [vmem:[%s20 + $0x2c] sm:$0xf]
          %v3401 = vld [vmem:[%s21] sm:$0x7]
          %v3403 = vlaneseq
          %v3404 = vshrl.u32 %v3403, 7
          %v3405 = vsub.s32 0, %v3404
          %v3406 = vrot.slane %v3401, %v3405
          %v3407 = vlaneseq
          %v3408 = vshrl.u32 %v3407, 7
          %v3409 = vsub.s32 1, %v3408
          %v3410 = vrot.slane %v3401, %v3409
          %v3411 = vlaneseq
          %v3412 = vshrl.u32 %v3411, 7
          %v3413 = vsub.s32 2, %v3412
          %v3414 = vrot.slane %v3401, %v3413
          %v3426 = vunpack.c.l.b16 %v3393
          %v3427 = vunpack.c.h.b16 %v3393
          %v3428 = vunpack.c.l.b16 %v3394
          %v3429 = vunpack.c.l.b16 %v3395
          %v3430 = vunpack.c.h.b16 %v3395
          %v3431 = vunpack.c.l.b16 %v3396
          %v3432 = vunpack.c.l.b16 %v3397
          %v3433 = vunpack.c.h.b16 %v3397
          %v3434 = vunpack.c.l.b16 %v3398
          %v3435 = vunpack.c.l.b16 %v3399
          %v3436 = vunpack.c.h.b16 %v3399
          %v3437 = vunpack.c.l.b16 %v3400
          %v3438 = vpack.c.b16 %v3429, %v3426
          %v3439 = vpack.c.b16 %v3430, %v3427
          %v3440 = vpack.c.b16 %v3431, %v3428
          %v3441 = vpack.c.b16 %v3435, %v3432
          %v3442 = vpack.c.b16 %v3436, %v3433
          %v3443 = vpack.c.b16 %v3437, %v3434
          %v3451 = vsel %vm1167, %v3392, 0
          %3453 = vmatprep.subr.bf16.mxu0 %v3439
          %3454 = vmatpush1.bf16.msra.mxu0 %v3438
          %3455 = vmatprep.subr.bf16.mxu0 %v3442
          %3456 = vmatpush1.bf16.msra.mxu0 %v3441
          %3457 = vmatprep.subr.bf16.mxu0 0
          %3458 = vmatpush1.bf16.msra.mxu0 0
          %3459 = vmatprep.subr.bf16.mxu0 0
          %3460 = vmatpush1.bf16.msra.mxu0 0
          %3461 = vmatprep.subr.bf16.mxu0 0
          %3462 = vmatpush1.bf16.msra.mxu0 0
          %3463 = vmatprep.subr.bf16.mxu0 0
          %3464 = vmatpush1.bf16.msra.mxu0 0
          %3465 = vmatprep.subr.bf16.mxu0 0
          %3466 = vmatpush1.bf16.msra.mxu0 0
          %3467 = vmatprep.subr.bf16.mxu0 0
          %3468 = vmatpush1.bf16.msra.mxu0 0
          %3469 = vmatprep.subr.bf16.mxu0 0
          %3470 = vmatpush1.bf16.msra.mxu0 0
          %3471 = vmatprep.subr.bf16.mxu0 0
          %3472 = vmatpush1.bf16.msra.mxu0 0
          %3473 = vmatprep.subr.bf16.mxu0 0
          %3474 = vmatpush1.bf16.msra.mxu0 0
          %3475 = vmatprep.subr.bf16.mxu0 0
          %3476 = vmatpush1.bf16.msra.mxu0 0
          %3477 = vmatprep.subr.bf16.mxu0 0
          %3478 = vmatpush1.bf16.msra.mxu0 0
          %3479 = vmatprep.subr.bf16.mxu0 0
          %3480 = vmatpush1.bf16.msra.mxu0 0
          %3481 = vmatprep.subr.bf16.mxu0 0
          %3482 = vmatpush1.bf16.msra.mxu0 0
          %3483 = vmatprep.subr.bf16.mxu0 0
          %3484 = vmatpush1.bf16.msra.mxu0 0
          %3485 = vmatprep.mubr.bf16.mxu0 0
          %3486 = vmatmul.mubr.bf16.gmra.mrb[0].mxu0 %v3451
          %v3487 = vpop.f32.mrb[0].mxu0
          %v3488 = vadd.f32 %v3406, %v3487
          %v3489 = vpop.f32.mrb[0].mxu0
          %v3490 = vadd.f32 %v3410, %v3489
          %v3491 = vpop.f32.mrb[0].mxu0
          %v3492 = vpop.f32.mrb[0].mxu0
          %3493 = vdwg.mxu0
          %3494 = vmatprep.subr.bf16.mxu0 0
          %3495 = vmatpush1.bf16.msra.mxu0 %v3440
          %3496 = vmatprep.subr.bf16.mxu0 0
          %3497 = vmatpush1.bf16.msra.mxu0 %v3443
          %3498 = vmatprep.subr.bf16.mxu0 0
          %3499 = vmatpush1.bf16.msra.mxu0 0
          %3500 = vmatprep.subr.bf16.mxu0 0
          %3501 = vmatpush1.bf16.msra.mxu0 0
          %3502 = vmatprep.subr.bf16.mxu0 0
          %3503 = vmatpush1.bf16.msra.mxu0 0
          %3504 = vmatprep.subr.bf16.mxu0 0
          %3505 = vmatpush1.bf16.msra.mxu0 0
          %3506 = vmatprep.subr.bf16.mxu0 0
          %3507 = vmatpush1.bf16.msra.mxu0 0
          %3508 = vmatprep.subr.bf16.mxu0 0
          %3509 = vmatpush1.bf16.msra.mxu0 0
          %3510 = vmatprep.subr.bf16.mxu0 0
          %3511 = vmatpush1.bf16.msra.mxu0 0
          %3512 = vmatprep.subr.bf16.mxu0 0
          %3513 = vmatpush1.bf16.msra.mxu0 0
          %3514 = vmatprep.subr.bf16.mxu0 0
          %3515 = vmatpush1.bf16.msra.mxu0 0
          %3516 = vmatprep.subr.bf16.mxu0 0
          %3517 = vmatpush1.bf16.msra.mxu0 0
          %3518 = vmatprep.subr.bf16.mxu0 0
          %3519 = vmatpush1.bf16.msra.mxu0 0
          %3520 = vmatprep.subr.bf16.mxu0 0
          %3521 = vmatpush1.bf16.msra.mxu0 0
          %3522 = vmatprep.subr.bf16.mxu0 0
          %3523 = vmatpush1.bf16.msra.mxu0 0
          %3524 = vmatprep.subr.bf16.mxu0 0
          %3525 = vmatpush1.bf16.msra.mxu0 0
          %3526 = vmatprep.mubr.bf16.mxu0 0
          %3527 = vmatmul.mubr.bf16.gmra.mrb[0].mxu0 %v3451
          %v3528 = vpop.f32.mrb[0].mxu0
          %v3529 = vadd.f32 %v3414, %v3528
          %v3530 = vpop.f32.mrb[0].mxu0
          %v3531 = vpop.f32.mrb[0].mxu0
          %v3532 = vpop.f32.mrb[0].mxu0
          %3533 = vdwg.mxu0
          %v3534 = vmax.f32 %v3488, 0.0
          %v3535 = vmax.f32 %v3490, 0.0
          %v3536 = vmax.f32 %v3529, 0.0
          %v3537 = vpack.c.bf16 %v3534, %v3534
          %v3538 = vpack.c.bf16 %v3535, %v3535
          %v3539 = vpack.c.bf16 %v3536, %v3536
          %v3540 = vld [vmem:[%s22] sm:$0xf]
          %v3541 = vld [vmem:[%s22 + $0x4] sm:$0xf]
          %v3542 = vld [vmem:[%s22 + $0x8] sm:$0xf]
          %v3543 = vld [vmem:[%s22 + $0xc] sm:$0xf]
          %v3544 = vld [vmem:[%s22 + $0x10] sm:$0xf]
          %v3545 = vld [vmem:[%s22 + $0x14] sm:$0xf]
          %v3546 = vld [vmem:[%s22 + $0x18] sm:$0xf]
          %v3547 = vld [vmem:[%s22 + $0x1c] sm:$0xf]
          %v3548 = vld [vmem:[%s22 + $0x20] sm:$0xf]
          %v3549 = vld [vmem:[%s22 + $0x24] sm:$0xf]
          %v3550 = vld [vmem:[%s22 + $0x28] sm:$0xf]
          %v3551 = vld [vmem:[%s22 + $0x2c] sm:$0xf]
          %v3552 = vld [vmem:[%s22 + $0x30] sm:$0xf]
          %v3553 = vld [vmem:[%s22 + $0x34] sm:$0xf]
          %v3554 = vld [vmem:[%s22 + $0x38] sm:$0xf]
          %v3555 = vld [vmem:[%s22 + $0x3c] sm:$0xf]
          %v3556 = vld [vmem:[%s22 + $0x40] sm:$0xf]
          %v3557 = vld [vmem:[%s22 + $0x44] sm:$0xf]
          %v3558 = vld [vmem:[%s22 + $0x48] sm:$0xf]
          %v3559 = vld [vmem:[%s22 + $0x4c] sm:$0xf]
          %v3560 = vld [vmem:[%s22 + $0x50] sm:$0xf]
          %v3561 = vld [vmem:[%s22 + $0x54] sm:$0xf]
          %v3562 = vld [vmem:[%s22 + $0x58] sm:$0xf]
          %v3563 = vld [vmem:[%s22 + $0x5c] sm:$0xf]
          %v3564 = vld [vmem:[%s22 + $0x60] sm:$0xf]
          %v3565 = vld [vmem:[%s22 + $0x64] sm:$0xf]
          %v3566 = vld [vmem:[%s22 + $0x68] sm:$0xf]
          %v3567 = vld [vmem:[%s22 + $0x6c] sm:$0xf]
          %v3568 = vld [vmem:[%s22 + $0x70] sm:$0xf]
          %v3569 = vld [vmem:[%s22 + $0x74] sm:$0xf]
          %v3570 = vld [vmem:[%s22 + $0x78] sm:$0xf]
          %v3571 = vld [vmem:[%s22 + $0x7c] sm:$0xf]
          %v3572 = vld [vmem:[%s22 + $0x80] sm:$0xf]
          %v3573 = vld [vmem:[%s22 + $0x84] sm:$0xf]
          %v3574 = vld [vmem:[%s22 + $0x88] sm:$0xf]
          %v3575 = vld [vmem:[%s22 + $0x8c] sm:$0xf]
          %v3576 = vld [vmem:[%s22 + $0x90] sm:$0xf]
          %v3577 = vld [vmem:[%s22 + $0x94] sm:$0xf]
          %v3578 = vld [vmem:[%s22 + $0x98] sm:$0xf]
          %v3579 = vld [vmem:[%s22 + $0x9c] sm:$0xf]
          %v3580 = vld [vmem:[%s22 + $0xa0] sm:$0xf]
          %v3581 = vld [vmem:[%s22 + $0xa4] sm:$0xf]
          %v3582 = vld [vmem:[%s22 + $0xa8] sm:$0xf]
          %v3583 = vld [vmem:[%s22 + $0xac] sm:$0xf]
          %v3584 = vld [vmem:[%s22 + $0xb0] sm:$0xf]
          %v3585 = vld [vmem:[%s22 + $0xb4] sm:$0xf]
          %v3586 = vld [vmem:[%s22 + $0xb8] sm:$0xf]
          %v3587 = vld [vmem:[%s22 + $0xbc] sm:$0xf]
          %v3588 = vld [vmem:[%s23] sm:$0x1]
          %v3590 = vlaneseq
          %v3591 = vshrl.u32 %v3590, 7
          %v3592 = vsub.s32 0, %v3591
          %v3593 = vrot.slane %v3588, %v3592
          %v3643 = vunpack.c.l.b16 %v3540
          %v3644 = vunpack.c.l.b16 %v3541
          %v3645 = vunpack.c.l.b16 %v3542
          %v3646 = vunpack.c.l.b16 %v3543
          %v3647 = vunpack.c.l.b16 %v3544
          %v3648 = vunpack.c.l.b16 %v3545
          %v3649 = vunpack.c.l.b16 %v3546
          %v3650 = vunpack.c.l.b16 %v3547
          %v3651 = vunpack.c.l.b16 %v3548
          %v3652 = vunpack.c.l.b16 %v3549
          %v3653 = vunpack.c.l.b16 %v3550
          %v3654 = vunpack.c.l.b16 %v3551
          %v3655 = vunpack.c.l.b16 %v3552
          %v3656 = vunpack.c.l.b16 %v3553
          %v3657 = vunpack.c.l.b16 %v3554
          %v3658 = vunpack.c.l.b16 %v3555
          %v3659 = vunpack.c.l.b16 %v3556
          %v3660 = vunpack.c.l.b16 %v3557
          %v3661 = vunpack.c.l.b16 %v3558
          %v3662 = vunpack.c.l.b16 %v3559
          %v3663 = vunpack.c.l.b16 %v3560
          %v3664 = vunpack.c.l.b16 %v3561
          %v3665 = vunpack.c.l.b16 %v3562
          %v3666 = vunpack.c.l.b16 %v3563
          %v3667 = vunpack.c.l.b16 %v3564
          %v3668 = vunpack.c.l.b16 %v3565
          %v3669 = vunpack.c.l.b16 %v3566
          %v3670 = vunpack.c.l.b16 %v3567
          %v3671 = vunpack.c.l.b16 %v3568
          %v3672 = vunpack.c.l.b16 %v3569
          %v3673 = vunpack.c.l.b16 %v3570
          %v3674 = vunpack.c.l.b16 %v3571
          %v3675 = vunpack.c.l.b16 %v3572
          %v3676 = vunpack.c.l.b16 %v3573
          %v3677 = vunpack.c.l.b16 %v3574
          %v3678 = vunpack.c.l.b16 %v3575
          %v3679 = vunpack.c.l.b16 %v3576
          %v3680 = vunpack.c.l.b16 %v3577
          %v3681 = vunpack.c.l.b16 %v3578
          %v3682 = vunpack.c.l.b16 %v3579
          %v3683 = vunpack.c.l.b16 %v3580
          %v3684 = vunpack.c.l.b16 %v3581
          %v3685 = vunpack.c.l.b16 %v3582
          %v3686 = vunpack.c.l.b16 %v3583
          %v3687 = vunpack.c.l.b16 %v3584
          %v3688 = vunpack.c.l.b16 %v3585
          %v3689 = vunpack.c.l.b16 %v3586
          %v3690 = vunpack.c.l.b16 %v3587
          %v3691 = vpack.c.b16 %v3644, %v3643
          %v3692 = vpack.c.b16 %v3646, %v3645
          %v3693 = vpack.c.b16 %v3648, %v3647
          %v3694 = vpack.c.b16 %v3650, %v3649
          %v3695 = vpack.c.b16 %v3652, %v3651
          %v3696 = vpack.c.b16 %v3654, %v3653
          %v3697 = vpack.c.b16 %v3656, %v3655
          %v3698 = vpack.c.b16 %v3658, %v3657
          %v3699 = vpack.c.b16 %v3660, %v3659
          %v3700 = vpack.c.b16 %v3662, %v3661
          %v3701 = vpack.c.b16 %v3664, %v3663
          %v3702 = vpack.c.b16 %v3666, %v3665
          %v3703 = vpack.c.b16 %v3668, %v3667
          %v3704 = vpack.c.b16 %v3670, %v3669
          %v3705 = vpack.c.b16 %v3672, %v3671
          %v3706 = vpack.c.b16 %v3674, %v3673
          %v3707 = vpack.c.b16 %v3676, %v3675
          %v3708 = vpack.c.b16 %v3678, %v3677
          %v3709 = vpack.c.b16 %v3680, %v3679
          %v3710 = vpack.c.b16 %v3682, %v3681
          %v3711 = vpack.c.b16 %v3684, %v3683
          %v3712 = vpack.c.b16 %v3686, %v3685
          %v3713 = vpack.c.b16 %v3688, %v3687
          %v3714 = vpack.c.b16 %v3690, %v3689
          %3739 = vmatprep.subr.bf16.mxu0 0
          %3740 = vmatpush1.bf16.msra.mxu0 %v3691
          %3741 = vmatprep.subr.bf16.mxu0 0
          %3742 = vmatpush1.bf16.msra.mxu0 %v3692
          %3743 = vmatprep.subr.bf16.mxu0 0
          %3744 = vmatpush1.bf16.msra.mxu0 %v3693
          %3745 = vmatprep.subr.bf16.mxu0 0
          %3746 = vmatpush1.bf16.msra.mxu0 %v3694
          %3747 = vmatprep.subr.bf16.mxu0 0
          %3748 = vmatpush1.bf16.msra.mxu0 %v3695
          %3749 = vmatprep.subr.bf16.mxu0 0
          %3750 = vmatpush1.bf16.msra.mxu0 %v3696
          %3751 = vmatprep.subr.bf16.mxu0 0
          %3752 = vmatpush1.bf16.msra.mxu0 %v3697
          %3753 = vmatprep.subr.bf16.mxu0 0
          %3754 = vmatpush1.bf16.msra.mxu0 %v3698
          %3755 = vmatprep.subr.bf16.mxu0 0
          %3756 = vmatpush1.bf16.msra.mxu0 %v3699
          %3757 = vmatprep.subr.bf16.mxu0 0
          %3758 = vmatpush1.bf16.msra.mxu0 %v3700
          %3759 = vmatprep.subr.bf16.mxu0 0
          %3760 = vmatpush1.bf16.msra.mxu0 %v3701
          %3761 = vmatprep.subr.bf16.mxu0 0
          %3762 = vmatpush1.bf16.msra.mxu0 %v3702
          %3763 = vmatprep.subr.bf16.mxu0 0
          %3764 = vmatpush1.bf16.msra.mxu0 %v3703
          %3765 = vmatprep.subr.bf16.mxu0 0
          %3766 = vmatpush1.bf16.msra.mxu0 %v3704
          %3767 = vmatprep.subr.bf16.mxu0 0
          %3768 = vmatpush1.bf16.msra.mxu0 %v3705
          %3769 = vmatprep.subr.bf16.mxu0 0
          %3770 = vmatpush1.bf16.msra.mxu0 %v3706
          %3771 = vmatprep.mubr.bf16.mxu0 %v3538
          %3772 = vmatmul.mubr.bf16.gmra.mrb[0].mxu0 %v3537
          %v3773 = vpop.f32.mrb[0].mxu0
          %v3774 = vadd.f32 %v3593, %v3773
          %v3775 = vpop.f32.mrb[0].mxu0
          %v3776 = vpop.f32.mrb[0].mxu0
          %v3777 = vpop.f32.mrb[0].mxu0
          %3778 = vdwg.mxu0
          %3779 = vmatprep.subr.bf16.mxu0 0
          %3780 = vmatpush1.bf16.msra.mxu0 %v3707
          %3781 = vmatprep.subr.bf16.mxu0 0
          %3782 = vmatpush1.bf16.msra.mxu0 %v3708
          %3783 = vmatprep.subr.bf16.mxu0 0
          %3784 = vmatpush1.bf16.msra.mxu0 %v3709
          %3785 = vmatprep.subr.bf16.mxu0 0
          %3786 = vmatpush1.bf16.msra.mxu0 %v3710
          %3787 = vmatprep.subr.bf16.mxu0 0
          %3788 = vmatpush1.bf16.msra.mxu0 %v3711
          %3789 = vmatprep.subr.bf16.mxu0 0
          %3790 = vmatpush1.bf16.msra.mxu0 %v3712
          %3791 = vmatprep.subr.bf16.mxu0 0
          %3792 = vmatpush1.bf16.msra.mxu0 %v3713
          %3793 = vmatprep.subr.bf16.mxu0 0
          %3794 = vmatpush1.bf16.msra.mxu0 %v3714
          %3795 = vmatprep.subr.bf16.mxu0 0
          %3796 = vmatpush1.bf16.msra.mxu0 0
          %3797 = vmatprep.subr.bf16.mxu0 0
          %3798 = vmatpush1.bf16.msra.mxu0 0
          %3799 = vmatprep.subr.bf16.mxu0 0
          %3800 = vmatpush1.bf16.msra.mxu0 0
          %3801 = vmatprep.subr.bf16.mxu0 0
          %3802 = vmatpush1.bf16.msra.mxu0 0
          %3803 = vmatprep.subr.bf16.mxu0 0
          %3804 = vmatpush1.bf16.msra.mxu0 0
          %3805 = vmatprep.subr.bf16.mxu0 0
          %3806 = vmatpush1.bf16.msra.mxu0 0
          %3807 = vmatprep.subr.bf16.mxu0 0
          %3808 = vmatpush1.bf16.msra.mxu0 0
          %3809 = vmatprep.subr.bf16.mxu0 0
          %3810 = vmatpush1.bf16.msra.mxu0 0
          %3811 = vmatprep.mubr.bf16.mxu0 0
          %3812 = vmatmul.mubr.bf16.gmra.mrb[0].mxu0 %v3539
          %v3813 = vpop.f32.mrb[0].mxu0
          %v3814 = vadd.f32 %v3774, %v3813
          %v3815 = vpop.f32.mrb[0].mxu0
          %v3816 = vpop.f32.mrb[0].mxu0
          %v3817 = vpop.f32.mrb[0].mxu0
          %3818 = vdwg.mxu0
          %v3819 = vmax.f32 %v3814, 0.0
          %v3820 = vpack.c.bf16 %v3819, %v3819
          %v3821 = vld [vmem:[%s24] sm:$0xf]
          %v3822 = vld [vmem:[%s24 + $0x4] sm:$0xf]
          %v3823 = vld [vmem:[%s24 + $0x8] sm:$0xf]
          %v3824 = vld [vmem:[%s24 + $0xc] sm:$0xf]
          %v3825 = vld [vmem:[%s24 + $0x10] sm:$0xf]
          %v3826 = vld [vmem:[%s24 + $0x14] sm:$0xf]
          %v3827 = vld [vmem:[%s24 + $0x18] sm:$0xf]
          %v3828 = vld [vmem:[%s24 + $0x1c] sm:$0xf]
          %v3829 = vld [vmem:[%s24 + $0x20] sm:$0xf]
          %v3830 = vld [vmem:[%s24 + $0x24] sm:$0xf]
          %v3831 = vld [vmem:[%s24 + $0x28] sm:$0xf]
          %v3832 = vld [vmem:[%s24 + $0x2c] sm:$0xf]
          %v3833 = vld [vmem:[%s24 + $0x30] sm:$0xf]
          %v3834 = vld [vmem:[%s24 + $0x34] sm:$0xf]
          %v3835 = vld [vmem:[%s24 + $0x38] sm:$0xf]
          %v3836 = vld [vmem:[%s24 + $0x3c] sm:$0xf]
          %v3837 = vld [vmem:[%s25] sm:$0x1]
          %v3839 = vlaneseq
          %v3840 = vshrl.u32 %v3839, 7
          %v3841 = vsub.s32 0, %v3840
          %v3842 = vrot.slane %v3837, %v3841
          %v3860 = vunpack.c.l.b16 %v3821
          %v3861 = vunpack.c.l.b16 %v3822
          %v3862 = vunpack.c.l.b16 %v3823
          %v3863 = vunpack.c.l.b16 %v3824
          %v3864 = vunpack.c.l.b16 %v3825
          %v3865 = vunpack.c.l.b16 %v3826
          %v3866 = vunpack.c.l.b16 %v3827
          %v3867 = vunpack.c.l.b16 %v3828
          %v3868 = vunpack.c.l.b16 %v3829
          %v3869 = vunpack.c.l.b16 %v3830
          %v3870 = vunpack.c.l.b16 %v3831
          %v3871 = vunpack.c.l.b16 %v3832
          %v3872 = vunpack.c.l.b16 %v3833
          %v3873 = vunpack.c.l.b16 %v3834
          %v3874 = vunpack.c.l.b16 %v3835
          %v3875 = vunpack.c.l.b16 %v3836
          %v3876 = vpack.c.b16 %v3861, %v3860
          %v3877 = vpack.c.b16 %v3863, %v3862
          %v3878 = vpack.c.b16 %v3865, %v3864
          %v3879 = vpack.c.b16 %v3867, %v3866
          %v3880 = vpack.c.b16 %v3869, %v3868
          %v3881 = vpack.c.b16 %v3871, %v3870
          %v3882 = vpack.c.b16 %v3873, %v3872
          %v3883 = vpack.c.b16 %v3875, %v3874
          %3892 = vmatprep.subr.bf16.mxu0 0
          %3893 = vmatpush1.bf16.msra.mxu0 %v3876
          %3894 = vmatprep.subr.bf16.mxu0 0
          %3895 = vmatpush1.bf16.msra.mxu0 %v3877
          %3896 = vmatprep.subr.bf16.mxu0 0
          %3897 = vmatpush1.bf16.msra.mxu0 %v3878
          %3898 = vmatprep.subr.bf16.mxu0 0
          %3899 = vmatpush1.bf16.msra.mxu0 %v3879
          %3900 = vmatprep.subr.bf16.mxu0 0
          %3901 = vmatpush1.bf16.msra.mxu0 %v3880
          %3902 = vmatprep.subr.bf16.mxu0 0
          %3903 = vmatpush1.bf16.msra.mxu0 %v3881
          %3904 = vmatprep.subr.bf16.mxu0 0
          %3905 = vmatpush1.bf16.msra.mxu0 %v3882
          %3906 = vmatprep.subr.bf16.mxu0 0
          %3907 = vmatpush1.bf16.msra.mxu0 %v3883
          %3908 = vmatprep.subr.bf16.mxu0 0
          %3909 = vmatpush1.bf16.msra.mxu0 0
          %3910 = vmatprep.subr.bf16.mxu0 0
          %3911 = vmatpush1.bf16.msra.mxu0 0
          %3912 = vmatprep.subr.bf16.mxu0 0
          %3913 = vmatpush1.bf16.msra.mxu0 0
          %3914 = vmatprep.subr.bf16.mxu0 0
          %3915 = vmatpush1.bf16.msra.mxu0 0
          %3916 = vmatprep.subr.bf16.mxu0 0
          %3917 = vmatpush1.bf16.msra.mxu0 0
          %3918 = vmatprep.subr.bf16.mxu0 0
          %3919 = vmatpush1.bf16.msra.mxu0 0
          %3920 = vmatprep.subr.bf16.mxu0 0
          %3921 = vmatpush1.bf16.msra.mxu0 0
          %3922 = vmatprep.subr.bf16.mxu0 0
          %3923 = vmatpush1.bf16.msra.mxu0 0
          %3924 = vmatprep.mubr.bf16.mxu0 0
          %3925 = vmatmul.mubr.bf16.gmra.mrb[0].mxu0 %v3820
          %v3926 = vpop.f32.mrb[0].mxu0
          %v3927 = vadd.f32 %v3842, %v3926
          %v3928 = vpop.f32.mrb[0].mxu0
          %v3929 = vpop.f32.mrb[0].mxu0
          %v3930 = vpop.f32.mrb[0].mxu0
          %3931 = vdwg.mxu0
          %v3932 = vmax.f32 %v3927, 0.0
          %v3933 = vpack.c.bf16 %v3932, %v3932
          %v3934 = vld [vmem:[%s26] sm:$0xf]
          %v3935 = vld [vmem:[%s26 + $0x4] sm:$0xf]
          %v3936 = vld [vmem:[%s26 + $0x8] sm:$0xf]
          %v3937 = vld [vmem:[%s26 + $0xc] sm:$0xf]
          %v3938 = vld [vmem:[%s26 + $0x10] sm:$0xf]
          %v3939 = vld [vmem:[%s26 + $0x14] sm:$0xf]
          %v3940 = vld [vmem:[%s26 + $0x18] sm:$0xf]
          %v3941 = vld [vmem:[%s26 + $0x1c] sm:$0xf]
          %v3942 = vld [vmem:[%s26 + $0x20] sm:$0xf]
          %v3943 = vld [vmem:[%s26 + $0x24] sm:$0xf]
          %v3944 = vld [vmem:[%s26 + $0x28] sm:$0xf]
          %v3945 = vld [vmem:[%s26 + $0x2c] sm:$0xf]
          %v3946 = vld [vmem:[%s26 + $0x30] sm:$0xf]
          %v3947 = vld [vmem:[%s26 + $0x34] sm:$0xf]
          %v3948 = vld [vmem:[%s26 + $0x38] sm:$0xf]
          %v3949 = vld [vmem:[%s26 + $0x3c] sm:$0xf]
          %v3950 = vld [vmem:[%s27] sm:$0x1]
          %v3952 = vlaneseq
          %v3953 = vshrl.u32 %v3952, 7
          %v3954 = vsub.s32 0, %v3953
          %v3955 = vrot.slane %v3950, %v3954
          %v3973 = vunpack.c.l.b16 %v3934
          %v3974 = vunpack.c.l.b16 %v3935
          %v3975 = vunpack.c.l.b16 %v3936
          %v3976 = vunpack.c.l.b16 %v3937
          %v3977 = vunpack.c.l.b16 %v3938
          %v3978 = vunpack.c.l.b16 %v3939
          %v3979 = vunpack.c.l.b16 %v3940
          %v3980 = vunpack.c.l.b16 %v3941
          %v3981 = vunpack.c.l.b16 %v3942
          %v3982 = vunpack.c.l.b16 %v3943
          %v3983 = vunpack.c.l.b16 %v3944
          %v3984 = vunpack.c.l.b16 %v3945
          %v3985 = vunpack.c.l.b16 %v3946
          %v3986 = vunpack.c.l.b16 %v3947
          %v3987 = vunpack.c.l.b16 %v3948
          %v3988 = vunpack.c.l.b16 %v3949
          %v3989 = vpack.c.b16 %v3974, %v3973
          %v3990 = vpack.c.b16 %v3976, %v3975
          %v3991 = vpack.c.b16 %v3978, %v3977
          %v3992 = vpack.c.b16 %v3980, %v3979
          %v3993 = vpack.c.b16 %v3982, %v3981
          %v3994 = vpack.c.b16 %v3984, %v3983
          %v3995 = vpack.c.b16 %v3986, %v3985
          %v3996 = vpack.c.b16 %v3988, %v3987
          %4005 = vmatprep.subr.bf16.mxu0 0
          %4006 = vmatpush1.bf16.msra.mxu0 %v3989
          %4007 = vmatprep.subr.bf16.mxu0 0
          %4008 = vmatpush1.bf16.msra.mxu0 %v3990
          %4009 = vmatprep.subr.bf16.mxu0 0
          %4010 = vmatpush1.bf16.msra.mxu0 %v3991
          %4011 = vmatprep.subr.bf16.mxu0 0
          %4012 = vmatpush1.bf16.msra.mxu0 %v3992
          %4013 = vmatprep.subr.bf16.mxu0 0
          %4014 = vmatpush1.bf16.msra.mxu0 %v3993
          %4015 = vmatprep.subr.bf16.mxu0 0
          %4016 = vmatpush1.bf16.msra.mxu0 %v3994
          %4017 = vmatprep.subr.bf16.mxu0 0
          %4018 = vmatpush1.bf16.msra.mxu0 %v3995
          %4019 = vmatprep.subr.bf16.mxu0 0
          %4020 = vmatpush1.bf16.msra.mxu0 %v3996
          %4021 = vmatprep.subr.bf16.mxu0 0
          %4022 = vmatpush1.bf16.msra.mxu0 0
          %4023 = vmatprep.subr.bf16.mxu0 0
          %4024 = vmatpush1.bf16.msra.mxu0 0
          %4025 = vmatprep.subr.bf16.mxu0 0
          %4026 = vmatpush1.bf16.msra.mxu0 0
          %4027 = vmatprep.subr.bf16.mxu0 0
          %4028 = vmatpush1.bf16.msra.mxu0 0
          %4029 = vmatprep.subr.bf16.mxu0 0
          %4030 = vmatpush1.bf16.msra.mxu0 0
          %4031 = vmatprep.subr.bf16.mxu0 0
          %4032 = vmatpush1.bf16.msra.mxu0 0
          %4033 = vmatprep.subr.bf16.mxu0 0
          %4034 = vmatpush1.bf16.msra.mxu0 0
          %4035 = vmatprep.subr.bf16.mxu0 0
          %4036 = vmatpush1.bf16.msra.mxu0 0
          %4037 = vmatprep.mubr.bf16.mxu0 0
          %4038 = vmatmul.mubr.bf16.gmra.mrb[0].mxu0 %v3933
          %v4039 = vpop.f32.mrb[0].mxu0
          %v4040 = vadd.f32 %v3955, %v4039
          %v4041 = vpop.f32.mrb[0].mxu0
          %v4042 = vpop.f32.mrb[0].mxu0
          %v4043 = vpop.f32.mrb[0].mxu0
          %4044 = vdwg.mxu0
          %4045 = vst [vmem:[#allocation5] sm:$0x3] %v4040
        $region140: #{bert_classifier_forward.1} parent=131 // pred_fallthru
          _
        // Predicated region
        $region141: #{bert_classifier_forward.1} parent=131 // pred_check
          %p4046 = pneg %p721
        $region142: #{bert_classifier_forward.1} parent=131 // pred_check_branch
          %4048 = sbr.rel (%p4046) target = $region144
        $region143: #{bert_classifier_forward.1} parent=131 // pred_region
          %s4050 = ssub.s32 32, 32
          %4051 = vsyncadd [#allocation6], %s4050
          %s4053 = sshll.u32 [#allocation5], 4
          %s4054 = int_to_ptr.vmem [resolvable:$true] %s4053
          %4056 = dma.vmem_to_hbm [thread:$0]  %s4054, 32, %s28, [#allocation6]
        $region144: #{bert_classifier_forward.1} parent=131 // pred_fallthru
          _
        // Predicated region
        $region145: #{bert_classifier_forward.1} parent=131 // pred_check
          %p4057 = pneg %p721
        $region146: #{bert_classifier_forward.1} parent=131 // pred_check_branch
          %4059 = sbr.rel (%p4057) target = $region148
        $region147: #{bert_classifier_forward.1} parent=131 // pred_region
          %4060 = dma.done [#allocation6], 32
        $region148: #{bert_classifier_forward.1} parent=131 // pred_fallthru
          _
      $region132: #{bert_classifier_forward.1} parent=5 // pred_fallthru
        _
      %p4061 = scmp.le.s32.totalorder 2, %s35
      // Predicated region
      $region149: #{bert_classifier_forward.1} parent=5 // pred_check
        %p4062 = pneg %p4061
      $region150: #{bert_classifier_forward.1} parent=5 // pred_check_branch
        %4064 = sbr.rel (%p4062) target = $region152
      $region151: #{bert_classifier_forward.1} parent=5 // pred_region
        %s4065 = ssub.s32 %s35, 2
      $region152: #{bert_classifier_forward.1} parent=5 // pred_fallthru
        _
    $region6: #{bert_classifier_forward.1} parent=1 // loop_footer
      %s39 = sadd.s32 1, %s35
    $region7: #{bert_classifier_forward.1} parent=1 // loop_footer_branch
      %34 = sbr.rel target = $region3
    $region8: #{bert_classifier_forward.1} parent=1 // loop_exit
      _
    %4066 = vsyncpa [#allocation6], 1
    %s4067 = scalar_lea.sflag [#allocation6], 1
    %4068 = vsyncpa %s4067, 1

</llo_original>
